<compile_context>
chip_gen: v5e
topology: v5e:2x2
jax: 0.10.0
libtpu: 0.0.40
codegen_flags: <defaults>
</compile_context>

<pallas_src>
import jax
import jax.numpy as jnp
from jax.experimental import pallas as pl
from jax.experimental.pallas import tpu as pltpu

BN_EPS = 1e-5


def se_conv_bn_kernel(gate_ref, x_ref, w_ref, gamma_ref, beta_ref, o_ref):
    # gate_ref:  (1, Cin)      pre-sigmoid SE gate logits (f32)
    # x_ref:     (Cin, HW)     activations, channels-first (f32)
    # w_ref:     (Cblk, Cin)   1x1 conv weight rows for this grid block (bf16)
    # gamma_ref: (Cblk, 1)     BN scale (f32)
    # beta_ref:  (Cblk, 1)     BN shift (f32)
    # o_ref:     (Cblk, HW)    output block (f32)

    # Fold sigmoid(gate) into the weight in f32, then round to bf16 once.
    g = jax.nn.sigmoid(gate_ref[...])                              # (1, Cin) f32
    w_scaled = (w_ref[...].astype(jnp.float32) * g).astype(jnp.bfloat16)

    # 1x1 conv == matmul on the MXU: bf16 operands, f32 accumulation.
    x_bf = x_ref[...].astype(jnp.bfloat16)                         # (Cin, HW)
    y = jnp.dot(w_scaled, x_bf, preferred_element_type=jnp.float32)  # (Cblk, HW) f32

    # BatchNorm2d (training mode, biased batch stats), per output channel = per row.
    inv_p = 1.0 / y.shape[1]
    s = jnp.sum(y, axis=1, keepdims=True)                          # (Cblk, 1)
    s2 = jnp.sum(y * y, axis=1, keepdims=True)                     # (Cblk, 1)
    mean = s * inv_p
    var = s2 * inv_p - mean * mean
    scale = jax.lax.rsqrt(var + BN_EPS) * gamma_ref[...]           # (Cblk, 1)
    shift = beta_ref[...] - mean * scale                           # (Cblk, 1)
    o_ref[...] = y * scale + shift


def prepare_conv_weight(conv_w):
    """One-time (init-time) parameter prep: (Cout, Cin, 1, 1) f32 -> (Cout, Cin) bf16."""
    cout, cin = conv_w.shape[0], conv_w.shape[1]
    return conv_w.reshape(cout, cin).astype(jnp.bfloat16)


def _default_cout_blocks():
    """2 blocks on v7x (two TensorCores per chip); 1 block on v5e/v6e (one TC)."""
    try:
        kind = jax.devices()[0].device_kind.lower()
    except Exception:
        return 1
    return 2 if "v7" in kind else 1


def se_conv_bn(x491, x495, conv_w_bf16_2d, bn_gamma, bn_beta, *, cout_blocks=None):
    """x491: (N, Cin, H, W) f32; x495: (N, Cin, 1, 1) f32;
    conv_w_bf16_2d: (Cout, Cin) bf16 (pre-cast once at init via prepare_conv_weight)."""
    N, Cin, H, W = x491.shape
    Cout = conv_w_bf16_2d.shape[0]
    HW = H * W

    if cout_blocks is None:
        cout_blocks = _default_cout_blocks()

    # TODO(synk): channels-first flattening assumes N == 1 (true for this module);
    # N > 1 needs a per-sample gate and an N axis in the BN reduction.
    assert N == 1, "kernel assumes N == 1 (module shape)"
    assert conv_w_bf16_2d.dtype == jnp.bfloat16 and conv_w_bf16_2d.shape == (Cout, Cin)
    assert Cout % cout_blocks == 0
    cblk = Cout // cout_blocks
    assert cblk % 16 == 0, "Cout block must respect bf16/f32 sublane tiling"

    # Glue is reshape-only (no transposes, no extra HBM traffic).
    x2d = x491.reshape(Cin, HW)                                    # (Cin, HW)  f32
    gate2d = x495.reshape(1, Cin)                                  # (1, Cin)   f32
    gamma2d = bn_gamma.reshape(Cout, 1)
    beta2d = bn_beta.reshape(Cout, 1)

    out2d = pl.pallas_call(
        se_conv_bn_kernel,
        out_shape=jax.ShapeDtypeStruct((Cout, HW), jnp.float32),
        grid_spec=pltpu.PrefetchScalarGridSpec(
            num_scalar_prefetch=0,
            grid=(cout_blocks,),
            in_specs=[
                pl.BlockSpec((1, Cin), lambda j: (0, 0)),          # gate (shared)
                pl.BlockSpec((Cin, HW), lambda j: (0, 0)),         # x    (shared)
                pl.BlockSpec((cblk, Cin), lambda j: (j, 0)),       # weight rows (bf16)
                pl.BlockSpec((cblk, 1), lambda j: (j, 0)),         # gamma rows
                pl.BlockSpec((cblk, 1), lambda j: (j, 0)),         # beta rows
            ],
            out_specs=pl.BlockSpec((cblk, HW), lambda j: (j, 0)),
        ),
        compiler_params=pltpu.CompilerParams(
            dimension_semantics=("parallel",)),
    )(gate2d, x2d, conv_w_bf16_2d, gamma2d, beta2d)

    # (Cout, HW) -> (N, Cout, H, W): contiguous reshape, no transpose.
    return out2d.reshape(N, Cout, H, W)


def reference(x491, x495, conv_w, bn_gamma, bn_beta):
    x = x491 * jax.nn.sigmoid(x495)
    w2 = conv_w.reshape(conv_w.shape[0], conv_w.shape[1])
    y = jnp.einsum("nchw,oc->nohw", x, w2)
    mean = jnp.mean(y, axis=(0, 2, 3), keepdims=True)
    var = jnp.mean((y - mean) ** 2, axis=(0, 2, 3), keepdims=True)
    return (y - mean) * jax.lax.rsqrt(var + BN_EPS) * bn_gamma.reshape(1, -1, 1, 1) + \
        bn_beta.reshape(1, -1, 1, 1)


if __name__ == "__main__":
    # Shapes from the module: x491 (1, 1344, 14, 14), x495 (1, 1344, 1, 1),
    # Conv2d(1344 -> 224, 1x1), BatchNorm2d(224).
    N, Cin, H, W = 1, 1344, 14, 14
    Cout = 224

    key = jax.random.PRNGKey(0)
    k1, k2, k3, k4, k5 = jax.random.split(key, 5)

    x491 = jax.random.normal(k1, (N, Cin, H, W), dtype=jnp.float32)
    x495 = jax.random.normal(k2, (N, Cin, 1, 1), dtype=jnp.float32)

    # Deterministic synthetic parameters.
    conv_w = jax.random.normal(k3, (Cout, Cin, 1, 1), dtype=jnp.float32) * 0.02
    bn_gamma = 1.0 + 0.1 * jax.random.normal(k4, (Cout,), dtype=jnp.float32)
    bn_beta = 0.1 * jax.random.normal(k5, (Cout,), dtype=jnp.float32)

    # One-time parameter prep (would live at module init, outside the jitted step).
    conv_w_bf16 = jax.block_until_ready(prepare_conv_weight(conv_w))

    out = se_conv_bn(x491, x495, conv_w_bf16, bn_gamma, bn_beta)
    out = jax.block_until_ready(out)

    ref = jax.block_until_ready(reference(x491, x495, conv_w, bn_gamma, bn_beta))
    assert out.shape == (N, Cout, H, W)
    # bf16 MXU operands + f32 accumulation; BN renormalizes, so errors stay small
    # but exceed an f32-only 1e-3 tolerance -> use 2e-2.
    assert jnp.allclose(out, ref, atol=2e-2, rtol=2e-2), \
        float(jnp.max(jnp.abs(out - ref)))

    print("KERNEL_OK")
</pallas_src>

<mosaic_0001>
module attributes {stable_mosaic.version = 11 : i64} {
  func.func @se_conv_bn_kernel(%arg0: i32, %arg1: memref<1x1344xf32, #tpu.memory_space<vmem>>, %arg2: memref<1344x196xf32, #tpu.memory_space<vmem>>, %arg3: memref<224x1344xbf16, #tpu.memory_space<vmem>>, %arg4: memref<224x1xf32, #tpu.memory_space<vmem>>, %arg5: memref<224x1xf32, #tpu.memory_space<vmem>>, %arg6: memref<224x196xf32, #tpu.memory_space<vmem>>) attributes {dimension_semantics = [#tpu.dimension_semantics<parallel>], iteration_bounds = array<i64: 1>, scalar_prefetch = 0 : i64, scratch_operands = 0 : i64, tpu.core_type = #tpu.core_type<tc>, window_params = [{pipeline_mode = #tpu.pipeline_mode<synchronous>, transform_indices = @transform_0, window_bounds = array<i64: 1, 1344>}, {pipeline_mode = #tpu.pipeline_mode<synchronous>, transform_indices = @transform_1, window_bounds = array<i64: 1344, 196>}, {transform_indices = @transform_2, window_bounds = array<i64: 224, 1344>}, {transform_indices = @transform_3, window_bounds = array<i64: 224, 1>}, {transform_indices = @transform_4, window_bounds = array<i64: 224, 1>}, {transform_indices = @transform_5, window_bounds = array<i64: 224, 196>}]} {
    %c0 = arith.constant 0 : index
    %c0_0 = arith.constant 0 : index
    %0 = vector.load %arg1[%c0, %c0_0] : memref<1x1344xf32, #tpu.memory_space<vmem>>, vector<1x1344xf32>
    %1 = arith.negf %0 : vector<1x1344xf32>
    %2 = math.exp %1 : vector<1x1344xf32>
    %cst = arith.constant 1.000000e+00 : f32
    %3 = vector.broadcast %cst : f32 to vector<1x1344xf32>
    %4 = arith.addf %3, %2 : vector<1x1344xf32>
    %5 = arith.divf %3, %4 : vector<1x1344xf32>
    %c0_1 = arith.constant 0 : index
    %c0_2 = arith.constant 0 : index
    %6 = vector.load %arg3[%c0_1, %c0_2] : memref<224x1344xbf16, #tpu.memory_space<vmem>>, vector<224x1344xbf16>
    %7 = arith.extf %6 : vector<224x1344xbf16> to vector<224x1344xf32>
    %8 = vector.broadcast %5 : vector<1x1344xf32> to vector<224x1344xf32>
    %9 = arith.mulf %7, %8 : vector<224x1344xf32>
    %10 = arith.truncf %9 : vector<224x1344xf32> to vector<224x1344xbf16>
    %c0_3 = arith.constant 0 : index
    %c0_4 = arith.constant 0 : index
    %11 = vector.load %arg2[%c0_3, %c0_4] : memref<1344x196xf32, #tpu.memory_space<vmem>>, vector<1344x196xf32>
    %12 = arith.truncf %11 : vector<1344x196xf32> to vector<1344x196xbf16>
    %cst_5 = arith.constant dense<0.000000e+00> : vector<224x196xf32>
    %13 = tpu.matmul %10, %12, %cst_5 {dimension_numbers = #tpu.dot_dimension_numbers<[1], [0], [0], [1], [0, 0, 1, 1], [], []>} : vector<224x1344xbf16>, vector<1344x196xbf16>, vector<224x196xf32> -> vector<224x196xf32>
    %cst_6 = arith.constant dense<0.000000e+00> : vector<224xf32>
    %14 = vector.multi_reduction <add>, %13, %cst_6 [1] : vector<224x196xf32> to vector<224xf32>
    %15 = vector.shape_cast %14 : vector<224xf32> to vector<224x1xf32>
    %16 = arith.mulf %13, %13 : vector<224x196xf32>
    %cst_7 = arith.constant dense<0.000000e+00> : vector<224xf32>
    %17 = vector.multi_reduction <add>, %16, %cst_7 [1] : vector<224x196xf32> to vector<224xf32>
    %18 = vector.shape_cast %17 : vector<224xf32> to vector<224x1xf32>
    %cst_8 = arith.constant 0.00510204071 : f32
    %19 = vector.broadcast %cst_8 : f32 to vector<224x1xf32>
    %20 = arith.mulf %15, %19 : vector<224x1xf32>
    %cst_9 = arith.constant 0.00510204071 : f32
    %21 = vector.broadcast %cst_9 : f32 to vector<224x1xf32>
    %22 = arith.mulf %18, %21 : vector<224x1xf32>
    %23 = arith.mulf %20, %20 : vector<224x1xf32>
    %24 = arith.subf %22, %23 : vector<224x1xf32>
    %cst_10 = arith.constant 9.99999974E-6 : f32
    %25 = vector.broadcast %cst_10 : f32 to vector<224x1xf32>
    %26 = arith.addf %24, %25 : vector<224x1xf32>
    %27 = math.rsqrt %26 : vector<224x1xf32>
    %c0_11 = arith.constant 0 : index
    %c0_12 = arith.constant 0 : index
    %28 = vector.load %arg4[%c0_11, %c0_12] : memref<224x1xf32, #tpu.memory_space<vmem>>, vector<224x1xf32>
    %29 = arith.mulf %27, %28 : vector<224x1xf32>
    %c0_13 = arith.constant 0 : index
    %c0_14 = arith.constant 0 : index
    %30 = vector.load %arg5[%c0_13, %c0_14] : memref<224x1xf32, #tpu.memory_space<vmem>>, vector<224x1xf32>
    %31 = arith.mulf %20, %29 : vector<224x1xf32>
    %32 = arith.subf %30, %31 : vector<224x1xf32>
    %33 = vector.broadcast %29 : vector<224x1xf32> to vector<224x196xf32>
    %34 = arith.mulf %13, %33 : vector<224x196xf32>
    %35 = vector.broadcast %32 : vector<224x1xf32> to vector<224x196xf32>
    %36 = arith.addf %34, %35 : vector<224x196xf32>
    %c0_15 = arith.constant 0 : index
    %c0_16 = arith.constant 0 : index
    %37 = vector.load %arg6[%c0_15, %c0_16] : memref<224x196xf32, #tpu.memory_space<vmem>>, vector<224x196xf32>
    tpu.vector_store %arg6[%c0_15, %c0_16], %36 {strides = array<i32>} : memref<224x196xf32, #tpu.memory_space<vmem>>, vector<224x196xf32>,
    return
  }
  func.func @transform_0(%arg0: i32) -> (i32, i32) {
    %c0_i32 = arith.constant 0 : i32
    %c0_i32_0 = arith.constant 0 : i32
    %c0_i32_1 = arith.constant 0 : i32
    return %c0_i32, %c0_i32_0 : i32, i32
  }
  func.func @transform_1(%arg0: i32) -> (i32, i32) {
    %c0_i32 = arith.constant 0 : i32
    %c0_i32_0 = arith.constant 0 : i32
    %c0_i32_1 = arith.constant 0 : i32
    return %c0_i32, %c0_i32_0 : i32, i32
  }
  func.func @transform_2(%arg0: i32) -> (i32, i32) {
    %c0_i32 = arith.constant 0 : i32
    %c0_i32_0 = arith.constant 0 : i32
    return %arg0, %c0_i32 : i32, i32
  }
  func.func @transform_3(%arg0: i32) -> (i32, i32) {
    %c0_i32 = arith.constant 0 : i32
    %c0_i32_0 = arith.constant 0 : i32
    return %arg0, %c0_i32 : i32, i32
  }
  func.func @transform_4(%arg0: i32) -> (i32, i32) {
    %c0_i32 = arith.constant 0 : i32
    %c0_i32_0 = arith.constant 0 : i32
    return %arg0, %c0_i32 : i32, i32
  }
  func.func @transform_5(%arg0: i32) -> (i32, i32) {
    %c0_i32 = arith.constant 0 : i32
    %c0_i32_0 = arith.constant 0 : i32
    return %arg0, %c0_i32 : i32, i32
  }
}

</mosaic_0001>

<llo_original>
// kernel: tpu_custom_call.1
$region0: #{tpu_custom_call.1}
  #allocation0 [shape = 'u32[]', space=smem, size = 0x4, offset = 0x4, fixed_abs, tag = 'smem constant byte address 0x4 - core index']
  #allocation1 [shape = 'u32[72,128]{1,0:T(1,128)}', space=vmem, size = 0x9000, scoped, tag = 'internal scratch']
  %s0 = inlined_call_operand.vmem [shape: f32[1,1344], index: 0, kind: input, shape index: {}]
  %s1 = inlined_call_operand.vmem [shape: f32[1344,196], index: 1, kind: input, shape index: {}]
  %s2 = inlined_call_operand.vmem [shape: bf16[224,1344], index: 2, kind: input, shape index: {}]
  %s3 = inlined_call_operand.vmem [shape: f32[224,1], index: 3, kind: input, shape index: {}]
  %s4 = inlined_call_operand.vmem [shape: f32[224,1], index: 4, kind: input, shape index: {}]
  %s5 = inlined_call_operand.vmem [shape: f32[224,196], index: 5, kind: output, shape index: {}]
  %s6 = sld [smem:[#allocation0]]
  $region30: #{tpu_custom_call.1} parent=0
    _
  %s8 = ssub.s32 1, %s6
  %s9 = scalar_select 0, %s8, %s6
  // Predicated region
  $region2: #{tpu_custom_call.1} parent=0 // pred_check
    _
  $region3: #{tpu_custom_call.1} parent=0 // pred_check_branch
    %11 = sbr.rel (0) target = $region5
  $region4: #{tpu_custom_call.1} parent=0 // pred_region
    _
  $region5: #{tpu_custom_call.1} parent=0 // pred_fallthru
    _
  // Predicated region
  $region6: #{tpu_custom_call.1} parent=0 // pred_check
    _
  $region7: #{tpu_custom_call.1} parent=0 // pred_check_branch
    %13 = sbr.rel (0) target = $region9
  $region8: #{tpu_custom_call.1} parent=0 // pred_region
    _
  $region9: #{tpu_custom_call.1} parent=0 // pred_fallthru
    _
  // Predicated region
  $region10: #{tpu_custom_call.1} parent=0 // pred_check
    _
  $region11: #{tpu_custom_call.1} parent=0 // pred_check_branch
    %15 = sbr.rel (0) target = $region13
  $region12: #{tpu_custom_call.1} parent=0 // pred_region
    _
  $region13: #{tpu_custom_call.1} parent=0 // pred_fallthru
    _
  // Predicated region
  $region14: #{tpu_custom_call.1} parent=0 // pred_check
    _
  $region15: #{tpu_custom_call.1} parent=0 // pred_check_branch
    %17 = sbr.rel (0) target = $region17
  $region16: #{tpu_custom_call.1} parent=0 // pred_region
    _
  $region17: #{tpu_custom_call.1} parent=0 // pred_fallthru
    _
  // Predicated region
  $region18: #{tpu_custom_call.1} parent=0 // pred_check
    _
  $region19: #{tpu_custom_call.1} parent=0 // pred_check_branch
    %19 = sbr.rel (0) target = $region21
  $region20: #{tpu_custom_call.1} parent=0 // pred_region
    _
  $region21: #{tpu_custom_call.1} parent=0 // pred_fallthru
    _
  %v21 = vld [vmem:[%s0] sm:$0xff]
  %v22 = vld [vmem:[%s0 + $0x8] sm:$0x7]
  %v23 = vxor.u32 %v21, 2147483648
  %v24 = vxor.u32 %v22, 2147483648
  %v25 = vmul.f32 %v23, 1.442695
  %v26 = vpow.pop %v25
  %v27 = vmul.f32 %v24, 1.442695
  %v28 = vpow.pop %v27
  %v29 = vadd.f32 %v26, 1.0
  %v30 = vadd.f32 %v28, 1.0
  %v31 = vrcp.pop %v29
  %v32 = vmul.f32 %v29, %v31
  %v33 = vsub.f32 1.0, %v32
  %v34 = vmul.f32 %v31, %v33
  %v35 = vadd.f32 %v31, %v34
  %vm36 = vweird.f32 %v29
  %vm37 = vweird.f32 %v31
  %vm38 = vmor %vm36, %vm37
  %v39 = vsel %vm38, %v31, %v35
  %v40 = vand.u32 2147483647, %v29
  %vm41 = vcmp.eq.f32.partialorder %v40, 8.507059e+37
  %v42 = vand.u32 %v29, 2147483648
  %v43 = vor.u32 1.1754944e-38, %v42
  %v44 = vsel %vm41, %v43, %v39
  %v45 = vmul.f32 1.0, %v44
  %v46 = vrcp.pop %v30
  %v47 = vmul.f32 %v30, %v46
  %v48 = vsub.f32 1.0, %v47
  %v49 = vmul.f32 %v46, %v48
  %v50 = vadd.f32 %v46, %v49
  %vm51 = vweird.f32 %v30
  %vm52 = vweird.f32 %v46
  %vm53 = vmor %vm51, %vm52
  %v54 = vsel %vm53, %v46, %v50
  %v55 = vand.u32 2147483647, %v30
  %vm56 = vcmp.eq.f32.partialorder %v55, 8.507059e+37
  %v57 = vand.u32 %v30, 2147483648
  %v58 = vor.u32 1.1754944e-38, %v57
  %v59 = vsel %vm56, %v58, %v54
  %v60 = vmul.f32 1.0, %v59
  %v61 = vld [vmem:[%s2] sm:$0xff]
  %v62 = vld [vmem:[%s2 + $0x8] sm:$0xff]
  %v63 = vld [vmem:[%s2 + $0x10] sm:$0xff]
  %v64 = vld [vmem:[%s2 + $0x18] sm:$0xff]
  %v65 = vld [vmem:[%s2 + $0x20] sm:$0xff]
  %v66 = vld [vmem:[%s2 + $0x28] sm:$0xf]
  %v67 = vld [vmem:[%s2 + $0x2c] sm:$0xff]
  %v68 = vld [vmem:[%s2 + $0x34] sm:$0xff]
  %v69 = vld [vmem:[%s2 + $0x3c] sm:$0xff]
  %v70 = vld [vmem:[%s2 + $0x44] sm:$0xff]
  %v71 = vld [vmem:[%s2 + $0x4c] sm:$0xff]
  %v72 = vld [vmem:[%s2 + $0x54] sm:$0xf]
  %v73 = vld [vmem:[%s2 + $0x58] sm:$0xff]
  %v74 = vld [vmem:[%s2 + $0x60] sm:$0xff]
  %v75 = vld [vmem:[%s2 + $0x68] sm:$0xff]
  %v76 = vld [vmem:[%s2 + $0x70] sm:$0xff]
  %v77 = vld [vmem:[%s2 + $0x78] sm:$0xff]
  %v78 = vld [vmem:[%s2 + $0x80] sm:$0xf]
  %v79 = vld [vmem:[%s2 + $0x84] sm:$0xff]
  %v80 = vld [vmem:[%s2 + $0x8c] sm:$0xff]
  %v81 = vld [vmem:[%s2 + $0x94] sm:$0xff]
  %v82 = vld [vmem:[%s2 + $0x9c] sm:$0xff]
  %v83 = vld [vmem:[%s2 + $0xa4] sm:$0xff]
  %v84 = vld [vmem:[%s2 + $0xac] sm:$0xf]
  %v85 = vld [vmem:[%s2 + $0xb0] sm:$0xff]
  %v86 = vld [vmem:[%s2 + $0xb8] sm:$0xff]
  %v87 = vld [vmem:[%s2 + $0xc0] sm:$0xff]
  %v88 = vld [vmem:[%s2 + $0xc8] sm:$0xff]
  %v89 = vld [vmem:[%s2 + $0xd0] sm:$0xff]
  %v90 = vld [vmem:[%s2 + $0xd8] sm:$0xf]
  %v91 = vld [vmem:[%s2 + $0xdc] sm:$0xff]
  %v92 = vld [vmem:[%s2 + $0xe4] sm:$0xff]
  %v93 = vld [vmem:[%s2 + $0xec] sm:$0xff]
  %v94 = vld [vmem:[%s2 + $0xf4] sm:$0xff]
  %v95 = vld [vmem:[%s2 + $0xfc] sm:$0xff]
  %v96 = vld [vmem:[%s2 + $0x104] sm:$0xf]
  %v97 = vld [vmem:[%s2 + $0x108] sm:$0xff]
  %v98 = vld [vmem:[%s2 + $0x110] sm:$0xff]
  %v99 = vld [vmem:[%s2 + $0x118] sm:$0xff]
  %v100 = vld [vmem:[%s2 + $0x120] sm:$0xff]
  %v101 = vld [vmem:[%s2 + $0x128] sm:$0xff]
  %v102 = vld [vmem:[%s2 + $0x130] sm:$0xf]
  %v103 = vld [vmem:[%s2 + $0x134] sm:$0xff]
  %v104 = vld [vmem:[%s2 + $0x13c] sm:$0xff]
  %v105 = vld [vmem:[%s2 + $0x144] sm:$0xff]
  %v106 = vld [vmem:[%s2 + $0x14c] sm:$0xff]
  %v107 = vld [vmem:[%s2 + $0x154] sm:$0xff]
  %v108 = vld [vmem:[%s2 + $0x15c] sm:$0xf]
  %v109 = vld [vmem:[%s2 + $0x160] sm:$0xff]
  %v110 = vld [vmem:[%s2 + $0x168] sm:$0xff]
  %v111 = vld [vmem:[%s2 + $0x170] sm:$0xff]
  %v112 = vld [vmem:[%s2 + $0x178] sm:$0xff]
  %v113 = vld [vmem:[%s2 + $0x180] sm:$0xff]
  %v114 = vld [vmem:[%s2 + $0x188] sm:$0xf]
  %v115 = vld [vmem:[%s2 + $0x18c] sm:$0xff]
  %v116 = vld [vmem:[%s2 + $0x194] sm:$0xff]
  %v117 = vld [vmem:[%s2 + $0x19c] sm:$0xff]
  %v118 = vld [vmem:[%s2 + $0x1a4] sm:$0xff]
  %v119 = vld [vmem:[%s2 + $0x1ac] sm:$0xff]
  %v120 = vld [vmem:[%s2 + $0x1b4] sm:$0xf]
  %v121 = vld [vmem:[%s2 + $0x1b8] sm:$0xff]
  %v122 = vld [vmem:[%s2 + $0x1c0] sm:$0xff]
  %v123 = vld [vmem:[%s2 + $0x1c8] sm:$0xff]
  %v124 = vld [vmem:[%s2 + $0x1d0] sm:$0xff]
  %v125 = vld [vmem:[%s2 + $0x1d8] sm:$0xff]
  %v126 = vld [vmem:[%s2 + $0x1e0] sm:$0xf]
  %v127 = vld [vmem:[%s2 + $0x1e4] sm:$0xff]
  %v128 = vld [vmem:[%s2 + $0x1ec] sm:$0xff]
  %v129 = vld [vmem:[%s2 + $0x1f4] sm:$0xff]
  %v130 = vld [vmem:[%s2 + $0x1fc] sm:$0xff]
  %v131 = vld [vmem:[%s2 + $0x204] sm:$0xff]
  %v132 = vld [vmem:[%s2 + $0x20c] sm:$0xf]
  %v133 = vld [vmem:[%s2 + $0x210] sm:$0xff]
  %v134 = vld [vmem:[%s2 + $0x218] sm:$0xff]
  %v135 = vld [vmem:[%s2 + $0x220] sm:$0xff]
  %v136 = vld [vmem:[%s2 + $0x228] sm:$0xff]
  %v137 = vld [vmem:[%s2 + $0x230] sm:$0xff]
  %v138 = vld [vmem:[%s2 + $0x238] sm:$0xf]
  %v139 = vld [vmem:[%s2 + $0x23c] sm:$0xff]
  %v140 = vld [vmem:[%s2 + $0x244] sm:$0xff]
  %v141 = vld [vmem:[%s2 + $0x24c] sm:$0xff]
  %v142 = vld [vmem:[%s2 + $0x254] sm:$0xff]
  %v143 = vld [vmem:[%s2 + $0x25c] sm:$0xff]
  %v144 = vld [vmem:[%s2 + $0x264] sm:$0xf]
  %v145 = vld [vmem:[%s2 + $0x268] sm:$0xff]
  %v146 = vld [vmem:[%s2 + $0x270] sm:$0xff]
  %v147 = vld [vmem:[%s2 + $0x278] sm:$0xff]
  %v148 = vld [vmem:[%s2 + $0x280] sm:$0xff]
  %v149 = vld [vmem:[%s2 + $0x288] sm:$0xff]
  %v150 = vld [vmem:[%s2 + $0x290] sm:$0xf]
  %v151 = vld [vmem:[%s2 + $0x294] sm:$0xff]
  %v152 = vld [vmem:[%s2 + $0x29c] sm:$0xff]
  %v153 = vld [vmem:[%s2 + $0x2a4] sm:$0xff]
  %v154 = vld [vmem:[%s2 + $0x2ac] sm:$0xff]
  %v155 = vld [vmem:[%s2 + $0x2b4] sm:$0xff]
  %v156 = vld [vmem:[%s2 + $0x2bc] sm:$0xf]
  %v157 = vld [vmem:[%s2 + $0x2c0] sm:$0xff]
  %v158 = vld [vmem:[%s2 + $0x2c8] sm:$0xff]
  %v159 = vld [vmem:[%s2 + $0x2d0] sm:$0xff]
  %v160 = vld [vmem:[%s2 + $0x2d8] sm:$0xff]
  %v161 = vld [vmem:[%s2 + $0x2e0] sm:$0xff]
  %v162 = vld [vmem:[%s2 + $0x2e8] sm:$0xf]
  %v163 = vld [vmem:[%s2 + $0x2ec] sm:$0xff]
  %v164 = vld [vmem:[%s2 + $0x2f4] sm:$0xff]
  %v165 = vld [vmem:[%s2 + $0x2fc] sm:$0xff]
  %v166 = vld [vmem:[%s2 + $0x304] sm:$0xff]
  %v167 = vld [vmem:[%s2 + $0x30c] sm:$0xff]
  %v168 = vld [vmem:[%s2 + $0x314] sm:$0xf]
  %v169 = vld [vmem:[%s2 + $0x318] sm:$0xff]
  %v170 = vld [vmem:[%s2 + $0x320] sm:$0xff]
  %v171 = vld [vmem:[%s2 + $0x328] sm:$0xff]
  %v172 = vld [vmem:[%s2 + $0x330] sm:$0xff]
  %v173 = vld [vmem:[%s2 + $0x338] sm:$0xff]
  %v174 = vld [vmem:[%s2 + $0x340] sm:$0xf]
  %v175 = vld [vmem:[%s2 + $0x344] sm:$0xff]
  %v176 = vld [vmem:[%s2 + $0x34c] sm:$0xff]
  %v177 = vld [vmem:[%s2 + $0x354] sm:$0xff]
  %v178 = vld [vmem:[%s2 + $0x35c] sm:$0xff]
  %v179 = vld [vmem:[%s2 + $0x364] sm:$0xff]
  %v180 = vld [vmem:[%s2 + $0x36c] sm:$0xf]
  %v181 = vld [vmem:[%s2 + $0x370] sm:$0xff]
  %v182 = vld [vmem:[%s2 + $0x378] sm:$0xff]
  %v183 = vld [vmem:[%s2 + $0x380] sm:$0xff]
  %v184 = vld [vmem:[%s2 + $0x388] sm:$0xff]
  %v185 = vld [vmem:[%s2 + $0x390] sm:$0xff]
  %v186 = vld [vmem:[%s2 + $0x398] sm:$0xf]
  %v187 = vld [vmem:[%s2 + $0x39c] sm:$0xff]
  %v188 = vld [vmem:[%s2 + $0x3a4] sm:$0xff]
  %v189 = vld [vmem:[%s2 + $0x3ac] sm:$0xff]
  %v190 = vld [vmem:[%s2 + $0x3b4] sm:$0xff]
  %v191 = vld [vmem:[%s2 + $0x3bc] sm:$0xff]
  %v192 = vld [vmem:[%s2 + $0x3c4] sm:$0xf]
  %v193 = vld [vmem:[%s2 + $0x3c8] sm:$0xff]
  %v194 = vld [vmem:[%s2 + $0x3d0] sm:$0xff]
  %v195 = vld [vmem:[%s2 + $0x3d8] sm:$0xff]
  %v196 = vld [vmem:[%s2 + $0x3e0] sm:$0xff]
  %v197 = vld [vmem:[%s2 + $0x3e8] sm:$0xff]
  %v198 = vld [vmem:[%s2 + $0x3f0] sm:$0xf]
  %v199 = vld [vmem:[%s2 + $0x3f4] sm:$0xff]
  %v200 = vld [vmem:[%s2 + $0x3fc] sm:$0xff]
  %v201 = vld [vmem:[%s2 + $0x404] sm:$0xff]
  %v202 = vld [vmem:[%s2 + $0x40c] sm:$0xff]
  %v203 = vld [vmem:[%s2 + $0x414] sm:$0xff]
  %v204 = vld [vmem:[%s2 + $0x41c] sm:$0xf]
  %v205 = vld [vmem:[%s2 + $0x420] sm:$0xff]
  %v206 = vld [vmem:[%s2 + $0x428] sm:$0xff]
  %v207 = vld [vmem:[%s2 + $0x430] sm:$0xff]
  %v208 = vld [vmem:[%s2 + $0x438] sm:$0xff]
  %v209 = vld [vmem:[%s2 + $0x440] sm:$0xff]
  %v210 = vld [vmem:[%s2 + $0x448] sm:$0xf]
  %v211 = vld [vmem:[%s2 + $0x44c] sm:$0xff]
  %v212 = vld [vmem:[%s2 + $0x454] sm:$0xff]
  %v213 = vld [vmem:[%s2 + $0x45c] sm:$0xff]
  %v214 = vld [vmem:[%s2 + $0x464] sm:$0xff]
  %v215 = vld [vmem:[%s2 + $0x46c] sm:$0xff]
  %v216 = vld [vmem:[%s2 + $0x474] sm:$0xf]
  %v217 = vld [vmem:[%s2 + $0x478] sm:$0xff]
  %v218 = vld [vmem:[%s2 + $0x480] sm:$0xff]
  %v219 = vld [vmem:[%s2 + $0x488] sm:$0xff]
  %v220 = vld [vmem:[%s2 + $0x490] sm:$0xff]
  %v221 = vld [vmem:[%s2 + $0x498] sm:$0xff]
  %v222 = vld [vmem:[%s2 + $0x4a0] sm:$0xf]
  %v223 = vld [vmem:[%s2 + $0x4a4] sm:$0xff]
  %v224 = vld [vmem:[%s2 + $0x4ac] sm:$0xff]
  %v225 = vld [vmem:[%s2 + $0x4b4] sm:$0xff]
  %v226 = vld [vmem:[%s2 + $0x4bc] sm:$0xff]
  %v227 = vld [vmem:[%s2 + $0x4c4] sm:$0xff]
  %v228 = vld [vmem:[%s2 + $0x4cc] sm:$0xf]
  %v229 = vunpack.c.l.bf16 %v61
  %v230 = vunpack.c.h.bf16 %v61
  %v231 = vunpack.c.l.bf16 %v62
  %v232 = vunpack.c.h.bf16 %v62
  %v233 = vunpack.c.l.bf16 %v63
  %v234 = vunpack.c.h.bf16 %v63
  %v235 = vunpack.c.l.bf16 %v64
  %v236 = vunpack.c.h.bf16 %v64
  %v237 = vunpack.c.l.bf16 %v65
  %v238 = vunpack.c.h.bf16 %v65
  %v239 = vunpack.c.l.bf16 %v66
  %v240 = vunpack.c.l.bf16 %v67
  %v241 = vunpack.c.h.bf16 %v67
  %v242 = vunpack.c.l.bf16 %v68
  %v243 = vunpack.c.h.bf16 %v68
  %v244 = vunpack.c.l.bf16 %v69
  %v245 = vunpack.c.h.bf16 %v69
  %v246 = vunpack.c.l.bf16 %v70
  %v247 = vunpack.c.h.bf16 %v70
  %v248 = vunpack.c.l.bf16 %v71
  %v249 = vunpack.c.h.bf16 %v71
  %v250 = vunpack.c.l.bf16 %v72
  %v251 = vunpack.c.l.bf16 %v73
  %v252 = vunpack.c.h.bf16 %v73
  %v253 = vunpack.c.l.bf16 %v74
  %v254 = vunpack.c.h.bf16 %v74
  %v255 = vunpack.c.l.bf16 %v75
  %v256 = vunpack.c.h.bf16 %v75
  %v257 = vunpack.c.l.bf16 %v76
  %v258 = vunpack.c.h.bf16 %v76
  %v259 = vunpack.c.l.bf16 %v77
  %v260 = vunpack.c.h.bf16 %v77
  %v261 = vunpack.c.l.bf16 %v78
  %v262 = vunpack.c.l.bf16 %v79
  %v263 = vunpack.c.h.bf16 %v79
  %v264 = vunpack.c.l.bf16 %v80
  %v265 = vunpack.c.h.bf16 %v80
  %v266 = vunpack.c.l.bf16 %v81
  %v267 = vunpack.c.h.bf16 %v81
  %v268 = vunpack.c.l.bf16 %v82
  %v269 = vunpack.c.h.bf16 %v82
  %v270 = vunpack.c.l.bf16 %v83
  %v271 = vunpack.c.h.bf16 %v83
  %v272 = vunpack.c.l.bf16 %v84
  %v273 = vunpack.c.l.bf16 %v85
  %v274 = vunpack.c.h.bf16 %v85
  %v275 = vunpack.c.l.bf16 %v86
  %v276 = vunpack.c.h.bf16 %v86
  %v277 = vunpack.c.l.bf16 %v87
  %v278 = vunpack.c.h.bf16 %v87
  %v279 = vunpack.c.l.bf16 %v88
  %v280 = vunpack.c.h.bf16 %v88
  %v281 = vunpack.c.l.bf16 %v89
  %v282 = vunpack.c.h.bf16 %v89
  %v283 = vunpack.c.l.bf16 %v90
  %v284 = vunpack.c.l.bf16 %v91
  %v285 = vunpack.c.h.bf16 %v91
  %v286 = vunpack.c.l.bf16 %v92
  %v287 = vunpack.c.h.bf16 %v92
  %v288 = vunpack.c.l.bf16 %v93
  %v289 = vunpack.c.h.bf16 %v93
  %v290 = vunpack.c.l.bf16 %v94
  %v291 = vunpack.c.h.bf16 %v94
  %v292 = vunpack.c.l.bf16 %v95
  %v293 = vunpack.c.h.bf16 %v95
  %v294 = vunpack.c.l.bf16 %v96
  %v295 = vunpack.c.l.bf16 %v97
  %v296 = vunpack.c.h.bf16 %v97
  %v297 = vunpack.c.l.bf16 %v98
  %v298 = vunpack.c.h.bf16 %v98
  %v299 = vunpack.c.l.bf16 %v99
  %v300 = vunpack.c.h.bf16 %v99
  %v301 = vunpack.c.l.bf16 %v100
  %v302 = vunpack.c.h.bf16 %v100
  %v303 = vunpack.c.l.bf16 %v101
  %v304 = vunpack.c.h.bf16 %v101
  %v305 = vunpack.c.l.bf16 %v102
  %v306 = vunpack.c.l.bf16 %v103
  %v307 = vunpack.c.h.bf16 %v103
  %v308 = vunpack.c.l.bf16 %v104
  %v309 = vunpack.c.h.bf16 %v104
  %v310 = vunpack.c.l.bf16 %v105
  %v311 = vunpack.c.h.bf16 %v105
  %v312 = vunpack.c.l.bf16 %v106
  %v313 = vunpack.c.h.bf16 %v106
  %v314 = vunpack.c.l.bf16 %v107
  %v315 = vunpack.c.h.bf16 %v107
  %v316 = vunpack.c.l.bf16 %v108
  %v317 = vunpack.c.l.bf16 %v109
  %v318 = vunpack.c.h.bf16 %v109
  %v319 = vunpack.c.l.bf16 %v110
  %v320 = vunpack.c.h.bf16 %v110
  %v321 = vunpack.c.l.bf16 %v111
  %v322 = vunpack.c.h.bf16 %v111
  %v323 = vunpack.c.l.bf16 %v112
  %v324 = vunpack.c.h.bf16 %v112
  %v325 = vunpack.c.l.bf16 %v113
  %v326 = vunpack.c.h.bf16 %v113
  %v327 = vunpack.c.l.bf16 %v114
  %v328 = vunpack.c.l.bf16 %v115
  %v329 = vunpack.c.h.bf16 %v115
  %v330 = vunpack.c.l.bf16 %v116
  %v331 = vunpack.c.h.bf16 %v116
  %v332 = vunpack.c.l.bf16 %v117
  %v333 = vunpack.c.h.bf16 %v117
  %v334 = vunpack.c.l.bf16 %v118
  %v335 = vunpack.c.h.bf16 %v118
  %v336 = vunpack.c.l.bf16 %v119
  %v337 = vunpack.c.h.bf16 %v119
  %v338 = vunpack.c.l.bf16 %v120
  %v339 = vunpack.c.l.bf16 %v121
  %v340 = vunpack.c.h.bf16 %v121
  %v341 = vunpack.c.l.bf16 %v122
  %v342 = vunpack.c.h.bf16 %v122
  %v343 = vunpack.c.l.bf16 %v123
  %v344 = vunpack.c.h.bf16 %v123
  %v345 = vunpack.c.l.bf16 %v124
  %v346 = vunpack.c.h.bf16 %v124
  %v347 = vunpack.c.l.bf16 %v125
  %v348 = vunpack.c.h.bf16 %v125
  %v349 = vunpack.c.l.bf16 %v126
  %v350 = vunpack.c.l.bf16 %v127
  %v351 = vunpack.c.h.bf16 %v127
  %v352 = vunpack.c.l.bf16 %v128
  %v353 = vunpack.c.h.bf16 %v128
  %v354 = vunpack.c.l.bf16 %v129
  %v355 = vunpack.c.h.bf16 %v129
  %v356 = vunpack.c.l.bf16 %v130
  %v357 = vunpack.c.h.bf16 %v130
  %v358 = vunpack.c.l.bf16 %v131
  %v359 = vunpack.c.h.bf16 %v131
  %v360 = vunpack.c.l.bf16 %v132
  %v361 = vunpack.c.l.bf16 %v133
  %v362 = vunpack.c.h.bf16 %v133
  %v363 = vunpack.c.l.bf16 %v134
  %v364 = vunpack.c.h.bf16 %v134
  %v365 = vunpack.c.l.bf16 %v135
  %v366 = vunpack.c.h.bf16 %v135
  %v367 = vunpack.c.l.bf16 %v136
  %v368 = vunpack.c.h.bf16 %v136
  %v369 = vunpack.c.l.bf16 %v137
  %v370 = vunpack.c.h.bf16 %v137
  %v371 = vunpack.c.l.bf16 %v138
  %v372 = vunpack.c.l.bf16 %v139
  %v373 = vunpack.c.h.bf16 %v139
  %v374 = vunpack.c.l.bf16 %v140
  %v375 = vunpack.c.h.bf16 %v140
  %v376 = vunpack.c.l.bf16 %v141
  %v377 = vunpack.c.h.bf16 %v141
  %v378 = vunpack.c.l.bf16 %v142
  %v379 = vunpack.c.h.bf16 %v142
  %v380 = vunpack.c.l.bf16 %v143
  %v381 = vunpack.c.h.bf16 %v143
  %v382 = vunpack.c.l.bf16 %v144
  %v383 = vunpack.c.l.bf16 %v145
  %v384 = vunpack.c.h.bf16 %v145
  %v385 = vunpack.c.l.bf16 %v146
  %v386 = vunpack.c.h.bf16 %v146
  %v387 = vunpack.c.l.bf16 %v147
  %v388 = vunpack.c.h.bf16 %v147
  %v389 = vunpack.c.l.bf16 %v148
  %v390 = vunpack.c.h.bf16 %v148
  %v391 = vunpack.c.l.bf16 %v149
  %v392 = vunpack.c.h.bf16 %v149
  %v393 = vunpack.c.l.bf16 %v150
  %v394 = vunpack.c.l.bf16 %v151
  %v395 = vunpack.c.h.bf16 %v151
  %v396 = vunpack.c.l.bf16 %v152
  %v397 = vunpack.c.h.bf16 %v152
  %v398 = vunpack.c.l.bf16 %v153
  %v399 = vunpack.c.h.bf16 %v153
  %v400 = vunpack.c.l.bf16 %v154
  %v401 = vunpack.c.h.bf16 %v154
  %v402 = vunpack.c.l.bf16 %v155
  %v403 = vunpack.c.h.bf16 %v155
  %v404 = vunpack.c.l.bf16 %v156
  %v405 = vunpack.c.l.bf16 %v157
  %v406 = vunpack.c.h.bf16 %v157
  %v407 = vunpack.c.l.bf16 %v158
  %v408 = vunpack.c.h.bf16 %v158
  %v409 = vunpack.c.l.bf16 %v159
  %v410 = vunpack.c.h.bf16 %v159
  %v411 = vunpack.c.l.bf16 %v160
  %v412 = vunpack.c.h.bf16 %v160
  %v413 = vunpack.c.l.bf16 %v161
  %v414 = vunpack.c.h.bf16 %v161
  %v415 = vunpack.c.l.bf16 %v162
  %v416 = vunpack.c.l.bf16 %v163
  %v417 = vunpack.c.h.bf16 %v163
  %v418 = vunpack.c.l.bf16 %v164
  %v419 = vunpack.c.h.bf16 %v164
  %v420 = vunpack.c.l.bf16 %v165
  %v421 = vunpack.c.h.bf16 %v165
  %v422 = vunpack.c.l.bf16 %v166
  %v423 = vunpack.c.h.bf16 %v166
  %v424 = vunpack.c.l.bf16 %v167
  %v425 = vunpack.c.h.bf16 %v167
  %v426 = vunpack.c.l.bf16 %v168
  %v427 = vunpack.c.l.bf16 %v169
  %v428 = vunpack.c.h.bf16 %v169
  %v429 = vunpack.c.l.bf16 %v170
  %v430 = vunpack.c.h.bf16 %v170
  %v431 = vunpack.c.l.bf16 %v171
  %v432 = vunpack.c.h.bf16 %v171
  %v433 = vunpack.c.l.bf16 %v172
  %v434 = vunpack.c.h.bf16 %v172
  %v435 = vunpack.c.l.bf16 %v173
  %v436 = vunpack.c.h.bf16 %v173
  %v437 = vunpack.c.l.bf16 %v174
  %v438 = vunpack.c.l.bf16 %v175
  %v439 = vunpack.c.h.bf16 %v175
  %v440 = vunpack.c.l.bf16 %v176
  %v441 = vunpack.c.h.bf16 %v176
  %v442 = vunpack.c.l.bf16 %v177
  %v443 = vunpack.c.h.bf16 %v177
  %v444 = vunpack.c.l.bf16 %v178
  %v445 = vunpack.c.h.bf16 %v178
  %v446 = vunpack.c.l.bf16 %v179
  %v447 = vunpack.c.h.bf16 %v179
  %v448 = vunpack.c.l.bf16 %v180
  %v449 = vunpack.c.l.bf16 %v181
  %v450 = vunpack.c.h.bf16 %v181
  %v451 = vunpack.c.l.bf16 %v182
  %v452 = vunpack.c.h.bf16 %v182
  %v453 = vunpack.c.l.bf16 %v183
  %v454 = vunpack.c.h.bf16 %v183
  %v455 = vunpack.c.l.bf16 %v184
  %v456 = vunpack.c.h.bf16 %v184
  %v457 = vunpack.c.l.bf16 %v185
  %v458 = vunpack.c.h.bf16 %v185
  %v459 = vunpack.c.l.bf16 %v186
  %v460 = vunpack.c.l.bf16 %v187
  %v461 = vunpack.c.h.bf16 %v187
  %v462 = vunpack.c.l.bf16 %v188
  %v463 = vunpack.c.h.bf16 %v188
  %v464 = vunpack.c.l.bf16 %v189
  %v465 = vunpack.c.h.bf16 %v189
  %v466 = vunpack.c.l.bf16 %v190
  %v467 = vunpack.c.h.bf16 %v190
  %v468 = vunpack.c.l.bf16 %v191
  %v469 = vunpack.c.h.bf16 %v191
  %v470 = vunpack.c.l.bf16 %v192
  %v471 = vunpack.c.l.bf16 %v193
  %v472 = vunpack.c.h.bf16 %v193
  %v473 = vunpack.c.l.bf16 %v194
  %v474 = vunpack.c.h.bf16 %v194
  %v475 = vunpack.c.l.bf16 %v195
  %v476 = vunpack.c.h.bf16 %v195
  %v477 = vunpack.c.l.bf16 %v196
  %v478 = vunpack.c.h.bf16 %v196
  %v479 = vunpack.c.l.bf16 %v197
  %v480 = vunpack.c.h.bf16 %v197
  %v481 = vunpack.c.l.bf16 %v198
  %v482 = vunpack.c.l.bf16 %v199
  %v483 = vunpack.c.h.bf16 %v199
  %v484 = vunpack.c.l.bf16 %v200
  %v485 = vunpack.c.h.bf16 %v200
  %v486 = vunpack.c.l.bf16 %v201
  %v487 = vunpack.c.h.bf16 %v201
  %v488 = vunpack.c.l.bf16 %v202
  %v489 = vunpack.c.h.bf16 %v202
  %v490 = vunpack.c.l.bf16 %v203
  %v491 = vunpack.c.h.bf16 %v203
  %v492 = vunpack.c.l.bf16 %v204
  %v493 = vunpack.c.l.bf16 %v205
  %v494 = vunpack.c.h.bf16 %v205
  %v495 = vunpack.c.l.bf16 %v206
  %v496 = vunpack.c.h.bf16 %v206
  %v497 = vunpack.c.l.bf16 %v207
  %v498 = vunpack.c.h.bf16 %v207
  %v499 = vunpack.c.l.bf16 %v208
  %v500 = vunpack.c.h.bf16 %v208
  %v501 = vunpack.c.l.bf16 %v209
  %v502 = vunpack.c.h.bf16 %v209
  %v503 = vunpack.c.l.bf16 %v210
  %v504 = vunpack.c.l.bf16 %v211
  %v505 = vunpack.c.h.bf16 %v211
  %v506 = vunpack.c.l.bf16 %v212
  %v507 = vunpack.c.h.bf16 %v212
  %v508 = vunpack.c.l.bf16 %v213
  %v509 = vunpack.c.h.bf16 %v213
  %v510 = vunpack.c.l.bf16 %v214
  %v511 = vunpack.c.h.bf16 %v214
  %v512 = vunpack.c.l.bf16 %v215
  %v513 = vunpack.c.h.bf16 %v215
  %v514 = vunpack.c.l.bf16 %v216
  %v515 = vunpack.c.l.bf16 %v217
  %v516 = vunpack.c.h.bf16 %v217
  %v517 = vunpack.c.l.bf16 %v218
  %v518 = vunpack.c.h.bf16 %v218
  %v519 = vunpack.c.l.bf16 %v219
  %v520 = vunpack.c.h.bf16 %v219
  %v521 = vunpack.c.l.bf16 %v220
  %v522 = vunpack.c.h.bf16 %v220
  %v523 = vunpack.c.l.bf16 %v221
  %v524 = vunpack.c.h.bf16 %v221
  %v525 = vunpack.c.l.bf16 %v222
  %v526 = vunpack.c.l.bf16 %v223
  %v527 = vunpack.c.h.bf16 %v223
  %v528 = vunpack.c.l.bf16 %v224
  %v529 = vunpack.c.h.bf16 %v224
  %v530 = vunpack.c.l.bf16 %v225
  %v531 = vunpack.c.h.bf16 %v225
  %v532 = vunpack.c.l.bf16 %v226
  %v533 = vunpack.c.h.bf16 %v226
  %v534 = vunpack.c.l.bf16 %v227
  %v535 = vunpack.c.h.bf16 %v227
  %v536 = vunpack.c.l.bf16 %v228
  %v539 = vperm.slane %v45, 0
  %v540 = vperm.slane %v45, 1
  %v541 = vperm.slane %v45, 2
  %v542 = vperm.slane %v45, 3
  %v543 = vperm.slane %v45, 4
  %v544 = vperm.slane %v45, 5
  %v545 = vperm.slane %v45, 6
  %v546 = vperm.slane %v45, 7
  %v547 = vperm.slane %v60, 0
  %v548 = vperm.slane %v60, 1
  %v549 = vperm.slane %v60, 2
  %v561 = vmul.f32 %v229, %v539
  %v562 = vmul.f32 %v230, %v540
  %v563 = vmul.f32 %v231, %v541
  %v564 = vmul.f32 %v232, %v542
  %v565 = vmul.f32 %v233, %v543
  %v566 = vmul.f32 %v234, %v544
  %v567 = vmul.f32 %v235, %v545
  %v568 = vmul.f32 %v236, %v546
  %v569 = vmul.f32 %v237, %v547
  %v570 = vmul.f32 %v238, %v548
  %v571 = vmul.f32 %v239, %v549
  %v572 = vmul.f32 %v240, %v539
  %v573 = vmul.f32 %v241, %v540
  %v574 = vmul.f32 %v242, %v541
  %v575 = vmul.f32 %v243, %v542
  %v576 = vmul.f32 %v244, %v543
  %v577 = vmul.f32 %v245, %v544
  %v578 = vmul.f32 %v246, %v545
  %v579 = vmul.f32 %v247, %v546
  %v580 = vmul.f32 %v248, %v547
  %v581 = vmul.f32 %v249, %v548
  %v582 = vmul.f32 %v250, %v549
  %v583 = vmul.f32 %v251, %v539
  %v584 = vmul.f32 %v252, %v540
  %v585 = vmul.f32 %v253, %v541
  %v586 = vmul.f32 %v254, %v542
  %v587 = vmul.f32 %v255, %v543
  %v588 = vmul.f32 %v256, %v544
  %v589 = vmul.f32 %v257, %v545
  %v590 = vmul.f32 %v258, %v546
  %v591 = vmul.f32 %v259, %v547
  %v592 = vmul.f32 %v260, %v548
  %v593 = vmul.f32 %v261, %v549
  %v594 = vmul.f32 %v262, %v539
  %v595 = vmul.f32 %v263, %v540
  %v596 = vmul.f32 %v264, %v541
  %v597 = vmul.f32 %v265, %v542
  %v598 = vmul.f32 %v266, %v543
  %v599 = vmul.f32 %v267, %v544
  %v600 = vmul.f32 %v268, %v545
  %v601 = vmul.f32 %v269, %v546
  %v602 = vmul.f32 %v270, %v547
  %v603 = vmul.f32 %v271, %v548
  %v604 = vmul.f32 %v272, %v549
  %v605 = vmul.f32 %v273, %v539
  %v606 = vmul.f32 %v274, %v540
  %v607 = vmul.f32 %v275, %v541
  %v608 = vmul.f32 %v276, %v542
  %v609 = vmul.f32 %v277, %v543
  %v610 = vmul.f32 %v278, %v544
  %v611 = vmul.f32 %v279, %v545
  %v612 = vmul.f32 %v280, %v546
  %v613 = vmul.f32 %v281, %v547
  %v614 = vmul.f32 %v282, %v548
  %v615 = vmul.f32 %v283, %v549
  %v616 = vmul.f32 %v284, %v539
  %v617 = vmul.f32 %v285, %v540
  %v618 = vmul.f32 %v286, %v541
  %v619 = vmul.f32 %v287, %v542
  %v620 = vmul.f32 %v288, %v543
  %v621 = vmul.f32 %v289, %v544
  %v622 = vmul.f32 %v290, %v545
  %v623 = vmul.f32 %v291, %v546
  %v624 = vmul.f32 %v292, %v547
  %v625 = vmul.f32 %v293, %v548
  %v626 = vmul.f32 %v294, %v549
  %v627 = vmul.f32 %v295, %v539
  %v628 = vmul.f32 %v296, %v540
  %v629 = vmul.f32 %v297, %v541
  %v630 = vmul.f32 %v298, %v542
  %v631 = vmul.f32 %v299, %v543
  %v632 = vmul.f32 %v300, %v544
  %v633 = vmul.f32 %v301, %v545
  %v634 = vmul.f32 %v302, %v546
  %v635 = vmul.f32 %v303, %v547
  %v636 = vmul.f32 %v304, %v548
  %v637 = vmul.f32 %v305, %v549
  %v638 = vmul.f32 %v306, %v539
  %v639 = vmul.f32 %v307, %v540
  %v640 = vmul.f32 %v308, %v541
  %v641 = vmul.f32 %v309, %v542
  %v642 = vmul.f32 %v310, %v543
  %v643 = vmul.f32 %v311, %v544
  %v644 = vmul.f32 %v312, %v545
  %v645 = vmul.f32 %v313, %v546
  %v646 = vmul.f32 %v314, %v547
  %v647 = vmul.f32 %v315, %v548
  %v648 = vmul.f32 %v316, %v549
  %v649 = vmul.f32 %v317, %v539
  %v650 = vmul.f32 %v318, %v540
  %v651 = vmul.f32 %v319, %v541
  %v652 = vmul.f32 %v320, %v542
  %v653 = vmul.f32 %v321, %v543
  %v654 = vmul.f32 %v322, %v544
  %v655 = vmul.f32 %v323, %v545
  %v656 = vmul.f32 %v324, %v546
  %v657 = vmul.f32 %v325, %v547
  %v658 = vmul.f32 %v326, %v548
  %v659 = vmul.f32 %v327, %v549
  %v660 = vmul.f32 %v328, %v539
  %v661 = vmul.f32 %v329, %v540
  %v662 = vmul.f32 %v330, %v541
  %v663 = vmul.f32 %v331, %v542
  %v664 = vmul.f32 %v332, %v543
  %v665 = vmul.f32 %v333, %v544
  %v666 = vmul.f32 %v334, %v545
  %v667 = vmul.f32 %v335, %v546
  %v668 = vmul.f32 %v336, %v547
  %v669 = vmul.f32 %v337, %v548
  %v670 = vmul.f32 %v338, %v549
  %v671 = vmul.f32 %v339, %v539
  %v672 = vmul.f32 %v340, %v540
  %v673 = vmul.f32 %v341, %v541
  %v674 = vmul.f32 %v342, %v542
  %v675 = vmul.f32 %v343, %v543
  %v676 = vmul.f32 %v344, %v544
  %v677 = vmul.f32 %v345, %v545
  %v678 = vmul.f32 %v346, %v546
  %v679 = vmul.f32 %v347, %v547
  %v680 = vmul.f32 %v348, %v548
  %v681 = vmul.f32 %v349, %v549
  %v682 = vmul.f32 %v350, %v539
  %v683 = vmul.f32 %v351, %v540
  %v684 = vmul.f32 %v352, %v541
  %v685 = vmul.f32 %v353, %v542
  %v686 = vmul.f32 %v354, %v543
  %v687 = vmul.f32 %v355, %v544
  %v688 = vmul.f32 %v356, %v545
  %v689 = vmul.f32 %v357, %v546
  %v690 = vmul.f32 %v358, %v547
  %v691 = vmul.f32 %v359, %v548
  %v692 = vmul.f32 %v360, %v549
  %v693 = vmul.f32 %v361, %v539
  %v694 = vmul.f32 %v362, %v540
  %v695 = vmul.f32 %v363, %v541
  %v696 = vmul.f32 %v364, %v542
  %v697 = vmul.f32 %v365, %v543
  %v698 = vmul.f32 %v366, %v544
  %v699 = vmul.f32 %v367, %v545
  %v700 = vmul.f32 %v368, %v546
  %v701 = vmul.f32 %v369, %v547
  %v702 = vmul.f32 %v370, %v548
  %v703 = vmul.f32 %v371, %v549
  %v704 = vmul.f32 %v372, %v539
  %v705 = vmul.f32 %v373, %v540
  %v706 = vmul.f32 %v374, %v541
  %v707 = vmul.f32 %v375, %v542
  %v708 = vmul.f32 %v376, %v543
  %v709 = vmul.f32 %v377, %v544
  %v710 = vmul.f32 %v378, %v545
  %v711 = vmul.f32 %v379, %v546
  %v712 = vmul.f32 %v380, %v547
  %v713 = vmul.f32 %v381, %v548
  %v714 = vmul.f32 %v382, %v549
  %v715 = vmul.f32 %v383, %v539
  %v716 = vmul.f32 %v384, %v540
  %v717 = vmul.f32 %v385, %v541
  %v718 = vmul.f32 %v386, %v542
  %v719 = vmul.f32 %v387, %v543
  %v720 = vmul.f32 %v388, %v544
  %v721 = vmul.f32 %v389, %v545
  %v722 = vmul.f32 %v390, %v546
  %v723 = vmul.f32 %v391, %v547
  %v724 = vmul.f32 %v392, %v548
  %v725 = vmul.f32 %v393, %v549
  %v726 = vmul.f32 %v394, %v539
  %v727 = vmul.f32 %v395, %v540
  %v728 = vmul.f32 %v396, %v541
  %v729 = vmul.f32 %v397, %v542
  %v730 = vmul.f32 %v398, %v543
  %v731 = vmul.f32 %v399, %v544
  %v732 = vmul.f32 %v400, %v545
  %v733 = vmul.f32 %v401, %v546
  %v734 = vmul.f32 %v402, %v547
  %v735 = vmul.f32 %v403, %v548
  %v736 = vmul.f32 %v404, %v549
  %v737 = vmul.f32 %v405, %v539
  %v738 = vmul.f32 %v406, %v540
  %v739 = vmul.f32 %v407, %v541
  %v740 = vmul.f32 %v408, %v542
  %v741 = vmul.f32 %v409, %v543
  %v742 = vmul.f32 %v410, %v544
  %v743 = vmul.f32 %v411, %v545
  %v744 = vmul.f32 %v412, %v546
  %v745 = vmul.f32 %v413, %v547
  %v746 = vmul.f32 %v414, %v548
  %v747 = vmul.f32 %v415, %v549
  %v748 = vmul.f32 %v416, %v539
  %v749 = vmul.f32 %v417, %v540
  %v750 = vmul.f32 %v418, %v541
  %v751 = vmul.f32 %v419, %v542
  %v752 = vmul.f32 %v420, %v543
  %v753 = vmul.f32 %v421, %v544
  %v754 = vmul.f32 %v422, %v545
  %v755 = vmul.f32 %v423, %v546
  %v756 = vmul.f32 %v424, %v547
  %v757 = vmul.f32 %v425, %v548
  %v758 = vmul.f32 %v426, %v549
  %v759 = vmul.f32 %v427, %v539
  %v760 = vmul.f32 %v428, %v540
  %v761 = vmul.f32 %v429, %v541
  %v762 = vmul.f32 %v430, %v542
  %v763 = vmul.f32 %v431, %v543
  %v764 = vmul.f32 %v432, %v544
  %v765 = vmul.f32 %v433, %v545
  %v766 = vmul.f32 %v434, %v546
  %v767 = vmul.f32 %v435, %v547
  %v768 = vmul.f32 %v436, %v548
  %v769 = vmul.f32 %v437, %v549
  %v770 = vmul.f32 %v438, %v539
  %v771 = vmul.f32 %v439, %v540
  %v772 = vmul.f32 %v440, %v541
  %v773 = vmul.f32 %v441, %v542
  %v774 = vmul.f32 %v442, %v543
  %v775 = vmul.f32 %v443, %v544
  %v776 = vmul.f32 %v444, %v545
  %v777 = vmul.f32 %v445, %v546
  %v778 = vmul.f32 %v446, %v547
  %v779 = vmul.f32 %v447, %v548
  %v780 = vmul.f32 %v448, %v549
  %v781 = vmul.f32 %v449, %v539
  %v782 = vmul.f32 %v450, %v540
  %v783 = vmul.f32 %v451, %v541
  %v784 = vmul.f32 %v452, %v542
  %v785 = vmul.f32 %v453, %v543
  %v786 = vmul.f32 %v454, %v544
  %v787 = vmul.f32 %v455, %v545
  %v788 = vmul.f32 %v456, %v546
  %v789 = vmul.f32 %v457, %v547
  %v790 = vmul.f32 %v458, %v548
  %v791 = vmul.f32 %v459, %v549
  %v792 = vmul.f32 %v460, %v539
  %v793 = vmul.f32 %v461, %v540
  %v794 = vmul.f32 %v462, %v541
  %v795 = vmul.f32 %v463, %v542
  %v796 = vmul.f32 %v464, %v543
  %v797 = vmul.f32 %v465, %v544
  %v798 = vmul.f32 %v466, %v545
  %v799 = vmul.f32 %v467, %v546
  %v800 = vmul.f32 %v468, %v547
  %v801 = vmul.f32 %v469, %v548
  %v802 = vmul.f32 %v470, %v549
  %v803 = vmul.f32 %v471, %v539
  %v804 = vmul.f32 %v472, %v540
  %v805 = vmul.f32 %v473, %v541
  %v806 = vmul.f32 %v474, %v542
  %v807 = vmul.f32 %v475, %v543
  %v808 = vmul.f32 %v476, %v544
  %v809 = vmul.f32 %v477, %v545
  %v810 = vmul.f32 %v478, %v546
  %v811 = vmul.f32 %v479, %v547
  %v812 = vmul.f32 %v480, %v548
  %v813 = vmul.f32 %v481, %v549
  %v814 = vmul.f32 %v482, %v539
  %v815 = vmul.f32 %v483, %v540
  %v816 = vmul.f32 %v484, %v541
  %v817 = vmul.f32 %v485, %v542
  %v818 = vmul.f32 %v486, %v543
  %v819 = vmul.f32 %v487, %v544
  %v820 = vmul.f32 %v488, %v545
  %v821 = vmul.f32 %v489, %v546
  %v822 = vmul.f32 %v490, %v547
  %v823 = vmul.f32 %v491, %v548
  %v824 = vmul.f32 %v492, %v549
  %v825 = vmul.f32 %v493, %v539
  %v826 = vmul.f32 %v494, %v540
  %v827 = vmul.f32 %v495, %v541
  %v828 = vmul.f32 %v496, %v542
  %v829 = vmul.f32 %v497, %v543
  %v830 = vmul.f32 %v498, %v544
  %v831 = vmul.f32 %v499, %v545
  %v832 = vmul.f32 %v500, %v546
  %v833 = vmul.f32 %v501, %v547
  %v834 = vmul.f32 %v502, %v548
  %v835 = vmul.f32 %v503, %v549
  %v836 = vmul.f32 %v504, %v539
  %v837 = vmul.f32 %v505, %v540
  %v838 = vmul.f32 %v506, %v541
  %v839 = vmul.f32 %v507, %v542
  %v840 = vmul.f32 %v508, %v543
  %v841 = vmul.f32 %v509, %v544
  %v842 = vmul.f32 %v510, %v545
  %v843 = vmul.f32 %v511, %v546
  %v844 = vmul.f32 %v512, %v547
  %v845 = vmul.f32 %v513, %v548
  %v846 = vmul.f32 %v514, %v549
  %v847 = vmul.f32 %v515, %v539
  %v848 = vmul.f32 %v516, %v540
  %v849 = vmul.f32 %v517, %v541
  %v850 = vmul.f32 %v518, %v542
  %v851 = vmul.f32 %v519, %v543
  %v852 = vmul.f32 %v520, %v544
  %v853 = vmul.f32 %v521, %v545
  %v854 = vmul.f32 %v522, %v546
  %v855 = vmul.f32 %v523, %v547
  %v856 = vmul.f32 %v524, %v548
  %v857 = vmul.f32 %v525, %v549
  %v858 = vmul.f32 %v526, %v539
  %v859 = vmul.f32 %v527, %v540
  %v860 = vmul.f32 %v528, %v541
  %v861 = vmul.f32 %v529, %v542
  %v862 = vmul.f32 %v530, %v543
  %v863 = vmul.f32 %v531, %v544
  %v864 = vmul.f32 %v532, %v545
  %v865 = vmul.f32 %v533, %v546
  %v866 = vmul.f32 %v534, %v547
  %v867 = vmul.f32 %v535, %v548
  %v868 = vmul.f32 %v536, %v549
  %v869 = vpack.c.bf16 %v572, %v561
  %v870 = vpack.c.bf16 %v573, %v562
  %v871 = vpack.c.bf16 %v574, %v563
  %v872 = vpack.c.bf16 %v575, %v564
  %v873 = vpack.c.bf16 %v576, %v565
  %v874 = vpack.c.bf16 %v577, %v566
  %v875 = vpack.c.bf16 %v578, %v567
  %v876 = vpack.c.bf16 %v579, %v568
  %v877 = vpack.c.bf16 %v580, %v569
  %v878 = vpack.c.bf16 %v581, %v570
  %v879 = vpack.c.bf16 %v582, %v571
  %v880 = vpack.c.bf16 %v594, %v583
  %v881 = vpack.c.bf16 %v595, %v584
  %v882 = vpack.c.bf16 %v596, %v585
  %v883 = vpack.c.bf16 %v597, %v586
  %v884 = vpack.c.bf16 %v598, %v587
  %v885 = vpack.c.bf16 %v599, %v588
  %v886 = vpack.c.bf16 %v600, %v589
  %v887 = vpack.c.bf16 %v601, %v590
  %v888 = vpack.c.bf16 %v602, %v591
  %v889 = vpack.c.bf16 %v603, %v592
  %v890 = vpack.c.bf16 %v604, %v593
  %v891 = vpack.c.bf16 %v616, %v605
  %v892 = vpack.c.bf16 %v617, %v606
  %v893 = vpack.c.bf16 %v618, %v607
  %v894 = vpack.c.bf16 %v619, %v608
  %v895 = vpack.c.bf16 %v620, %v609
  %v896 = vpack.c.bf16 %v621, %v610
  %v897 = vpack.c.bf16 %v622, %v611
  %v898 = vpack.c.bf16 %v623, %v612
  %v899 = vpack.c.bf16 %v624, %v613
  %v900 = vpack.c.bf16 %v625, %v614
  %v901 = vpack.c.bf16 %v626, %v615
  %v902 = vpack.c.bf16 %v638, %v627
  %v903 = vpack.c.bf16 %v639, %v628
  %v904 = vpack.c.bf16 %v640, %v629
  %v905 = vpack.c.bf16 %v641, %v630
  %v906 = vpack.c.bf16 %v642, %v631
  %v907 = vpack.c.bf16 %v643, %v632
  %v908 = vpack.c.bf16 %v644, %v633
  %v909 = vpack.c.bf16 %v645, %v634
  %v910 = vpack.c.bf16 %v646, %v635
  %v911 = vpack.c.bf16 %v647, %v636
  %v912 = vpack.c.bf16 %v648, %v637
  %v913 = vpack.c.bf16 %v660, %v649
  %v914 = vpack.c.bf16 %v661, %v650
  %v915 = vpack.c.bf16 %v662, %v651
  %v916 = vpack.c.bf16 %v663, %v652
  %v917 = vpack.c.bf16 %v664, %v653
  %v918 = vpack.c.bf16 %v665, %v654
  %v919 = vpack.c.bf16 %v666, %v655
  %v920 = vpack.c.bf16 %v667, %v656
  %v921 = vpack.c.bf16 %v668, %v657
  %v922 = vpack.c.bf16 %v669, %v658
  %v923 = vpack.c.bf16 %v670, %v659
  %v924 = vpack.c.bf16 %v682, %v671
  %v925 = vpack.c.bf16 %v683, %v672
  %v926 = vpack.c.bf16 %v684, %v673
  %v927 = vpack.c.bf16 %v685, %v674
  %v928 = vpack.c.bf16 %v686, %v675
  %v929 = vpack.c.bf16 %v687, %v676
  %v930 = vpack.c.bf16 %v688, %v677
  %v931 = vpack.c.bf16 %v689, %v678
  %v932 = vpack.c.bf16 %v690, %v679
  %v933 = vpack.c.bf16 %v691, %v680
  %v934 = vpack.c.bf16 %v692, %v681
  %v935 = vpack.c.bf16 %v704, %v693
  %v936 = vpack.c.bf16 %v705, %v694
  %v937 = vpack.c.bf16 %v706, %v695
  %v938 = vpack.c.bf16 %v707, %v696
  %v939 = vpack.c.bf16 %v708, %v697
  %v940 = vpack.c.bf16 %v709, %v698
  %v941 = vpack.c.bf16 %v710, %v699
  %v942 = vpack.c.bf16 %v711, %v700
  %v943 = vpack.c.bf16 %v712, %v701
  %v944 = vpack.c.bf16 %v713, %v702
  %v945 = vpack.c.bf16 %v714, %v703
  %v946 = vpack.c.bf16 %v726, %v715
  %v947 = vpack.c.bf16 %v727, %v716
  %v948 = vpack.c.bf16 %v728, %v717
  %v949 = vpack.c.bf16 %v729, %v718
  %v950 = vpack.c.bf16 %v730, %v719
  %v951 = vpack.c.bf16 %v731, %v720
  %v952 = vpack.c.bf16 %v732, %v721
  %v953 = vpack.c.bf16 %v733, %v722
  %v954 = vpack.c.bf16 %v734, %v723
  %v955 = vpack.c.bf16 %v735, %v724
  %v956 = vpack.c.bf16 %v736, %v725
  %v957 = vpack.c.bf16 %v748, %v737
  %v958 = vpack.c.bf16 %v749, %v738
  %v959 = vpack.c.bf16 %v750, %v739
  %v960 = vpack.c.bf16 %v751, %v740
  %v961 = vpack.c.bf16 %v752, %v741
  %v962 = vpack.c.bf16 %v753, %v742
  %v963 = vpack.c.bf16 %v754, %v743
  %v964 = vpack.c.bf16 %v755, %v744
  %v965 = vpack.c.bf16 %v756, %v745
  %v966 = vpack.c.bf16 %v757, %v746
  %v967 = vpack.c.bf16 %v758, %v747
  %v968 = vpack.c.bf16 %v770, %v759
  %v969 = vpack.c.bf16 %v771, %v760
  %v970 = vpack.c.bf16 %v772, %v761
  %v971 = vpack.c.bf16 %v773, %v762
  %v972 = vpack.c.bf16 %v774, %v763
  %v973 = vpack.c.bf16 %v775, %v764
  %v974 = vpack.c.bf16 %v776, %v765
  %v975 = vpack.c.bf16 %v777, %v766
  %v976 = vpack.c.bf16 %v778, %v767
  %v977 = vpack.c.bf16 %v779, %v768
  %v978 = vpack.c.bf16 %v780, %v769
  %v979 = vpack.c.bf16 %v792, %v781
  %v980 = vpack.c.bf16 %v793, %v782
  %v981 = vpack.c.bf16 %v794, %v783
  %v982 = vpack.c.bf16 %v795, %v784
  %v983 = vpack.c.bf16 %v796, %v785
  %v984 = vpack.c.bf16 %v797, %v786
  %v985 = vpack.c.bf16 %v798, %v787
  %v986 = vpack.c.bf16 %v799, %v788
  %v987 = vpack.c.bf16 %v800, %v789
  %v988 = vpack.c.bf16 %v801, %v790
  %v989 = vpack.c.bf16 %v802, %v791
  %v990 = vpack.c.bf16 %v814, %v803
  %v991 = vpack.c.bf16 %v815, %v804
  %v992 = vpack.c.bf16 %v816, %v805
  %v993 = vpack.c.bf16 %v817, %v806
  %v994 = vpack.c.bf16 %v818, %v807
  %v995 = vpack.c.bf16 %v819, %v808
  %v996 = vpack.c.bf16 %v820, %v809
  %v997 = vpack.c.bf16 %v821, %v810
  %v998 = vpack.c.bf16 %v822, %v811
  %v999 = vpack.c.bf16 %v823, %v812
  %v1000 = vpack.c.bf16 %v824, %v813
  %v1001 = vpack.c.bf16 %v836, %v825
  %v1002 = vpack.c.bf16 %v837, %v826
  %v1003 = vpack.c.bf16 %v838, %v827
  %v1004 = vpack.c.bf16 %v839, %v828
  %v1005 = vpack.c.bf16 %v840, %v829
  %v1006 = vpack.c.bf16 %v841, %v830
  %v1007 = vpack.c.bf16 %v842, %v831
  %v1008 = vpack.c.bf16 %v843, %v832
  %v1009 = vpack.c.bf16 %v844, %v833
  %v1010 = vpack.c.bf16 %v845, %v834
  %v1011 = vpack.c.bf16 %v846, %v835
  %v1012 = vpack.c.bf16 %v858, %v847
  %v1013 = vpack.c.bf16 %v859, %v848
  %v1014 = vpack.c.bf16 %v860, %v849
  %v1015 = vpack.c.bf16 %v861, %v850
  %v1016 = vpack.c.bf16 %v862, %v851
  %v1017 = vpack.c.bf16 %v863, %v852
  %v1018 = vpack.c.bf16 %v864, %v853
  %v1019 = vpack.c.bf16 %v865, %v854
  %v1020 = vpack.c.bf16 %v866, %v855
  %v1021 = vpack.c.bf16 %v867, %v856
  %v1022 = vpack.c.bf16 %v868, %v857
  %v1023 = vld [vmem:[%s1] sm:$0xff]
  %v1024 = vld [vmem:[%s1 + $0x8] sm:$0xff]
  %v1025 = vld [vmem:[%s1 + $0x10] sm:$0xff]
  %v1026 = vld [vmem:[%s1 + $0x18] sm:$0xff]
  %v1027 = vld [vmem:[%s1 + $0x20] sm:$0xff]
  %v1028 = vld [vmem:[%s1 + $0x28] sm:$0xff]
  %v1029 = vld [vmem:[%s1 + $0x30] sm:$0xff]
  %v1030 = vld [vmem:[%s1 + $0x38] sm:$0xff]
  %v1031 = vld [vmem:[%s1 + $0x40] sm:$0xff]
  %v1032 = vld [vmem:[%s1 + $0x48] sm:$0xff]
  %v1033 = vld [vmem:[%s1 + $0x50] sm:$0xff]
  %v1034 = vld [vmem:[%s1 + $0x58] sm:$0xff]
  %v1035 = vld [vmem:[%s1 + $0x60] sm:$0xff]
  %v1036 = vld [vmem:[%s1 + $0x68] sm:$0xff]
  %v1037 = vld [vmem:[%s1 + $0x70] sm:$0xff]
  %v1038 = vld [vmem:[%s1 + $0x78] sm:$0xff]
  %v1039 = vld [vmem:[%s1 + $0x80] sm:$0xff]
  %v1040 = vld [vmem:[%s1 + $0x88] sm:$0xff]
  %v1041 = vld [vmem:[%s1 + $0x90] sm:$0xff]
  %v1042 = vld [vmem:[%s1 + $0x98] sm:$0xff]
  %v1043 = vld [vmem:[%s1 + $0xa0] sm:$0xff]
  %v1044 = vld [vmem:[%s1 + $0xa8] sm:$0xff]
  %v1045 = vld [vmem:[%s1 + $0xb0] sm:$0xff]
  %v1046 = vld [vmem:[%s1 + $0xb8] sm:$0xff]
  %v1047 = vld [vmem:[%s1 + $0xc0] sm:$0xff]
  %v1048 = vld [vmem:[%s1 + $0xc8] sm:$0xff]
  %v1049 = vld [vmem:[%s1 + $0xd0] sm:$0xff]
  %v1050 = vld [vmem:[%s1 + $0xd8] sm:$0xff]
  %v1051 = vld [vmem:[%s1 + $0xe0] sm:$0xff]
  %v1052 = vld [vmem:[%s1 + $0xe8] sm:$0xff]
  %v1053 = vld [vmem:[%s1 + $0xf0] sm:$0xff]
  %v1054 = vld [vmem:[%s1 + $0xf8] sm:$0xff]
  %v1055 = vld [vmem:[%s1 + $0x100] sm:$0xff]
  %v1056 = vld [vmem:[%s1 + $0x108] sm:$0xff]
  %v1057 = vld [vmem:[%s1 + $0x110] sm:$0xff]
  %v1058 = vld [vmem:[%s1 + $0x118] sm:$0xff]
  %v1059 = vld [vmem:[%s1 + $0x120] sm:$0xff]
  %v1060 = vld [vmem:[%s1 + $0x128] sm:$0xff]
  %v1061 = vld [vmem:[%s1 + $0x130] sm:$0xff]
  %v1062 = vld [vmem:[%s1 + $0x138] sm:$0xff]
  %v1063 = vld [vmem:[%s1 + $0x140] sm:$0xff]
  %v1064 = vld [vmem:[%s1 + $0x148] sm:$0xff]
  %v1065 = vld [vmem:[%s1 + $0x150] sm:$0xff]
  %v1066 = vld [vmem:[%s1 + $0x158] sm:$0xff]
  %v1067 = vld [vmem:[%s1 + $0x160] sm:$0xff]
  %v1068 = vld [vmem:[%s1 + $0x168] sm:$0xff]
  %v1069 = vld [vmem:[%s1 + $0x170] sm:$0xff]
  %v1070 = vld [vmem:[%s1 + $0x178] sm:$0xff]
  %v1071 = vld [vmem:[%s1 + $0x180] sm:$0xff]
  %v1072 = vld [vmem:[%s1 + $0x188] sm:$0xff]
  %v1073 = vld [vmem:[%s1 + $0x190] sm:$0xff]
  %v1074 = vld [vmem:[%s1 + $0x198] sm:$0xff]
  %v1075 = vld [vmem:[%s1 + $0x1a0] sm:$0xff]
  %v1076 = vld [vmem:[%s1 + $0x1a8] sm:$0xff]
  %v1077 = vld [vmem:[%s1 + $0x1b0] sm:$0xff]
  %v1078 = vld [vmem:[%s1 + $0x1b8] sm:$0xff]
  %v1079 = vld [vmem:[%s1 + $0x1c0] sm:$0xff]
  %v1080 = vld [vmem:[%s1 + $0x1c8] sm:$0xff]
  %v1081 = vld [vmem:[%s1 + $0x1d0] sm:$0xff]
  %v1082 = vld [vmem:[%s1 + $0x1d8] sm:$0xff]
  %v1083 = vld [vmem:[%s1 + $0x1e0] sm:$0xff]
  %v1084 = vld [vmem:[%s1 + $0x1e8] sm:$0xff]
  %v1085 = vld [vmem:[%s1 + $0x1f0] sm:$0xff]
  %v1086 = vld [vmem:[%s1 + $0x1f8] sm:$0xff]
  %v1087 = vld [vmem:[%s1 + $0x200] sm:$0xff]
  %v1088 = vld [vmem:[%s1 + $0x208] sm:$0xff]
  %v1089 = vld [vmem:[%s1 + $0x210] sm:$0xff]
  %v1090 = vld [vmem:[%s1 + $0x218] sm:$0xff]
  %v1091 = vld [vmem:[%s1 + $0x220] sm:$0xff]
  %v1092 = vld [vmem:[%s1 + $0x228] sm:$0xff]
  %v1093 = vld [vmem:[%s1 + $0x230] sm:$0xff]
  %v1094 = vld [vmem:[%s1 + $0x238] sm:$0xff]
  %v1095 = vld [vmem:[%s1 + $0x240] sm:$0xff]
  %v1096 = vld [vmem:[%s1 + $0x248] sm:$0xff]
  %v1097 = vld [vmem:[%s1 + $0x250] sm:$0xff]
  %v1098 = vld [vmem:[%s1 + $0x258] sm:$0xff]
  %v1099 = vld [vmem:[%s1 + $0x260] sm:$0xff]
  %v1100 = vld [vmem:[%s1 + $0x268] sm:$0xff]
  %v1101 = vld [vmem:[%s1 + $0x270] sm:$0xff]
  %v1102 = vld [vmem:[%s1 + $0x278] sm:$0xff]
  %v1103 = vld [vmem:[%s1 + $0x280] sm:$0xff]
  %v1104 = vld [vmem:[%s1 + $0x288] sm:$0xff]
  %v1105 = vld [vmem:[%s1 + $0x290] sm:$0xff]
  %v1106 = vld [vmem:[%s1 + $0x298] sm:$0xff]
  %v1107 = vld [vmem:[%s1 + $0x2a0] sm:$0xff]
  %v1108 = vld [vmem:[%s1 + $0x2a8] sm:$0xff]
  %v1109 = vld [vmem:[%s1 + $0x2b0] sm:$0xff]
  %v1110 = vld [vmem:[%s1 + $0x2b8] sm:$0xff]
  %v1111 = vld [vmem:[%s1 + $0x2c0] sm:$0xff]
  %v1112 = vld [vmem:[%s1 + $0x2c8] sm:$0xff]
  %v1113 = vld [vmem:[%s1 + $0x2d0] sm:$0xff]
  %v1114 = vld [vmem:[%s1 + $0x2d8] sm:$0xff]
  %v1115 = vld [vmem:[%s1 + $0x2e0] sm:$0xff]
  %v1116 = vld [vmem:[%s1 + $0x2e8] sm:$0xff]
  %v1117 = vld [vmem:[%s1 + $0x2f0] sm:$0xff]
  %v1118 = vld [vmem:[%s1 + $0x2f8] sm:$0xff]
  %v1119 = vld [vmem:[%s1 + $0x300] sm:$0xff]
  %v1120 = vld [vmem:[%s1 + $0x308] sm:$0xff]
  %v1121 = vld [vmem:[%s1 + $0x310] sm:$0xff]
  %v1122 = vld [vmem:[%s1 + $0x318] sm:$0xff]
  %v1123 = vld [vmem:[%s1 + $0x320] sm:$0xff]
  %v1124 = vld [vmem:[%s1 + $0x328] sm:$0xff]
  %v1125 = vld [vmem:[%s1 + $0x330] sm:$0xff]
  %v1126 = vld [vmem:[%s1 + $0x338] sm:$0xff]
  %v1127 = vld [vmem:[%s1 + $0x340] sm:$0xff]
  %v1128 = vld [vmem:[%s1 + $0x348] sm:$0xff]
  %v1129 = vld [vmem:[%s1 + $0x350] sm:$0xff]
  %v1130 = vld [vmem:[%s1 + $0x358] sm:$0xff]
  %v1131 = vld [vmem:[%s1 + $0x360] sm:$0xff]
  %v1132 = vld [vmem:[%s1 + $0x368] sm:$0xff]
  %v1133 = vld [vmem:[%s1 + $0x370] sm:$0xff]
  %v1134 = vld [vmem:[%s1 + $0x378] sm:$0xff]
  %v1135 = vld [vmem:[%s1 + $0x380] sm:$0xff]
  %v1136 = vld [vmem:[%s1 + $0x388] sm:$0xff]
  %v1137 = vld [vmem:[%s1 + $0x390] sm:$0xff]
  %v1138 = vld [vmem:[%s1 + $0x398] sm:$0xff]
  %v1139 = vld [vmem:[%s1 + $0x3a0] sm:$0xff]
  %v1140 = vld [vmem:[%s1 + $0x3a8] sm:$0xff]
  %v1141 = vld [vmem:[%s1 + $0x3b0] sm:$0xff]
  %v1142 = vld [vmem:[%s1 + $0x3b8] sm:$0xff]
  %v1143 = vld [vmem:[%s1 + $0x3c0] sm:$0xff]
  %v1144 = vld [vmem:[%s1 + $0x3c8] sm:$0xff]
  %v1145 = vld [vmem:[%s1 + $0x3d0] sm:$0xff]
  %v1146 = vld [vmem:[%s1 + $0x3d8] sm:$0xff]
  %v1147 = vld [vmem:[%s1 + $0x3e0] sm:$0xff]
  %v1148 = vld [vmem:[%s1 + $0x3e8] sm:$0xff]
  %v1149 = vld [vmem:[%s1 + $0x3f0] sm:$0xff]
  %v1150 = vld [vmem:[%s1 + $0x3f8] sm:$0xff]
  %v1151 = vld [vmem:[%s1 + $0x400] sm:$0xff]
  %v1152 = vld [vmem:[%s1 + $0x408] sm:$0xff]
  %v1153 = vld [vmem:[%s1 + $0x410] sm:$0xff]
  %v1154 = vld [vmem:[%s1 + $0x418] sm:$0xff]
  %v1155 = vld [vmem:[%s1 + $0x420] sm:$0xff]
  %v1156 = vld [vmem:[%s1 + $0x428] sm:$0xff]
  %v1157 = vld [vmem:[%s1 + $0x430] sm:$0xff]
  %v1158 = vld [vmem:[%s1 + $0x438] sm:$0xff]
  %v1159 = vld [vmem:[%s1 + $0x440] sm:$0xff]
  %v1160 = vld [vmem:[%s1 + $0x448] sm:$0xff]
  %v1161 = vld [vmem:[%s1 + $0x450] sm:$0xff]
  %v1162 = vld [vmem:[%s1 + $0x458] sm:$0xff]
  %v1163 = vld [vmem:[%s1 + $0x460] sm:$0xff]
  %v1164 = vld [vmem:[%s1 + $0x468] sm:$0xff]
  %v1165 = vld [vmem:[%s1 + $0x470] sm:$0xff]
  %v1166 = vld [vmem:[%s1 + $0x478] sm:$0xff]
  %v1167 = vld [vmem:[%s1 + $0x480] sm:$0xff]
  %v1168 = vld [vmem:[%s1 + $0x488] sm:$0xff]
  %v1169 = vld [vmem:[%s1 + $0x490] sm:$0xff]
  %v1170 = vld [vmem:[%s1 + $0x498] sm:$0xff]
  %v1171 = vld [vmem:[%s1 + $0x4a0] sm:$0xff]
  %v1172 = vld [vmem:[%s1 + $0x4a8] sm:$0xff]
  %v1173 = vld [vmem:[%s1 + $0x4b0] sm:$0xff]
  %v1174 = vld [vmem:[%s1 + $0x4b8] sm:$0xff]
  %v1175 = vld [vmem:[%s1 + $0x4c0] sm:$0xff]
  %v1176 = vld [vmem:[%s1 + $0x4c8] sm:$0xff]
  %v1177 = vld [vmem:[%s1 + $0x4d0] sm:$0xff]
  %v1178 = vld [vmem:[%s1 + $0x4d8] sm:$0xff]
  %v1179 = vld [vmem:[%s1 + $0x4e0] sm:$0xff]
  %v1180 = vld [vmem:[%s1 + $0x4e8] sm:$0xff]
  %v1181 = vld [vmem:[%s1 + $0x4f0] sm:$0xff]
  %v1182 = vld [vmem:[%s1 + $0x4f8] sm:$0xff]
  %v1183 = vld [vmem:[%s1 + $0x500] sm:$0xff]
  %v1184 = vld [vmem:[%s1 + $0x508] sm:$0xff]
  %v1185 = vld [vmem:[%s1 + $0x510] sm:$0xff]
  %v1186 = vld [vmem:[%s1 + $0x518] sm:$0xff]
  %v1187 = vld [vmem:[%s1 + $0x520] sm:$0xff]
  %v1188 = vld [vmem:[%s1 + $0x528] sm:$0xff]
  %v1189 = vld [vmem:[%s1 + $0x530] sm:$0xff]
  %v1190 = vld [vmem:[%s1 + $0x538] sm:$0xff]
  %v1191 = vld [vmem:[%s1 + $0x540] sm:$0xff]
  %v1192 = vld [vmem:[%s1 + $0x548] sm:$0xff]
  %v1193 = vld [vmem:[%s1 + $0x550] sm:$0xff]
  %v1194 = vld [vmem:[%s1 + $0x558] sm:$0xff]
  %v1195 = vld [vmem:[%s1 + $0x560] sm:$0xff]
  %v1196 = vld [vmem:[%s1 + $0x568] sm:$0xff]
  %v1197 = vld [vmem:[%s1 + $0x570] sm:$0xff]
  %v1198 = vld [vmem:[%s1 + $0x578] sm:$0xff]
  %v1199 = vld [vmem:[%s1 + $0x580] sm:$0xff]
  %v1200 = vld [vmem:[%s1 + $0x588] sm:$0xff]
  %v1201 = vld [vmem:[%s1 + $0x590] sm:$0xff]
  %v1202 = vld [vmem:[%s1 + $0x598] sm:$0xff]
  %v1203 = vld [vmem:[%s1 + $0x5a0] sm:$0xff]
  %v1204 = vld [vmem:[%s1 + $0x5a8] sm:$0xff]
  %v1205 = vld [vmem:[%s1 + $0x5b0] sm:$0xff]
  %v1206 = vld [vmem:[%s1 + $0x5b8] sm:$0xff]
  %v1207 = vld [vmem:[%s1 + $0x5c0] sm:$0xff]
  %v1208 = vld [vmem:[%s1 + $0x5c8] sm:$0xff]
  %v1209 = vld [vmem:[%s1 + $0x5d0] sm:$0xff]
  %v1210 = vld [vmem:[%s1 + $0x5d8] sm:$0xff]
  %v1211 = vld [vmem:[%s1 + $0x5e0] sm:$0xff]
  %v1212 = vld [vmem:[%s1 + $0x5e8] sm:$0xff]
  %v1213 = vld [vmem:[%s1 + $0x5f0] sm:$0xff]
  %v1214 = vld [vmem:[%s1 + $0x5f8] sm:$0xff]
  %v1215 = vld [vmem:[%s1 + $0x600] sm:$0xff]
  %v1216 = vld [vmem:[%s1 + $0x608] sm:$0xff]
  %v1217 = vld [vmem:[%s1 + $0x610] sm:$0xff]
  %v1218 = vld [vmem:[%s1 + $0x618] sm:$0xff]
  %v1219 = vld [vmem:[%s1 + $0x620] sm:$0xff]
  %v1220 = vld [vmem:[%s1 + $0x628] sm:$0xff]
  %v1221 = vld [vmem:[%s1 + $0x630] sm:$0xff]
  %v1222 = vld [vmem:[%s1 + $0x638] sm:$0xff]
  %v1223 = vld [vmem:[%s1 + $0x640] sm:$0xff]
  %v1224 = vld [vmem:[%s1 + $0x648] sm:$0xff]
  %v1225 = vld [vmem:[%s1 + $0x650] sm:$0xff]
  %v1226 = vld [vmem:[%s1 + $0x658] sm:$0xff]
  %v1227 = vld [vmem:[%s1 + $0x660] sm:$0xff]
  %v1228 = vld [vmem:[%s1 + $0x668] sm:$0xff]
  %v1229 = vld [vmem:[%s1 + $0x670] sm:$0xff]
  %v1230 = vld [vmem:[%s1 + $0x678] sm:$0xff]
  %v1231 = vld [vmem:[%s1 + $0x680] sm:$0xff]
  %v1232 = vld [vmem:[%s1 + $0x688] sm:$0xff]
  %v1233 = vld [vmem:[%s1 + $0x690] sm:$0xff]
  %v1234 = vld [vmem:[%s1 + $0x698] sm:$0xff]
  %v1235 = vld [vmem:[%s1 + $0x6a0] sm:$0xff]
  %v1236 = vld [vmem:[%s1 + $0x6a8] sm:$0xff]
  %v1237 = vld [vmem:[%s1 + $0x6b0] sm:$0xff]
  %v1238 = vld [vmem:[%s1 + $0x6b8] sm:$0xff]
  %v1239 = vld [vmem:[%s1 + $0x6c0] sm:$0xff]
  %v1240 = vld [vmem:[%s1 + $0x6c8] sm:$0xff]
  %v1241 = vld [vmem:[%s1 + $0x6d0] sm:$0xff]
  %v1242 = vld [vmem:[%s1 + $0x6d8] sm:$0xff]
  %v1243 = vld [vmem:[%s1 + $0x6e0] sm:$0xff]
  %v1244 = vld [vmem:[%s1 + $0x6e8] sm:$0xff]
  %v1245 = vld [vmem:[%s1 + $0x6f0] sm:$0xff]
  %v1246 = vld [vmem:[%s1 + $0x6f8] sm:$0xff]
  %v1247 = vld [vmem:[%s1 + $0x700] sm:$0xff]
  %v1248 = vld [vmem:[%s1 + $0x708] sm:$0xff]
  %v1249 = vld [vmem:[%s1 + $0x710] sm:$0xff]
  %v1250 = vld [vmem:[%s1 + $0x718] sm:$0xff]
  %v1251 = vld [vmem:[%s1 + $0x720] sm:$0xff]
  %v1252 = vld [vmem:[%s1 + $0x728] sm:$0xff]
  %v1253 = vld [vmem:[%s1 + $0x730] sm:$0xff]
  %v1254 = vld [vmem:[%s1 + $0x738] sm:$0xff]
  %v1255 = vld [vmem:[%s1 + $0x740] sm:$0xff]
  %v1256 = vld [vmem:[%s1 + $0x748] sm:$0xff]
  %v1257 = vld [vmem:[%s1 + $0x750] sm:$0xff]
  %v1258 = vld [vmem:[%s1 + $0x758] sm:$0xff]
  %v1259 = vld [vmem:[%s1 + $0x760] sm:$0xff]
  %v1260 = vld [vmem:[%s1 + $0x768] sm:$0xff]
  %v1261 = vld [vmem:[%s1 + $0x770] sm:$0xff]
  %v1262 = vld [vmem:[%s1 + $0x778] sm:$0xff]
  %v1263 = vld [vmem:[%s1 + $0x780] sm:$0xff]
  %v1264 = vld [vmem:[%s1 + $0x788] sm:$0xff]
  %v1265 = vld [vmem:[%s1 + $0x790] sm:$0xff]
  %v1266 = vld [vmem:[%s1 + $0x798] sm:$0xff]
  %v1267 = vld [vmem:[%s1 + $0x7a0] sm:$0xff]
  %v1268 = vld [vmem:[%s1 + $0x7a8] sm:$0xff]
  %v1269 = vld [vmem:[%s1 + $0x7b0] sm:$0xff]
  %v1270 = vld [vmem:[%s1 + $0x7b8] sm:$0xff]
  %v1271 = vld [vmem:[%s1 + $0x7c0] sm:$0xff]
  %v1272 = vld [vmem:[%s1 + $0x7c8] sm:$0xff]
  %v1273 = vld [vmem:[%s1 + $0x7d0] sm:$0xff]
  %v1274 = vld [vmem:[%s1 + $0x7d8] sm:$0xff]
  %v1275 = vld [vmem:[%s1 + $0x7e0] sm:$0xff]
  %v1276 = vld [vmem:[%s1 + $0x7e8] sm:$0xff]
  %v1277 = vld [vmem:[%s1 + $0x7f0] sm:$0xff]
  %v1278 = vld [vmem:[%s1 + $0x7f8] sm:$0xff]
  %v1279 = vld [vmem:[%s1 + $0x800] sm:$0xff]
  %v1280 = vld [vmem:[%s1 + $0x808] sm:$0xff]
  %v1281 = vld [vmem:[%s1 + $0x810] sm:$0xff]
  %v1282 = vld [vmem:[%s1 + $0x818] sm:$0xff]
  %v1283 = vld [vmem:[%s1 + $0x820] sm:$0xff]
  %v1284 = vld [vmem:[%s1 + $0x828] sm:$0xff]
  %v1285 = vld [vmem:[%s1 + $0x830] sm:$0xff]
  %v1286 = vld [vmem:[%s1 + $0x838] sm:$0xff]
  %v1287 = vld [vmem:[%s1 + $0x840] sm:$0xff]
  %v1288 = vld [vmem:[%s1 + $0x848] sm:$0xff]
  %v1289 = vld [vmem:[%s1 + $0x850] sm:$0xff]
  %v1290 = vld [vmem:[%s1 + $0x858] sm:$0xff]
  %v1291 = vld [vmem:[%s1 + $0x860] sm:$0xff]
  %v1292 = vld [vmem:[%s1 + $0x868] sm:$0xff]
  %v1293 = vld [vmem:[%s1 + $0x870] sm:$0xff]
  %v1294 = vld [vmem:[%s1 + $0x878] sm:$0xff]
  %v1295 = vld [vmem:[%s1 + $0x880] sm:$0xff]
  %v1296 = vld [vmem:[%s1 + $0x888] sm:$0xff]
  %v1297 = vld [vmem:[%s1 + $0x890] sm:$0xff]
  %v1298 = vld [vmem:[%s1 + $0x898] sm:$0xff]
  %v1299 = vld [vmem:[%s1 + $0x8a0] sm:$0xff]
  %v1300 = vld [vmem:[%s1 + $0x8a8] sm:$0xff]
  %v1301 = vld [vmem:[%s1 + $0x8b0] sm:$0xff]
  %v1302 = vld [vmem:[%s1 + $0x8b8] sm:$0xff]
  %v1303 = vld [vmem:[%s1 + $0x8c0] sm:$0xff]
  %v1304 = vld [vmem:[%s1 + $0x8c8] sm:$0xff]
  %v1305 = vld [vmem:[%s1 + $0x8d0] sm:$0xff]
  %v1306 = vld [vmem:[%s1 + $0x8d8] sm:$0xff]
  %v1307 = vld [vmem:[%s1 + $0x8e0] sm:$0xff]
  %v1308 = vld [vmem:[%s1 + $0x8e8] sm:$0xff]
  %v1309 = vld [vmem:[%s1 + $0x8f0] sm:$0xff]
  %v1310 = vld [vmem:[%s1 + $0x8f8] sm:$0xff]
  %v1311 = vld [vmem:[%s1 + $0x900] sm:$0xff]
  %v1312 = vld [vmem:[%s1 + $0x908] sm:$0xff]
  %v1313 = vld [vmem:[%s1 + $0x910] sm:$0xff]
  %v1314 = vld [vmem:[%s1 + $0x918] sm:$0xff]
  %v1315 = vld [vmem:[%s1 + $0x920] sm:$0xff]
  %v1316 = vld [vmem:[%s1 + $0x928] sm:$0xff]
  %v1317 = vld [vmem:[%s1 + $0x930] sm:$0xff]
  %v1318 = vld [vmem:[%s1 + $0x938] sm:$0xff]
  %v1319 = vld [vmem:[%s1 + $0x940] sm:$0xff]
  %v1320 = vld [vmem:[%s1 + $0x948] sm:$0xff]
  %v1321 = vld [vmem:[%s1 + $0x950] sm:$0xff]
  %v1322 = vld [vmem:[%s1 + $0x958] sm:$0xff]
  %v1323 = vld [vmem:[%s1 + $0x960] sm:$0xff]
  %v1324 = vld [vmem:[%s1 + $0x968] sm:$0xff]
  %v1325 = vld [vmem:[%s1 + $0x970] sm:$0xff]
  %v1326 = vld [vmem:[%s1 + $0x978] sm:$0xff]
  %v1327 = vld [vmem:[%s1 + $0x980] sm:$0xff]
  %v1328 = vld [vmem:[%s1 + $0x988] sm:$0xff]
  %v1329 = vld [vmem:[%s1 + $0x990] sm:$0xff]
  %v1330 = vld [vmem:[%s1 + $0x998] sm:$0xff]
  %v1331 = vld [vmem:[%s1 + $0x9a0] sm:$0xff]
  %v1332 = vld [vmem:[%s1 + $0x9a8] sm:$0xff]
  %v1333 = vld [vmem:[%s1 + $0x9b0] sm:$0xff]
  %v1334 = vld [vmem:[%s1 + $0x9b8] sm:$0xff]
  %v1335 = vld [vmem:[%s1 + $0x9c0] sm:$0xff]
  %v1336 = vld [vmem:[%s1 + $0x9c8] sm:$0xff]
  %v1337 = vld [vmem:[%s1 + $0x9d0] sm:$0xff]
  %v1338 = vld [vmem:[%s1 + $0x9d8] sm:$0xff]
  %v1339 = vld [vmem:[%s1 + $0x9e0] sm:$0xff]
  %v1340 = vld [vmem:[%s1 + $0x9e8] sm:$0xff]
  %v1341 = vld [vmem:[%s1 + $0x9f0] sm:$0xff]
  %v1342 = vld [vmem:[%s1 + $0x9f8] sm:$0xff]
  %v1343 = vld [vmem:[%s1 + $0xa00] sm:$0xff]
  %v1344 = vld [vmem:[%s1 + $0xa08] sm:$0xff]
  %v1345 = vld [vmem:[%s1 + $0xa10] sm:$0xff]
  %v1346 = vld [vmem:[%s1 + $0xa18] sm:$0xff]
  %v1347 = vld [vmem:[%s1 + $0xa20] sm:$0xff]
  %v1348 = vld [vmem:[%s1 + $0xa28] sm:$0xff]
  %v1349 = vld [vmem:[%s1 + $0xa30] sm:$0xff]
  %v1350 = vld [vmem:[%s1 + $0xa38] sm:$0xff]
  %v1351 = vld [vmem:[%s1 + $0xa40] sm:$0xff]
  %v1352 = vld [vmem:[%s1 + $0xa48] sm:$0xff]
  %v1353 = vld [vmem:[%s1 + $0xa50] sm:$0xff]
  %v1354 = vld [vmem:[%s1 + $0xa58] sm:$0xff]
  %v1355 = vld [vmem:[%s1 + $0xa60] sm:$0xff]
  %v1356 = vld [vmem:[%s1 + $0xa68] sm:$0xff]
  %v1357 = vld [vmem:[%s1 + $0xa70] sm:$0xff]
  %v1358 = vld [vmem:[%s1 + $0xa78] sm:$0xff]
  %v1359 = vpack.c.bf16 %v1025, %v1023
  %v1360 = vpack.c.bf16 %v1026, %v1024
  %v1361 = vpack.c.bf16 %v1029, %v1027
  %v1362 = vpack.c.bf16 %v1030, %v1028
  %v1363 = vpack.c.bf16 %v1033, %v1031
  %v1364 = vpack.c.bf16 %v1034, %v1032
  %v1365 = vpack.c.bf16 %v1037, %v1035
  %v1366 = vpack.c.bf16 %v1038, %v1036
  %v1367 = vpack.c.bf16 %v1041, %v1039
  %v1368 = vpack.c.bf16 %v1042, %v1040
  %v1369 = vpack.c.bf16 %v1045, %v1043
  %v1370 = vpack.c.bf16 %v1046, %v1044
  %v1371 = vpack.c.bf16 %v1049, %v1047
  %v1372 = vpack.c.bf16 %v1050, %v1048
  %v1373 = vpack.c.bf16 %v1053, %v1051
  %v1374 = vpack.c.bf16 %v1054, %v1052
  %v1375 = vpack.c.bf16 %v1057, %v1055
  %v1376 = vpack.c.bf16 %v1058, %v1056
  %v1377 = vpack.c.bf16 %v1061, %v1059
  %v1378 = vpack.c.bf16 %v1062, %v1060
  %v1379 = vpack.c.bf16 %v1065, %v1063
  %v1380 = vpack.c.bf16 %v1066, %v1064
  %v1381 = vpack.c.bf16 %v1069, %v1067
  %v1382 = vpack.c.bf16 %v1070, %v1068
  %v1383 = vpack.c.bf16 %v1073, %v1071
  %v1384 = vpack.c.bf16 %v1074, %v1072
  %v1385 = vpack.c.bf16 %v1077, %v1075
  %v1386 = vpack.c.bf16 %v1078, %v1076
  %v1387 = vpack.c.bf16 %v1081, %v1079
  %v1388 = vpack.c.bf16 %v1082, %v1080
  %v1389 = vpack.c.bf16 %v1085, %v1083
  %v1390 = vpack.c.bf16 %v1086, %v1084
  %v1391 = vpack.c.bf16 %v1089, %v1087
  %v1392 = vpack.c.bf16 %v1090, %v1088
  %v1393 = vpack.c.bf16 %v1093, %v1091
  %v1394 = vpack.c.bf16 %v1094, %v1092
  %v1395 = vpack.c.bf16 %v1097, %v1095
  %v1396 = vpack.c.bf16 %v1098, %v1096
  %v1397 = vpack.c.bf16 %v1101, %v1099
  %v1398 = vpack.c.bf16 %v1102, %v1100
  %v1399 = vpack.c.bf16 %v1105, %v1103
  %v1400 = vpack.c.bf16 %v1106, %v1104
  %v1401 = vpack.c.bf16 %v1109, %v1107
  %v1402 = vpack.c.bf16 %v1110, %v1108
  %v1403 = vpack.c.bf16 %v1113, %v1111
  %v1404 = vpack.c.bf16 %v1114, %v1112
  %v1405 = vpack.c.bf16 %v1117, %v1115
  %v1406 = vpack.c.bf16 %v1118, %v1116
  %v1407 = vpack.c.bf16 %v1121, %v1119
  %v1408 = vpack.c.bf16 %v1122, %v1120
  %v1409 = vpack.c.bf16 %v1125, %v1123
  %v1410 = vpack.c.bf16 %v1126, %v1124
  %v1411 = vpack.c.bf16 %v1129, %v1127
  %v1412 = vpack.c.bf16 %v1130, %v1128
  %v1413 = vpack.c.bf16 %v1133, %v1131
  %v1414 = vpack.c.bf16 %v1134, %v1132
  %v1415 = vpack.c.bf16 %v1137, %v1135
  %v1416 = vpack.c.bf16 %v1138, %v1136
  %v1417 = vpack.c.bf16 %v1141, %v1139
  %v1418 = vpack.c.bf16 %v1142, %v1140
  %v1419 = vpack.c.bf16 %v1145, %v1143
  %v1420 = vpack.c.bf16 %v1146, %v1144
  %v1421 = vpack.c.bf16 %v1149, %v1147
  %v1422 = vpack.c.bf16 %v1150, %v1148
  %v1423 = vpack.c.bf16 %v1153, %v1151
  %v1424 = vpack.c.bf16 %v1154, %v1152
  %v1425 = vpack.c.bf16 %v1157, %v1155
  %v1426 = vpack.c.bf16 %v1158, %v1156
  %v1427 = vpack.c.bf16 %v1161, %v1159
  %v1428 = vpack.c.bf16 %v1162, %v1160
  %v1429 = vpack.c.bf16 %v1165, %v1163
  %v1430 = vpack.c.bf16 %v1166, %v1164
  %v1431 = vpack.c.bf16 %v1169, %v1167
  %v1432 = vpack.c.bf16 %v1170, %v1168
  %v1433 = vpack.c.bf16 %v1173, %v1171
  %v1434 = vpack.c.bf16 %v1174, %v1172
  %v1435 = vpack.c.bf16 %v1177, %v1175
  %v1436 = vpack.c.bf16 %v1178, %v1176
  %v1437 = vpack.c.bf16 %v1181, %v1179
  %v1438 = vpack.c.bf16 %v1182, %v1180
  %v1439 = vpack.c.bf16 %v1185, %v1183
  %v1440 = vpack.c.bf16 %v1186, %v1184
  %v1441 = vpack.c.bf16 %v1189, %v1187
  %v1442 = vpack.c.bf16 %v1190, %v1188
  %v1443 = vpack.c.bf16 %v1193, %v1191
  %v1444 = vpack.c.bf16 %v1194, %v1192
  %v1445 = vpack.c.bf16 %v1197, %v1195
  %v1446 = vpack.c.bf16 %v1198, %v1196
  %v1447 = vpack.c.bf16 %v1201, %v1199
  %v1448 = vpack.c.bf16 %v1202, %v1200
  %v1449 = vpack.c.bf16 %v1205, %v1203
  %v1450 = vpack.c.bf16 %v1206, %v1204
  %v1451 = vpack.c.bf16 %v1209, %v1207
  %v1452 = vpack.c.bf16 %v1210, %v1208
  %v1453 = vpack.c.bf16 %v1213, %v1211
  %v1454 = vpack.c.bf16 %v1214, %v1212
  %v1455 = vpack.c.bf16 %v1217, %v1215
  %v1456 = vpack.c.bf16 %v1218, %v1216
  %v1457 = vpack.c.bf16 %v1221, %v1219
  %v1458 = vpack.c.bf16 %v1222, %v1220
  %v1459 = vpack.c.bf16 %v1225, %v1223
  %v1460 = vpack.c.bf16 %v1226, %v1224
  %v1461 = vpack.c.bf16 %v1229, %v1227
  %v1462 = vpack.c.bf16 %v1230, %v1228
  %v1463 = vpack.c.bf16 %v1233, %v1231
  %v1464 = vpack.c.bf16 %v1234, %v1232
  %v1465 = vpack.c.bf16 %v1237, %v1235
  %v1466 = vpack.c.bf16 %v1238, %v1236
  %v1467 = vpack.c.bf16 %v1241, %v1239
  %v1468 = vpack.c.bf16 %v1242, %v1240
  %v1469 = vpack.c.bf16 %v1245, %v1243
  %v1470 = vpack.c.bf16 %v1246, %v1244
  %v1471 = vpack.c.bf16 %v1249, %v1247
  %v1472 = vpack.c.bf16 %v1250, %v1248
  %v1473 = vpack.c.bf16 %v1253, %v1251
  %v1474 = vpack.c.bf16 %v1254, %v1252
  %v1475 = vpack.c.bf16 %v1257, %v1255
  %v1476 = vpack.c.bf16 %v1258, %v1256
  %v1477 = vpack.c.bf16 %v1261, %v1259
  %v1478 = vpack.c.bf16 %v1262, %v1260
  %v1479 = vpack.c.bf16 %v1265, %v1263
  %v1480 = vpack.c.bf16 %v1266, %v1264
  %v1481 = vpack.c.bf16 %v1269, %v1267
  %v1482 = vpack.c.bf16 %v1270, %v1268
  %v1483 = vpack.c.bf16 %v1273, %v1271
  %v1484 = vpack.c.bf16 %v1274, %v1272
  %v1485 = vpack.c.bf16 %v1277, %v1275
  %v1486 = vpack.c.bf16 %v1278, %v1276
  %v1487 = vpack.c.bf16 %v1281, %v1279
  %v1488 = vpack.c.bf16 %v1282, %v1280
  %v1489 = vpack.c.bf16 %v1285, %v1283
  %v1490 = vpack.c.bf16 %v1286, %v1284
  %v1491 = vpack.c.bf16 %v1289, %v1287
  %v1492 = vpack.c.bf16 %v1290, %v1288
  %v1493 = vpack.c.bf16 %v1293, %v1291
  %v1494 = vpack.c.bf16 %v1294, %v1292
  %v1495 = vpack.c.bf16 %v1297, %v1295
  %v1496 = vpack.c.bf16 %v1298, %v1296
  %v1497 = vpack.c.bf16 %v1301, %v1299
  %v1498 = vpack.c.bf16 %v1302, %v1300
  %v1499 = vpack.c.bf16 %v1305, %v1303
  %v1500 = vpack.c.bf16 %v1306, %v1304
  %v1501 = vpack.c.bf16 %v1309, %v1307
  %v1502 = vpack.c.bf16 %v1310, %v1308
  %v1503 = vpack.c.bf16 %v1313, %v1311
  %v1504 = vpack.c.bf16 %v1314, %v1312
  %v1505 = vpack.c.bf16 %v1317, %v1315
  %v1506 = vpack.c.bf16 %v1318, %v1316
  %v1507 = vpack.c.bf16 %v1321, %v1319
  %v1508 = vpack.c.bf16 %v1322, %v1320
  %v1509 = vpack.c.bf16 %v1325, %v1323
  %v1510 = vpack.c.bf16 %v1326, %v1324
  %v1511 = vpack.c.bf16 %v1329, %v1327
  %v1512 = vpack.c.bf16 %v1330, %v1328
  %v1513 = vpack.c.bf16 %v1333, %v1331
  %v1514 = vpack.c.bf16 %v1334, %v1332
  %v1515 = vpack.c.bf16 %v1337, %v1335
  %v1516 = vpack.c.bf16 %v1338, %v1336
  %v1517 = vpack.c.bf16 %v1341, %v1339
  %v1518 = vpack.c.bf16 %v1342, %v1340
  %v1519 = vpack.c.bf16 %v1345, %v1343
  %v1520 = vpack.c.bf16 %v1346, %v1344
  %v1521 = vpack.c.bf16 %v1349, %v1347
  %v1522 = vpack.c.bf16 %v1350, %v1348
  %v1523 = vpack.c.bf16 %v1353, %v1351
  %v1524 = vpack.c.bf16 %v1354, %v1352
  %v1525 = vpack.c.bf16 %v1357, %v1355
  %v1526 = vpack.c.bf16 %v1358, %v1356
  %vm1527 = vcmask 523264
  %v1529 = vsel %vm1527, %v879, 0
  %v1532 = vsel %vm1527, %v890, 0
  %v1535 = vsel %vm1527, %v901, 0
  %v1538 = vsel %vm1527, %v912, 0
  %v1541 = vsel %vm1527, %v923, 0
  %v1544 = vsel %vm1527, %v934, 0
  %v1547 = vsel %vm1527, %v945, 0
  %v1550 = vsel %vm1527, %v956, 0
  %v1553 = vsel %vm1527, %v967, 0
  %v1556 = vsel %vm1527, %v978, 0
  %v1559 = vsel %vm1527, %v989, 0
  %v1562 = vsel %vm1527, %v1000, 0
  %v1565 = vsel %vm1527, %v1011, 0
  %v1568 = vsel %vm1527, %v1022, 0
  %1570 = vmatpush.bf16.msra.mxu0 %v1373
  %1571 = vmatpush.bf16.msra.mxu0 %v1371
  %1572 = vmatpush.bf16.msra.mxu0 %v1369
  %1573 = vmatpush.bf16.msra.mxu0 %v1367
  %1574 = vmatpush.bf16.msra.mxu0 %v1365
  %1575 = vmatpush.bf16.msra.mxu0 %v1363
  %1576 = vmatpush.bf16.msra.mxu0 %v1361
  %1577 = vmatpush.bf16.msra.mxu0 %v1359
  %1578 = vmatmul.bf16.gmra.mxu0 %v869
  %v1579 = vpop.f32.mrf.mxu0
  %v1580 = vadd.f32 0.0, %v1579
  %v1581 = vpop.f32.mrf.mxu0
  %v1582 = vadd.f32 0.0, %v1581
  %1583 = vmatmul.bf16.gmra.mxu0 %v880
  %v1584 = vpop.f32.mrf.mxu0
  %v1585 = vadd.f32 0.0, %v1584
  %v1586 = vpop.f32.mrf.mxu0
  %v1587 = vadd.f32 0.0, %v1586
  %1588 = vmatmul.bf16.gmra.mxu0 %v891
  %v1589 = vpop.f32.mrf.mxu0
  %v1590 = vadd.f32 0.0, %v1589
  %v1591 = vpop.f32.mrf.mxu0
  %v1592 = vadd.f32 0.0, %v1591
  %1593 = vmatmul.bf16.gmra.mxu0 %v902
  %v1594 = vpop.f32.mrf.mxu0
  %v1595 = vadd.f32 0.0, %v1594
  %v1596 = vpop.f32.mrf.mxu0
  %v1597 = vadd.f32 0.0, %v1596
  %1598 = vmatmul.bf16.gmra.mxu0 %v913
  %v1599 = vpop.f32.mrf.mxu0
  %v1600 = vadd.f32 0.0, %v1599
  %v1601 = vpop.f32.mrf.mxu0
  %v1602 = vadd.f32 0.0, %v1601
  %1603 = vmatmul.bf16.gmra.mxu0 %v924
  %v1604 = vpop.f32.mrf.mxu0
  %v1605 = vadd.f32 0.0, %v1604
  %v1606 = vpop.f32.mrf.mxu0
  %v1607 = vadd.f32 0.0, %v1606
  %1608 = vmatmul.bf16.gmra.mxu0 %v935
  %v1609 = vpop.f32.mrf.mxu0
  %v1610 = vadd.f32 0.0, %v1609
  %v1611 = vpop.f32.mrf.mxu0
  %v1612 = vadd.f32 0.0, %v1611
  %1613 = vmatmul.bf16.gmra.mxu0 %v946
  %v1614 = vpop.f32.mrf.mxu0
  %v1615 = vadd.f32 0.0, %v1614
  %v1616 = vpop.f32.mrf.mxu0
  %v1617 = vadd.f32 0.0, %v1616
  %1618 = vmatmul.bf16.gmra.mxu0 %v957
  %v1619 = vpop.f32.mrf.mxu0
  %v1620 = vadd.f32 0.0, %v1619
  %v1621 = vpop.f32.mrf.mxu0
  %v1622 = vadd.f32 0.0, %v1621
  %1623 = vmatmul.bf16.gmra.mxu0 %v968
  %v1624 = vpop.f32.mrf.mxu0
  %v1625 = vadd.f32 0.0, %v1624
  %v1626 = vpop.f32.mrf.mxu0
  %v1627 = vadd.f32 0.0, %v1626
  %1628 = vmatmul.bf16.gmra.mxu0 %v979
  %v1629 = vpop.f32.mrf.mxu0
  %v1630 = vadd.f32 0.0, %v1629
  %v1631 = vpop.f32.mrf.mxu0
  %v1632 = vadd.f32 0.0, %v1631
  %1633 = vmatmul.bf16.gmra.mxu0 %v990
  %v1634 = vpop.f32.mrf.mxu0
  %v1635 = vadd.f32 0.0, %v1634
  %v1636 = vpop.f32.mrf.mxu0
  %v1637 = vadd.f32 0.0, %v1636
  %1638 = vmatmul.bf16.gmra.mxu0 %v1001
  %v1639 = vpop.f32.mrf.mxu0
  %v1640 = vadd.f32 0.0, %v1639
  %v1641 = vpop.f32.mrf.mxu0
  %v1642 = vadd.f32 0.0, %v1641
  %1643 = vmatmul.bf16.gmra.mxu0 %v1012
  %v1644 = vpop.f32.mrf.mxu0
  %v1645 = vadd.f32 0.0, %v1644
  %v1646 = vpop.f32.mrf.mxu0
  %v1647 = vadd.f32 0.0, %v1646
  %1648 = vdwg.mxu0
  %1649 = vmatpush.bf16.msra.mxu0 %v1389
  %1650 = vmatpush.bf16.msra.mxu0 %v1387
  %1651 = vmatpush.bf16.msra.mxu0 %v1385
  %1652 = vmatpush.bf16.msra.mxu0 %v1383
  %1653 = vmatpush.bf16.msra.mxu0 %v1381
  %1654 = vmatpush.bf16.msra.mxu0 %v1379
  %1655 = vmatpush.bf16.msra.mxu0 %v1377
  %1656 = vmatpush.bf16.msra.mxu0 %v1375
  %1657 = vmatmul.bf16.gmra.mxu0 %v870
  %v1658 = vpop.f32.mrf.mxu0
  %v1659 = vadd.f32 %v1580, %v1658
  %v1660 = vpop.f32.mrf.mxu0
  %v1661 = vadd.f32 %v1582, %v1660
  %1662 = vmatmul.bf16.gmra.mxu0 %v881
  %v1663 = vpop.f32.mrf.mxu0
  %v1664 = vadd.f32 %v1585, %v1663
  %v1665 = vpop.f32.mrf.mxu0
  %v1666 = vadd.f32 %v1587, %v1665
  %1667 = vmatmul.bf16.gmra.mxu0 %v892
  %v1668 = vpop.f32.mrf.mxu0
  %v1669 = vadd.f32 %v1590, %v1668
  %v1670 = vpop.f32.mrf.mxu0
  %v1671 = vadd.f32 %v1592, %v1670
  %1672 = vmatmul.bf16.gmra.mxu0 %v903
  %v1673 = vpop.f32.mrf.mxu0
  %v1674 = vadd.f32 %v1595, %v1673
  %v1675 = vpop.f32.mrf.mxu0
  %v1676 = vadd.f32 %v1597, %v1675
  %1677 = vmatmul.bf16.gmra.mxu0 %v914
  %v1678 = vpop.f32.mrf.mxu0
  %v1679 = vadd.f32 %v1600, %v1678
  %v1680 = vpop.f32.mrf.mxu0
  %v1681 = vadd.f32 %v1602, %v1680
  %1682 = vmatmul.bf16.gmra.mxu0 %v925
  %v1683 = vpop.f32.mrf.mxu0
  %v1684 = vadd.f32 %v1605, %v1683
  %v1685 = vpop.f32.mrf.mxu0
  %v1686 = vadd.f32 %v1607, %v1685
  %1687 = vmatmul.bf16.gmra.mxu0 %v936
  %v1688 = vpop.f32.mrf.mxu0
  %v1689 = vadd.f32 %v1610, %v1688
  %v1690 = vpop.f32.mrf.mxu0
  %v1691 = vadd.f32 %v1612, %v1690
  %1692 = vmatmul.bf16.gmra.mxu0 %v947
  %v1693 = vpop.f32.mrf.mxu0
  %v1694 = vadd.f32 %v1615, %v1693
  %v1695 = vpop.f32.mrf.mxu0
  %v1696 = vadd.f32 %v1617, %v1695
  %1697 = vmatmul.bf16.gmra.mxu0 %v958
  %v1698 = vpop.f32.mrf.mxu0
  %v1699 = vadd.f32 %v1620, %v1698
  %v1700 = vpop.f32.mrf.mxu0
  %v1701 = vadd.f32 %v1622, %v1700
  %1702 = vmatmul.bf16.gmra.mxu0 %v969
  %v1703 = vpop.f32.mrf.mxu0
  %v1704 = vadd.f32 %v1625, %v1703
  %v1705 = vpop.f32.mrf.mxu0
  %v1706 = vadd.f32 %v1627, %v1705
  %1707 = vmatmul.bf16.gmra.mxu0 %v980
  %v1708 = vpop.f32.mrf.mxu0
  %v1709 = vadd.f32 %v1630, %v1708
  %v1710 = vpop.f32.mrf.mxu0
  %v1711 = vadd.f32 %v1632, %v1710
  %1712 = vmatmul.bf16.gmra.mxu0 %v991
  %v1713 = vpop.f32.mrf.mxu0
  %v1714 = vadd.f32 %v1635, %v1713
  %v1715 = vpop.f32.mrf.mxu0
  %v1716 = vadd.f32 %v1637, %v1715
  %1717 = vmatmul.bf16.gmra.mxu0 %v1002
  %v1718 = vpop.f32.mrf.mxu0
  %v1719 = vadd.f32 %v1640, %v1718
  %v1720 = vpop.f32.mrf.mxu0
  %v1721 = vadd.f32 %v1642, %v1720
  %1722 = vmatmul.bf16.gmra.mxu0 %v1013
  %v1723 = vpop.f32.mrf.mxu0
  %v1724 = vadd.f32 %v1645, %v1723
  %v1725 = vpop.f32.mrf.mxu0
  %v1726 = vadd.f32 %v1647, %v1725
  %1727 = vdwg.mxu0
  %1728 = vmatpush.bf16.msra.mxu0 %v1405
  %1729 = vmatpush.bf16.msra.mxu0 %v1403
  %1730 = vmatpush.bf16.msra.mxu0 %v1401
  %1731 = vmatpush.bf16.msra.mxu0 %v1399
  %1732 = vmatpush.bf16.msra.mxu0 %v1397
  %1733 = vmatpush.bf16.msra.mxu0 %v1395
  %1734 = vmatpush.bf16.msra.mxu0 %v1393
  %1735 = vmatpush.bf16.msra.mxu0 %v1391
  %1736 = vmatmul.bf16.gmra.mxu0 %v871
  %v1737 = vpop.f32.mrf.mxu0
  %v1738 = vadd.f32 %v1659, %v1737
  %v1739 = vpop.f32.mrf.mxu0
  %v1740 = vadd.f32 %v1661, %v1739
  %1741 = vmatmul.bf16.gmra.mxu0 %v882
  %v1742 = vpop.f32.mrf.mxu0
  %v1743 = vadd.f32 %v1664, %v1742
  %v1744 = vpop.f32.mrf.mxu0
  %v1745 = vadd.f32 %v1666, %v1744
  %1746 = vmatmul.bf16.gmra.mxu0 %v893
  %v1747 = vpop.f32.mrf.mxu0
  %v1748 = vadd.f32 %v1669, %v1747
  %v1749 = vpop.f32.mrf.mxu0
  %v1750 = vadd.f32 %v1671, %v1749
  %1751 = vmatmul.bf16.gmra.mxu0 %v904
  %v1752 = vpop.f32.mrf.mxu0
  %v1753 = vadd.f32 %v1674, %v1752
  %v1754 = vpop.f32.mrf.mxu0
  %v1755 = vadd.f32 %v1676, %v1754
  %1756 = vmatmul.bf16.gmra.mxu0 %v915
  %v1757 = vpop.f32.mrf.mxu0
  %v1758 = vadd.f32 %v1679, %v1757
  %v1759 = vpop.f32.mrf.mxu0
  %v1760 = vadd.f32 %v1681, %v1759
  %1761 = vmatmul.bf16.gmra.mxu0 %v926
  %v1762 = vpop.f32.mrf.mxu0
  %v1763 = vadd.f32 %v1684, %v1762
  %v1764 = vpop.f32.mrf.mxu0
  %v1765 = vadd.f32 %v1686, %v1764
  %1766 = vmatmul.bf16.gmra.mxu0 %v937
  %v1767 = vpop.f32.mrf.mxu0
  %v1768 = vadd.f32 %v1689, %v1767
  %v1769 = vpop.f32.mrf.mxu0
  %v1770 = vadd.f32 %v1691, %v1769
  %1771 = vmatmul.bf16.gmra.mxu0 %v948
  %v1772 = vpop.f32.mrf.mxu0
  %v1773 = vadd.f32 %v1694, %v1772
  %v1774 = vpop.f32.mrf.mxu0
  %v1775 = vadd.f32 %v1696, %v1774
  %1776 = vmatmul.bf16.gmra.mxu0 %v959
  %v1777 = vpop.f32.mrf.mxu0
  %v1778 = vadd.f32 %v1699, %v1777
  %v1779 = vpop.f32.mrf.mxu0
  %v1780 = vadd.f32 %v1701, %v1779
  %1781 = vmatmul.bf16.gmra.mxu0 %v970
  %v1782 = vpop.f32.mrf.mxu0
  %v1783 = vadd.f32 %v1704, %v1782
  %v1784 = vpop.f32.mrf.mxu0
  %v1785 = vadd.f32 %v1706, %v1784
  %1786 = vmatmul.bf16.gmra.mxu0 %v981
  %v1787 = vpop.f32.mrf.mxu0
  %v1788 = vadd.f32 %v1709, %v1787
  %v1789 = vpop.f32.mrf.mxu0
  %v1790 = vadd.f32 %v1711, %v1789
  %1791 = vmatmul.bf16.gmra.mxu0 %v992
  %v1792 = vpop.f32.mrf.mxu0
  %v1793 = vadd.f32 %v1714, %v1792
  %v1794 = vpop.f32.mrf.mxu0
  %v1795 = vadd.f32 %v1716, %v1794
  %1796 = vmatmul.bf16.gmra.mxu0 %v1003
  %v1797 = vpop.f32.mrf.mxu0
  %v1798 = vadd.f32 %v1719, %v1797
  %v1799 = vpop.f32.mrf.mxu0
  %v1800 = vadd.f32 %v1721, %v1799
  %1801 = vmatmul.bf16.gmra.mxu0 %v1014
  %v1802 = vpop.f32.mrf.mxu0
  %v1803 = vadd.f32 %v1724, %v1802
  %v1804 = vpop.f32.mrf.mxu0
  %v1805 = vadd.f32 %v1726, %v1804
  %1806 = vdwg.mxu0
  %1807 = vmatpush.bf16.msra.mxu0 %v1421
  %1808 = vmatpush.bf16.msra.mxu0 %v1419
  %1809 = vmatpush.bf16.msra.mxu0 %v1417
  %1810 = vmatpush.bf16.msra.mxu0 %v1415
  %1811 = vmatpush.bf16.msra.mxu0 %v1413
  %1812 = vmatpush.bf16.msra.mxu0 %v1411
  %1813 = vmatpush.bf16.msra.mxu0 %v1409
  %1814 = vmatpush.bf16.msra.mxu0 %v1407
  %1815 = vmatmul.bf16.gmra.mxu0 %v872
  %v1816 = vpop.f32.mrf.mxu0
  %v1817 = vadd.f32 %v1738, %v1816
  %v1818 = vpop.f32.mrf.mxu0
  %v1819 = vadd.f32 %v1740, %v1818
  %1820 = vmatmul.bf16.gmra.mxu0 %v883
  %v1821 = vpop.f32.mrf.mxu0
  %v1822 = vadd.f32 %v1743, %v1821
  %v1823 = vpop.f32.mrf.mxu0
  %v1824 = vadd.f32 %v1745, %v1823
  %1825 = vmatmul.bf16.gmra.mxu0 %v894
  %v1826 = vpop.f32.mrf.mxu0
  %v1827 = vadd.f32 %v1748, %v1826
  %v1828 = vpop.f32.mrf.mxu0
  %v1829 = vadd.f32 %v1750, %v1828
  %1830 = vmatmul.bf16.gmra.mxu0 %v905
  %v1831 = vpop.f32.mrf.mxu0
  %v1832 = vadd.f32 %v1753, %v1831
  %v1833 = vpop.f32.mrf.mxu0
  %v1834 = vadd.f32 %v1755, %v1833
  %1835 = vmatmul.bf16.gmra.mxu0 %v916
  %v1836 = vpop.f32.mrf.mxu0
  %v1837 = vadd.f32 %v1758, %v1836
  %v1838 = vpop.f32.mrf.mxu0
  %v1839 = vadd.f32 %v1760, %v1838
  %1840 = vmatmul.bf16.gmra.mxu0 %v927
  %v1841 = vpop.f32.mrf.mxu0
  %v1842 = vadd.f32 %v1763, %v1841
  %v1843 = vpop.f32.mrf.mxu0
  %v1844 = vadd.f32 %v1765, %v1843
  %1845 = vmatmul.bf16.gmra.mxu0 %v938
  %v1846 = vpop.f32.mrf.mxu0
  %v1847 = vadd.f32 %v1768, %v1846
  %v1848 = vpop.f32.mrf.mxu0
  %v1849 = vadd.f32 %v1770, %v1848
  %1850 = vmatmul.bf16.gmra.mxu0 %v949
  %v1851 = vpop.f32.mrf.mxu0
  %v1852 = vadd.f32 %v1773, %v1851
  %v1853 = vpop.f32.mrf.mxu0
  %v1854 = vadd.f32 %v1775, %v1853
  %1855 = vmatmul.bf16.gmra.mxu0 %v960
  %v1856 = vpop.f32.mrf.mxu0
  %v1857 = vadd.f32 %v1778, %v1856
  %v1858 = vpop.f32.mrf.mxu0
  %v1859 = vadd.f32 %v1780, %v1858
  %1860 = vmatmul.bf16.gmra.mxu0 %v971
  %v1861 = vpop.f32.mrf.mxu0
  %v1862 = vadd.f32 %v1783, %v1861
  %v1863 = vpop.f32.mrf.mxu0
  %v1864 = vadd.f32 %v1785, %v1863
  %1865 = vmatmul.bf16.gmra.mxu0 %v982
  %v1866 = vpop.f32.mrf.mxu0
  %v1867 = vadd.f32 %v1788, %v1866
  %v1868 = vpop.f32.mrf.mxu0
  %v1869 = vadd.f32 %v1790, %v1868
  %1870 = vmatmul.bf16.gmra.mxu0 %v993
  %v1871 = vpop.f32.mrf.mxu0
  %v1872 = vadd.f32 %v1793, %v1871
  %v1873 = vpop.f32.mrf.mxu0
  %v1874 = vadd.f32 %v1795, %v1873
  %1875 = vmatmul.bf16.gmra.mxu0 %v1004
  %v1876 = vpop.f32.mrf.mxu0
  %v1877 = vadd.f32 %v1798, %v1876
  %v1878 = vpop.f32.mrf.mxu0
  %v1879 = vadd.f32 %v1800, %v1878
  %1880 = vmatmul.bf16.gmra.mxu0 %v1015
  %v1881 = vpop.f32.mrf.mxu0
  %v1882 = vadd.f32 %v1803, %v1881
  %v1883 = vpop.f32.mrf.mxu0
  %v1884 = vadd.f32 %v1805, %v1883
  %1885 = vdwg.mxu0
  %1886 = vmatpush.bf16.msra.mxu0 %v1437
  %1887 = vmatpush.bf16.msra.mxu0 %v1435
  %1888 = vmatpush.bf16.msra.mxu0 %v1433
  %1889 = vmatpush.bf16.msra.mxu0 %v1431
  %1890 = vmatpush.bf16.msra.mxu0 %v1429
  %1891 = vmatpush.bf16.msra.mxu0 %v1427
  %1892 = vmatpush.bf16.msra.mxu0 %v1425
  %1893 = vmatpush.bf16.msra.mxu0 %v1423
  %1894 = vmatmul.bf16.gmra.mxu0 %v873
  %v1895 = vpop.f32.mrf.mxu0
  %v1896 = vadd.f32 %v1817, %v1895
  %v1897 = vpop.f32.mrf.mxu0
  %v1898 = vadd.f32 %v1819, %v1897
  %1899 = vmatmul.bf16.gmra.mxu0 %v884
  %v1900 = vpop.f32.mrf.mxu0
  %v1901 = vadd.f32 %v1822, %v1900
  %v1902 = vpop.f32.mrf.mxu0
  %v1903 = vadd.f32 %v1824, %v1902
  %1904 = vmatmul.bf16.gmra.mxu0 %v895
  %v1905 = vpop.f32.mrf.mxu0
  %v1906 = vadd.f32 %v1827, %v1905
  %v1907 = vpop.f32.mrf.mxu0
  %v1908 = vadd.f32 %v1829, %v1907
  %1909 = vmatmul.bf16.gmra.mxu0 %v906
  %v1910 = vpop.f32.mrf.mxu0
  %v1911 = vadd.f32 %v1832, %v1910
  %v1912 = vpop.f32.mrf.mxu0
  %v1913 = vadd.f32 %v1834, %v1912
  %1914 = vmatmul.bf16.gmra.mxu0 %v917
  %v1915 = vpop.f32.mrf.mxu0
  %v1916 = vadd.f32 %v1837, %v1915
  %v1917 = vpop.f32.mrf.mxu0
  %v1918 = vadd.f32 %v1839, %v1917
  %1919 = vmatmul.bf16.gmra.mxu0 %v928
  %v1920 = vpop.f32.mrf.mxu0
  %v1921 = vadd.f32 %v1842, %v1920
  %v1922 = vpop.f32.mrf.mxu0
  %v1923 = vadd.f32 %v1844, %v1922
  %1924 = vmatmul.bf16.gmra.mxu0 %v939
  %v1925 = vpop.f32.mrf.mxu0
  %v1926 = vadd.f32 %v1847, %v1925
  %v1927 = vpop.f32.mrf.mxu0
  %v1928 = vadd.f32 %v1849, %v1927
  %1929 = vmatmul.bf16.gmra.mxu0 %v950
  %v1930 = vpop.f32.mrf.mxu0
  %v1931 = vadd.f32 %v1852, %v1930
  %v1932 = vpop.f32.mrf.mxu0
  %v1933 = vadd.f32 %v1854, %v1932
  %1934 = vmatmul.bf16.gmra.mxu0 %v961
  %v1935 = vpop.f32.mrf.mxu0
  %v1936 = vadd.f32 %v1857, %v1935
  %v1937 = vpop.f32.mrf.mxu0
  %v1938 = vadd.f32 %v1859, %v1937
  %1939 = vmatmul.bf16.gmra.mxu0 %v972
  %v1940 = vpop.f32.mrf.mxu0
  %v1941 = vadd.f32 %v1862, %v1940
  %v1942 = vpop.f32.mrf.mxu0
  %v1943 = vadd.f32 %v1864, %v1942
  %1944 = vmatmul.bf16.gmra.mxu0 %v983
  %v1945 = vpop.f32.mrf.mxu0
  %v1946 = vadd.f32 %v1867, %v1945
  %v1947 = vpop.f32.mrf.mxu0
  %v1948 = vadd.f32 %v1869, %v1947
  %1949 = vmatmul.bf16.gmra.mxu0 %v994
  %v1950 = vpop.f32.mrf.mxu0
  %v1951 = vadd.f32 %v1872, %v1950
  %v1952 = vpop.f32.mrf.mxu0
  %v1953 = vadd.f32 %v1874, %v1952
  %1954 = vmatmul.bf16.gmra.mxu0 %v1005
  %v1955 = vpop.f32.mrf.mxu0
  %v1956 = vadd.f32 %v1877, %v1955
  %v1957 = vpop.f32.mrf.mxu0
  %v1958 = vadd.f32 %v1879, %v1957
  %1959 = vmatmul.bf16.gmra.mxu0 %v1016
  %v1960 = vpop.f32.mrf.mxu0
  %v1961 = vadd.f32 %v1882, %v1960
  %v1962 = vpop.f32.mrf.mxu0
  %v1963 = vadd.f32 %v1884, %v1962
  %1964 = vdwg.mxu0
  %1965 = vmatpush.bf16.msra.mxu0 %v1453
  %1966 = vmatpush.bf16.msra.mxu0 %v1451
  %1967 = vmatpush.bf16.msra.mxu0 %v1449
  %1968 = vmatpush.bf16.msra.mxu0 %v1447
  %1969 = vmatpush.bf16.msra.mxu0 %v1445
  %1970 = vmatpush.bf16.msra.mxu0 %v1443
  %1971 = vmatpush.bf16.msra.mxu0 %v1441
  %1972 = vmatpush.bf16.msra.mxu0 %v1439
  %1973 = vmatmul.bf16.gmra.mxu0 %v874
  %v1974 = vpop.f32.mrf.mxu0
  %v1975 = vadd.f32 %v1896, %v1974
  %v1976 = vpop.f32.mrf.mxu0
  %v1977 = vadd.f32 %v1898, %v1976
  %1978 = vmatmul.bf16.gmra.mxu0 %v885
  %v1979 = vpop.f32.mrf.mxu0
  %v1980 = vadd.f32 %v1901, %v1979
  %v1981 = vpop.f32.mrf.mxu0
  %v1982 = vadd.f32 %v1903, %v1981
  %1983 = vmatmul.bf16.gmra.mxu0 %v896
  %v1984 = vpop.f32.mrf.mxu0
  %v1985 = vadd.f32 %v1906, %v1984
  %v1986 = vpop.f32.mrf.mxu0
  %v1987 = vadd.f32 %v1908, %v1986
  %1988 = vmatmul.bf16.gmra.mxu0 %v907
  %v1989 = vpop.f32.mrf.mxu0
  %v1990 = vadd.f32 %v1911, %v1989
  %v1991 = vpop.f32.mrf.mxu0
  %v1992 = vadd.f32 %v1913, %v1991
  %1993 = vmatmul.bf16.gmra.mxu0 %v918
  %v1994 = vpop.f32.mrf.mxu0
  %v1995 = vadd.f32 %v1916, %v1994
  %v1996 = vpop.f32.mrf.mxu0
  %v1997 = vadd.f32 %v1918, %v1996
  %1998 = vmatmul.bf16.gmra.mxu0 %v929
  %v1999 = vpop.f32.mrf.mxu0
  %v2000 = vadd.f32 %v1921, %v1999
  %v2001 = vpop.f32.mrf.mxu0
  %v2002 = vadd.f32 %v1923, %v2001
  %2003 = vmatmul.bf16.gmra.mxu0 %v940
  %v2004 = vpop.f32.mrf.mxu0
  %v2005 = vadd.f32 %v1926, %v2004
  %v2006 = vpop.f32.mrf.mxu0
  %v2007 = vadd.f32 %v1928, %v2006
  %2008 = vmatmul.bf16.gmra.mxu0 %v951
  %v2009 = vpop.f32.mrf.mxu0
  %v2010 = vadd.f32 %v1931, %v2009
  %v2011 = vpop.f32.mrf.mxu0
  %v2012 = vadd.f32 %v1933, %v2011
  %2013 = vmatmul.bf16.gmra.mxu0 %v962
  %v2014 = vpop.f32.mrf.mxu0
  %v2015 = vadd.f32 %v1936, %v2014
  %v2016 = vpop.f32.mrf.mxu0
  %v2017 = vadd.f32 %v1938, %v2016
  %2018 = vmatmul.bf16.gmra.mxu0 %v973
  %v2019 = vpop.f32.mrf.mxu0
  %v2020 = vadd.f32 %v1941, %v2019
  %v2021 = vpop.f32.mrf.mxu0
  %v2022 = vadd.f32 %v1943, %v2021
  %2023 = vmatmul.bf16.gmra.mxu0 %v984
  %v2024 = vpop.f32.mrf.mxu0
  %v2025 = vadd.f32 %v1946, %v2024
  %v2026 = vpop.f32.mrf.mxu0
  %v2027 = vadd.f32 %v1948, %v2026
  %2028 = vmatmul.bf16.gmra.mxu0 %v995
  %v2029 = vpop.f32.mrf.mxu0
  %v2030 = vadd.f32 %v1951, %v2029
  %v2031 = vpop.f32.mrf.mxu0
  %v2032 = vadd.f32 %v1953, %v2031
  %2033 = vmatmul.bf16.gmra.mxu0 %v1006
  %v2034 = vpop.f32.mrf.mxu0
  %v2035 = vadd.f32 %v1956, %v2034
  %v2036 = vpop.f32.mrf.mxu0
  %v2037 = vadd.f32 %v1958, %v2036
  %2038 = vmatmul.bf16.gmra.mxu0 %v1017
  %v2039 = vpop.f32.mrf.mxu0
  %v2040 = vadd.f32 %v1961, %v2039
  %v2041 = vpop.f32.mrf.mxu0
  %v2042 = vadd.f32 %v1963, %v2041
  %2043 = vdwg.mxu0
  %2044 = vmatpush.bf16.msra.mxu0 %v1469
  %2045 = vmatpush.bf16.msra.mxu0 %v1467
  %2046 = vmatpush.bf16.msra.mxu0 %v1465
  %2047 = vmatpush.bf16.msra.mxu0 %v1463
  %2048 = vmatpush.bf16.msra.mxu0 %v1461
  %2049 = vmatpush.bf16.msra.mxu0 %v1459
  %2050 = vmatpush.bf16.msra.mxu0 %v1457
  %2051 = vmatpush.bf16.msra.mxu0 %v1455
  %2052 = vmatmul.bf16.gmra.mxu0 %v875
  %v2053 = vpop.f32.mrf.mxu0
  %v2054 = vadd.f32 %v1975, %v2053
  %v2055 = vpop.f32.mrf.mxu0
  %v2056 = vadd.f32 %v1977, %v2055
  %2057 = vmatmul.bf16.gmra.mxu0 %v886
  %v2058 = vpop.f32.mrf.mxu0
  %v2059 = vadd.f32 %v1980, %v2058
  %v2060 = vpop.f32.mrf.mxu0
  %v2061 = vadd.f32 %v1982, %v2060
  %2062 = vmatmul.bf16.gmra.mxu0 %v897
  %v2063 = vpop.f32.mrf.mxu0
  %v2064 = vadd.f32 %v1985, %v2063
  %v2065 = vpop.f32.mrf.mxu0
  %v2066 = vadd.f32 %v1987, %v2065
  %2067 = vmatmul.bf16.gmra.mxu0 %v908
  %v2068 = vpop.f32.mrf.mxu0
  %v2069 = vadd.f32 %v1990, %v2068
  %v2070 = vpop.f32.mrf.mxu0
  %v2071 = vadd.f32 %v1992, %v2070
  %2072 = vmatmul.bf16.gmra.mxu0 %v919
  %v2073 = vpop.f32.mrf.mxu0
  %v2074 = vadd.f32 %v1995, %v2073
  %v2075 = vpop.f32.mrf.mxu0
  %v2076 = vadd.f32 %v1997, %v2075
  %2077 = vmatmul.bf16.gmra.mxu0 %v930
  %v2078 = vpop.f32.mrf.mxu0
  %v2079 = vadd.f32 %v2000, %v2078
  %v2080 = vpop.f32.mrf.mxu0
  %v2081 = vadd.f32 %v2002, %v2080
  %2082 = vmatmul.bf16.gmra.mxu0 %v941
  %v2083 = vpop.f32.mrf.mxu0
  %v2084 = vadd.f32 %v2005, %v2083
  %v2085 = vpop.f32.mrf.mxu0
  %v2086 = vadd.f32 %v2007, %v2085
  %2087 = vmatmul.bf16.gmra.mxu0 %v952
  %v2088 = vpop.f32.mrf.mxu0
  %v2089 = vadd.f32 %v2010, %v2088
  %v2090 = vpop.f32.mrf.mxu0
  %v2091 = vadd.f32 %v2012, %v2090
  %2092 = vmatmul.bf16.gmra.mxu0 %v963
  %v2093 = vpop.f32.mrf.mxu0
  %v2094 = vadd.f32 %v2015, %v2093
  %v2095 = vpop.f32.mrf.mxu0
  %v2096 = vadd.f32 %v2017, %v2095
  %2097 = vmatmul.bf16.gmra.mxu0 %v974
  %v2098 = vpop.f32.mrf.mxu0
  %v2099 = vadd.f32 %v2020, %v2098
  %v2100 = vpop.f32.mrf.mxu0
  %v2101 = vadd.f32 %v2022, %v2100
  %2102 = vmatmul.bf16.gmra.mxu0 %v985
  %v2103 = vpop.f32.mrf.mxu0
  %v2104 = vadd.f32 %v2025, %v2103
  %v2105 = vpop.f32.mrf.mxu0
  %v2106 = vadd.f32 %v2027, %v2105
  %2107 = vmatmul.bf16.gmra.mxu0 %v996
  %v2108 = vpop.f32.mrf.mxu0
  %v2109 = vadd.f32 %v2030, %v2108
  %v2110 = vpop.f32.mrf.mxu0
  %v2111 = vadd.f32 %v2032, %v2110
  %2112 = vmatmul.bf16.gmra.mxu0 %v1007
  %v2113 = vpop.f32.mrf.mxu0
  %v2114 = vadd.f32 %v2035, %v2113
  %v2115 = vpop.f32.mrf.mxu0
  %v2116 = vadd.f32 %v2037, %v2115
  %2117 = vmatmul.bf16.gmra.mxu0 %v1018
  %v2118 = vpop.f32.mrf.mxu0
  %v2119 = vadd.f32 %v2040, %v2118
  %v2120 = vpop.f32.mrf.mxu0
  %v2121 = vadd.f32 %v2042, %v2120
  %2122 = vdwg.mxu0
  %2123 = vmatpush.bf16.msra.mxu0 %v1485
  %2124 = vmatpush.bf16.msra.mxu0 %v1483
  %2125 = vmatpush.bf16.msra.mxu0 %v1481
  %2126 = vmatpush.bf16.msra.mxu0 %v1479
  %2127 = vmatpush.bf16.msra.mxu0 %v1477
  %2128 = vmatpush.bf16.msra.mxu0 %v1475
  %2129 = vmatpush.bf16.msra.mxu0 %v1473
  %2130 = vmatpush.bf16.msra.mxu0 %v1471
  %2131 = vmatmul.bf16.gmra.mxu0 %v876
  %v2132 = vpop.f32.mrf.mxu0
  %v2133 = vadd.f32 %v2054, %v2132
  %v2134 = vpop.f32.mrf.mxu0
  %v2135 = vadd.f32 %v2056, %v2134
  %2136 = vmatmul.bf16.gmra.mxu0 %v887
  %v2137 = vpop.f32.mrf.mxu0
  %v2138 = vadd.f32 %v2059, %v2137
  %v2139 = vpop.f32.mrf.mxu0
  %v2140 = vadd.f32 %v2061, %v2139
  %2141 = vmatmul.bf16.gmra.mxu0 %v898
  %v2142 = vpop.f32.mrf.mxu0
  %v2143 = vadd.f32 %v2064, %v2142
  %v2144 = vpop.f32.mrf.mxu0
  %v2145 = vadd.f32 %v2066, %v2144
  %2146 = vmatmul.bf16.gmra.mxu0 %v909
  %v2147 = vpop.f32.mrf.mxu0
  %v2148 = vadd.f32 %v2069, %v2147
  %v2149 = vpop.f32.mrf.mxu0
  %v2150 = vadd.f32 %v2071, %v2149
  %2151 = vmatmul.bf16.gmra.mxu0 %v920
  %v2152 = vpop.f32.mrf.mxu0
  %v2153 = vadd.f32 %v2074, %v2152
  %v2154 = vpop.f32.mrf.mxu0
  %v2155 = vadd.f32 %v2076, %v2154
  %2156 = vmatmul.bf16.gmra.mxu0 %v931
  %v2157 = vpop.f32.mrf.mxu0
  %v2158 = vadd.f32 %v2079, %v2157
  %v2159 = vpop.f32.mrf.mxu0
  %v2160 = vadd.f32 %v2081, %v2159
  %2161 = vmatmul.bf16.gmra.mxu0 %v942
  %v2162 = vpop.f32.mrf.mxu0
  %v2163 = vadd.f32 %v2084, %v2162
  %v2164 = vpop.f32.mrf.mxu0
  %v2165 = vadd.f32 %v2086, %v2164
  %2166 = vmatmul.bf16.gmra.mxu0 %v953
  %v2167 = vpop.f32.mrf.mxu0
  %v2168 = vadd.f32 %v2089, %v2167
  %v2169 = vpop.f32.mrf.mxu0
  %v2170 = vadd.f32 %v2091, %v2169
  %2171 = vmatmul.bf16.gmra.mxu0 %v964
  %v2172 = vpop.f32.mrf.mxu0
  %v2173 = vadd.f32 %v2094, %v2172
  %v2174 = vpop.f32.mrf.mxu0
  %v2175 = vadd.f32 %v2096, %v2174
  %2176 = vmatmul.bf16.gmra.mxu0 %v975
  %v2177 = vpop.f32.mrf.mxu0
  %v2178 = vadd.f32 %v2099, %v2177
  %v2179 = vpop.f32.mrf.mxu0
  %v2180 = vadd.f32 %v2101, %v2179
  %2181 = vmatmul.bf16.gmra.mxu0 %v986
  %v2182 = vpop.f32.mrf.mxu0
  %v2183 = vadd.f32 %v2104, %v2182
  %v2184 = vpop.f32.mrf.mxu0
  %v2185 = vadd.f32 %v2106, %v2184
  %2186 = vmatmul.bf16.gmra.mxu0 %v997
  %v2187 = vpop.f32.mrf.mxu0
  %v2188 = vadd.f32 %v2109, %v2187
  %v2189 = vpop.f32.mrf.mxu0
  %v2190 = vadd.f32 %v2111, %v2189
  %2191 = vmatmul.bf16.gmra.mxu0 %v1008
  %v2192 = vpop.f32.mrf.mxu0
  %v2193 = vadd.f32 %v2114, %v2192
  %v2194 = vpop.f32.mrf.mxu0
  %v2195 = vadd.f32 %v2116, %v2194
  %2196 = vmatmul.bf16.gmra.mxu0 %v1019
  %v2197 = vpop.f32.mrf.mxu0
  %v2198 = vadd.f32 %v2119, %v2197
  %v2199 = vpop.f32.mrf.mxu0
  %v2200 = vadd.f32 %v2121, %v2199
  %2201 = vdwg.mxu0
  %2202 = vmatpush.bf16.msra.mxu0 %v1501
  %2203 = vmatpush.bf16.msra.mxu0 %v1499
  %2204 = vmatpush.bf16.msra.mxu0 %v1497
  %2205 = vmatpush.bf16.msra.mxu0 %v1495
  %2206 = vmatpush.bf16.msra.mxu0 %v1493
  %2207 = vmatpush.bf16.msra.mxu0 %v1491
  %2208 = vmatpush.bf16.msra.mxu0 %v1489
  %2209 = vmatpush.bf16.msra.mxu0 %v1487
  %2210 = vmatmul.bf16.gmra.mxu0 %v877
  %v2211 = vpop.f32.mrf.mxu0
  %v2212 = vadd.f32 %v2133, %v2211
  %v2213 = vpop.f32.mrf.mxu0
  %v2214 = vadd.f32 %v2135, %v2213
  %2215 = vmatmul.bf16.gmra.mxu0 %v888
  %v2216 = vpop.f32.mrf.mxu0
  %v2217 = vadd.f32 %v2138, %v2216
  %v2218 = vpop.f32.mrf.mxu0
  %v2219 = vadd.f32 %v2140, %v2218
  %2220 = vmatmul.bf16.gmra.mxu0 %v899
  %v2221 = vpop.f32.mrf.mxu0
  %v2222 = vadd.f32 %v2143, %v2221
  %v2223 = vpop.f32.mrf.mxu0
  %v2224 = vadd.f32 %v2145, %v2223
  %2225 = vmatmul.bf16.gmra.mxu0 %v910
  %v2226 = vpop.f32.mrf.mxu0
  %v2227 = vadd.f32 %v2148, %v2226
  %v2228 = vpop.f32.mrf.mxu0
  %v2229 = vadd.f32 %v2150, %v2228
  %2230 = vmatmul.bf16.gmra.mxu0 %v921
  %v2231 = vpop.f32.mrf.mxu0
  %v2232 = vadd.f32 %v2153, %v2231
  %v2233 = vpop.f32.mrf.mxu0
  %v2234 = vadd.f32 %v2155, %v2233
  %2235 = vmatmul.bf16.gmra.mxu0 %v932
  %v2236 = vpop.f32.mrf.mxu0
  %v2237 = vadd.f32 %v2158, %v2236
  %v2238 = vpop.f32.mrf.mxu0
  %v2239 = vadd.f32 %v2160, %v2238
  %2240 = vmatmul.bf16.gmra.mxu0 %v943
  %v2241 = vpop.f32.mrf.mxu0
  %v2242 = vadd.f32 %v2163, %v2241
  %v2243 = vpop.f32.mrf.mxu0
  %v2244 = vadd.f32 %v2165, %v2243
  %2245 = vmatmul.bf16.gmra.mxu0 %v954
  %v2246 = vpop.f32.mrf.mxu0
  %v2247 = vadd.f32 %v2168, %v2246
  %v2248 = vpop.f32.mrf.mxu0
  %v2249 = vadd.f32 %v2170, %v2248
  %2250 = vmatmul.bf16.gmra.mxu0 %v965
  %v2251 = vpop.f32.mrf.mxu0
  %v2252 = vadd.f32 %v2173, %v2251
  %v2253 = vpop.f32.mrf.mxu0
  %v2254 = vadd.f32 %v2175, %v2253
  %2255 = vmatmul.bf16.gmra.mxu0 %v976
  %v2256 = vpop.f32.mrf.mxu0
  %v2257 = vadd.f32 %v2178, %v2256
  %v2258 = vpop.f32.mrf.mxu0
  %v2259 = vadd.f32 %v2180, %v2258
  %2260 = vmatmul.bf16.gmra.mxu0 %v987
  %v2261 = vpop.f32.mrf.mxu0
  %v2262 = vadd.f32 %v2183, %v2261
  %v2263 = vpop.f32.mrf.mxu0
  %v2264 = vadd.f32 %v2185, %v2263
  %2265 = vmatmul.bf16.gmra.mxu0 %v998
  %v2266 = vpop.f32.mrf.mxu0
  %v2267 = vadd.f32 %v2188, %v2266
  %v2268 = vpop.f32.mrf.mxu0
  %v2269 = vadd.f32 %v2190, %v2268
  %2270 = vmatmul.bf16.gmra.mxu0 %v1009
  %v2271 = vpop.f32.mrf.mxu0
  %v2272 = vadd.f32 %v2193, %v2271
  %v2273 = vpop.f32.mrf.mxu0
  %v2274 = vadd.f32 %v2195, %v2273
  %2275 = vmatmul.bf16.gmra.mxu0 %v1020
  %v2276 = vpop.f32.mrf.mxu0
  %v2277 = vadd.f32 %v2198, %v2276
  %v2278 = vpop.f32.mrf.mxu0
  %v2279 = vadd.f32 %v2200, %v2278
  %2280 = vdwg.mxu0
  %2281 = vmatpush.bf16.msra.mxu0 %v1517
  %2282 = vmatpush.bf16.msra.mxu0 %v1515
  %2283 = vmatpush.bf16.msra.mxu0 %v1513
  %2284 = vmatpush.bf16.msra.mxu0 %v1511
  %2285 = vmatpush.bf16.msra.mxu0 %v1509
  %2286 = vmatpush.bf16.msra.mxu0 %v1507
  %2287 = vmatpush.bf16.msra.mxu0 %v1505
  %2288 = vmatpush.bf16.msra.mxu0 %v1503
  %2289 = vmatmul.bf16.gmra.mxu0 %v878
  %v2290 = vpop.f32.mrf.mxu0
  %v2291 = vadd.f32 %v2212, %v2290
  %v2292 = vpop.f32.mrf.mxu0
  %v2293 = vadd.f32 %v2214, %v2292
  %2294 = vmatmul.bf16.gmra.mxu0 %v889
  %v2295 = vpop.f32.mrf.mxu0
  %v2296 = vadd.f32 %v2217, %v2295
  %v2297 = vpop.f32.mrf.mxu0
  %v2298 = vadd.f32 %v2219, %v2297
  %2299 = vmatmul.bf16.gmra.mxu0 %v900
  %v2300 = vpop.f32.mrf.mxu0
  %v2301 = vadd.f32 %v2222, %v2300
  %v2302 = vpop.f32.mrf.mxu0
  %v2303 = vadd.f32 %v2224, %v2302
  %2304 = vmatmul.bf16.gmra.mxu0 %v911
  %v2305 = vpop.f32.mrf.mxu0
  %v2306 = vadd.f32 %v2227, %v2305
  %v2307 = vpop.f32.mrf.mxu0
  %v2308 = vadd.f32 %v2229, %v2307
  %2309 = vmatmul.bf16.gmra.mxu0 %v922
  %v2310 = vpop.f32.mrf.mxu0
  %v2311 = vadd.f32 %v2232, %v2310
  %v2312 = vpop.f32.mrf.mxu0
  %v2313 = vadd.f32 %v2234, %v2312
  %2314 = vmatmul.bf16.gmra.mxu0 %v933
  %v2315 = vpop.f32.mrf.mxu0
  %v2316 = vadd.f32 %v2237, %v2315
  %v2317 = vpop.f32.mrf.mxu0
  %v2318 = vadd.f32 %v2239, %v2317
  %2319 = vmatmul.bf16.gmra.mxu0 %v944
  %v2320 = vpop.f32.mrf.mxu0
  %v2321 = vadd.f32 %v2242, %v2320
  %v2322 = vpop.f32.mrf.mxu0
  %v2323 = vadd.f32 %v2244, %v2322
  %2324 = vmatmul.bf16.gmra.mxu0 %v955
  %v2325 = vpop.f32.mrf.mxu0
  %v2326 = vadd.f32 %v2247, %v2325
  %v2327 = vpop.f32.mrf.mxu0
  %v2328 = vadd.f32 %v2249, %v2327
  %2329 = vmatmul.bf16.gmra.mxu0 %v966
  %v2330 = vpop.f32.mrf.mxu0
  %v2331 = vadd.f32 %v2252, %v2330
  %v2332 = vpop.f32.mrf.mxu0
  %v2333 = vadd.f32 %v2254, %v2332
  %2334 = vmatmul.bf16.gmra.mxu0 %v977
  %v2335 = vpop.f32.mrf.mxu0
  %v2336 = vadd.f32 %v2257, %v2335
  %v2337 = vpop.f32.mrf.mxu0
  %v2338 = vadd.f32 %v2259, %v2337
  %2339 = vmatmul.bf16.gmra.mxu0 %v988
  %v2340 = vpop.f32.mrf.mxu0
  %v2341 = vadd.f32 %v2262, %v2340
  %v2342 = vpop.f32.mrf.mxu0
  %v2343 = vadd.f32 %v2264, %v2342
  %2344 = vmatmul.bf16.gmra.mxu0 %v999
  %v2345 = vpop.f32.mrf.mxu0
  %v2346 = vadd.f32 %v2267, %v2345
  %v2347 = vpop.f32.mrf.mxu0
  %v2348 = vadd.f32 %v2269, %v2347
  %2349 = vmatmul.bf16.gmra.mxu0 %v1010
  %v2350 = vpop.f32.mrf.mxu0
  %v2351 = vadd.f32 %v2272, %v2350
  %v2352 = vpop.f32.mrf.mxu0
  %v2353 = vadd.f32 %v2274, %v2352
  %2354 = vmatmul.bf16.gmra.mxu0 %v1021
  %v2355 = vpop.f32.mrf.mxu0
  %v2356 = vadd.f32 %v2277, %v2355
  %v2357 = vpop.f32.mrf.mxu0
  %v2358 = vadd.f32 %v2279, %v2357
  %2359 = vdwg.mxu0
  %2360 = vmatpush.bf16.msra.mxu0 0
  %2361 = vmatpush.bf16.msra.mxu0 0
  %2362 = vmatpush.bf16.msra.mxu0 0
  %2363 = vmatpush.bf16.msra.mxu0 0
  %2364 = vmatpush.bf16.msra.mxu0 %v1525
  %2365 = vmatpush.bf16.msra.mxu0 %v1523
  %2366 = vmatpush.bf16.msra.mxu0 %v1521
  %2367 = vmatpush.bf16.msra.mxu0 %v1519
  %2368 = vmatmul.bf16.gmra.mxu0 %v1529
  %v2369 = vpop.f32.mrf.mxu0
  %v2370 = vadd.f32 %v2291, %v2369
  %v2371 = vpop.f32.mrf.mxu0
  %v2372 = vadd.f32 %v2293, %v2371
  %2373 = vmatmul.bf16.gmra.mxu0 %v1532
  %v2374 = vpop.f32.mrf.mxu0
  %v2375 = vadd.f32 %v2296, %v2374
  %v2376 = vpop.f32.mrf.mxu0
  %v2377 = vadd.f32 %v2298, %v2376
  %2378 = vmatmul.bf16.gmra.mxu0 %v1535
  %v2379 = vpop.f32.mrf.mxu0
  %v2380 = vadd.f32 %v2301, %v2379
  %v2381 = vpop.f32.mrf.mxu0
  %v2382 = vadd.f32 %v2303, %v2381
  %2383 = vmatmul.bf16.gmra.mxu0 %v1538
  %v2384 = vpop.f32.mrf.mxu0
  %v2385 = vadd.f32 %v2306, %v2384
  %v2386 = vpop.f32.mrf.mxu0
  %v2387 = vadd.f32 %v2308, %v2386
  %2388 = vmatmul.bf16.gmra.mxu0 %v1541
  %v2389 = vpop.f32.mrf.mxu0
  %v2390 = vadd.f32 %v2311, %v2389
  %v2391 = vpop.f32.mrf.mxu0
  %v2392 = vadd.f32 %v2313, %v2391
  %2393 = vmatmul.bf16.gmra.mxu0 %v1544
  %v2394 = vpop.f32.mrf.mxu0
  %v2395 = vadd.f32 %v2316, %v2394
  %v2396 = vpop.f32.mrf.mxu0
  %v2397 = vadd.f32 %v2318, %v2396
  %2398 = vmatmul.bf16.gmra.mxu0 %v1547
  %v2399 = vpop.f32.mrf.mxu0
  %v2400 = vadd.f32 %v2321, %v2399
  %v2401 = vpop.f32.mrf.mxu0
  %v2402 = vadd.f32 %v2323, %v2401
  %2403 = vmatmul.bf16.gmra.mxu0 %v1550
  %v2404 = vpop.f32.mrf.mxu0
  %v2405 = vadd.f32 %v2326, %v2404
  %v2406 = vpop.f32.mrf.mxu0
  %v2407 = vadd.f32 %v2328, %v2406
  %2408 = vmatmul.bf16.gmra.mxu0 %v1553
  %v2409 = vpop.f32.mrf.mxu0
  %v2410 = vadd.f32 %v2331, %v2409
  %v2411 = vpop.f32.mrf.mxu0
  %v2412 = vadd.f32 %v2333, %v2411
  %2413 = vmatmul.bf16.gmra.mxu0 %v1556
  %v2414 = vpop.f32.mrf.mxu0
  %v2415 = vadd.f32 %v2336, %v2414
  %v2416 = vpop.f32.mrf.mxu0
  %v2417 = vadd.f32 %v2338, %v2416
  %2418 = vmatmul.bf16.gmra.mxu0 %v1559
  %v2419 = vpop.f32.mrf.mxu0
  %v2420 = vadd.f32 %v2341, %v2419
  %v2421 = vpop.f32.mrf.mxu0
  %v2422 = vadd.f32 %v2343, %v2421
  %2423 = vmatmul.bf16.gmra.mxu0 %v1562
  %v2424 = vpop.f32.mrf.mxu0
  %v2425 = vadd.f32 %v2346, %v2424
  %v2426 = vpop.f32.mrf.mxu0
  %v2427 = vadd.f32 %v2348, %v2426
  %2428 = vmatmul.bf16.gmra.mxu0 %v1565
  %v2429 = vpop.f32.mrf.mxu0
  %v2430 = vadd.f32 %v2351, %v2429
  %v2431 = vpop.f32.mrf.mxu0
  %v2432 = vadd.f32 %v2353, %v2431
  %2433 = vmatmul.bf16.gmra.mxu0 %v1568
  %v2434 = vpop.f32.mrf.mxu0
  %v2435 = vadd.f32 %v2356, %v2434
  %v2436 = vpop.f32.mrf.mxu0
  %v2437 = vadd.f32 %v2358, %v2436
  %2438 = vdwg.mxu0
  %2439 = vmatpush.bf16.msra.mxu0 %v1374
  %2440 = vmatpush.bf16.msra.mxu0 %v1372
  %2441 = vmatpush.bf16.msra.mxu0 %v1370
  %2442 = vmatpush.bf16.msra.mxu0 %v1368
  %2443 = vmatpush.bf16.msra.mxu0 %v1366
  %2444 = vmatpush.bf16.msra.mxu0 %v1364
  %2445 = vmatpush.bf16.msra.mxu0 %v1362
  %2446 = vmatpush.bf16.msra.mxu0 %v1360
  %2447 = vmatmul.bf16.gmra.mxu0 %v869
  %v2448 = vpop.f32.mrf.mxu0
  %v2449 = vadd.f32 0.0, %v2448
  %v2450 = vpop.f32.mrf.mxu0
  %v2451 = vadd.f32 0.0, %v2450
  %2452 = vmatmul.bf16.gmra.mxu0 %v880
  %v2453 = vpop.f32.mrf.mxu0
  %v2454 = vadd.f32 0.0, %v2453
  %v2455 = vpop.f32.mrf.mxu0
  %v2456 = vadd.f32 0.0, %v2455
  %2457 = vmatmul.bf16.gmra.mxu0 %v891
  %v2458 = vpop.f32.mrf.mxu0
  %v2459 = vadd.f32 0.0, %v2458
  %v2460 = vpop.f32.mrf.mxu0
  %v2461 = vadd.f32 0.0, %v2460
  %2462 = vmatmul.bf16.gmra.mxu0 %v902
  %v2463 = vpop.f32.mrf.mxu0
  %v2464 = vadd.f32 0.0, %v2463
  %v2465 = vpop.f32.mrf.mxu0
  %v2466 = vadd.f32 0.0, %v2465
  %2467 = vmatmul.bf16.gmra.mxu0 %v913
  %v2468 = vpop.f32.mrf.mxu0
  %v2469 = vadd.f32 0.0, %v2468
  %v2470 = vpop.f32.mrf.mxu0
  %v2471 = vadd.f32 0.0, %v2470
  %2472 = vmatmul.bf16.gmra.mxu0 %v924
  %v2473 = vpop.f32.mrf.mxu0
  %v2474 = vadd.f32 0.0, %v2473
  %v2475 = vpop.f32.mrf.mxu0
  %v2476 = vadd.f32 0.0, %v2475
  %2477 = vmatmul.bf16.gmra.mxu0 %v935
  %v2478 = vpop.f32.mrf.mxu0
  %v2479 = vadd.f32 0.0, %v2478
  %v2480 = vpop.f32.mrf.mxu0
  %v2481 = vadd.f32 0.0, %v2480
  %2482 = vmatmul.bf16.gmra.mxu0 %v946
  %v2483 = vpop.f32.mrf.mxu0
  %v2484 = vadd.f32 0.0, %v2483
  %v2485 = vpop.f32.mrf.mxu0
  %v2486 = vadd.f32 0.0, %v2485
  %2487 = vmatmul.bf16.gmra.mxu0 %v957
  %v2488 = vpop.f32.mrf.mxu0
  %v2489 = vadd.f32 0.0, %v2488
  %v2490 = vpop.f32.mrf.mxu0
  %v2491 = vadd.f32 0.0, %v2490
  %2492 = vmatmul.bf16.gmra.mxu0 %v968
  %v2493 = vpop.f32.mrf.mxu0
  %v2494 = vadd.f32 0.0, %v2493
  %v2495 = vpop.f32.mrf.mxu0
  %v2496 = vadd.f32 0.0, %v2495
  %2497 = vmatmul.bf16.gmra.mxu0 %v979
  %v2498 = vpop.f32.mrf.mxu0
  %v2499 = vadd.f32 0.0, %v2498
  %v2500 = vpop.f32.mrf.mxu0
  %v2501 = vadd.f32 0.0, %v2500
  %2502 = vmatmul.bf16.gmra.mxu0 %v990
  %v2503 = vpop.f32.mrf.mxu0
  %v2504 = vadd.f32 0.0, %v2503
  %v2505 = vpop.f32.mrf.mxu0
  %v2506 = vadd.f32 0.0, %v2505
  %2507 = vmatmul.bf16.gmra.mxu0 %v1001
  %v2508 = vpop.f32.mrf.mxu0
  %v2509 = vadd.f32 0.0, %v2508
  %v2510 = vpop.f32.mrf.mxu0
  %v2511 = vadd.f32 0.0, %v2510
  %2512 = vmatmul.bf16.gmra.mxu0 %v1012
  %v2513 = vpop.f32.mrf.mxu0
  %v2514 = vadd.f32 0.0, %v2513
  %v2515 = vpop.f32.mrf.mxu0
  %v2516 = vadd.f32 0.0, %v2515
  %2517 = vdwg.mxu0
  %2518 = vmatpush.bf16.msra.mxu0 %v1390
  %2519 = vmatpush.bf16.msra.mxu0 %v1388
  %2520 = vmatpush.bf16.msra.mxu0 %v1386
  %2521 = vmatpush.bf16.msra.mxu0 %v1384
  %2522 = vmatpush.bf16.msra.mxu0 %v1382
  %2523 = vmatpush.bf16.msra.mxu0 %v1380
  %2524 = vmatpush.bf16.msra.mxu0 %v1378
  %2525 = vmatpush.bf16.msra.mxu0 %v1376
  %2526 = vmatmul.bf16.gmra.mxu0 %v870
  %v2527 = vpop.f32.mrf.mxu0
  %v2528 = vadd.f32 %v2449, %v2527
  %v2529 = vpop.f32.mrf.mxu0
  %v2530 = vadd.f32 %v2451, %v2529
  %2531 = vmatmul.bf16.gmra.mxu0 %v881
  %v2532 = vpop.f32.mrf.mxu0
  %v2533 = vadd.f32 %v2454, %v2532
  %v2534 = vpop.f32.mrf.mxu0
  %v2535 = vadd.f32 %v2456, %v2534
  %2536 = vmatmul.bf16.gmra.mxu0 %v892
  %v2537 = vpop.f32.mrf.mxu0
  %v2538 = vadd.f32 %v2459, %v2537
  %v2539 = vpop.f32.mrf.mxu0
  %v2540 = vadd.f32 %v2461, %v2539
  %2541 = vmatmul.bf16.gmra.mxu0 %v903
  %v2542 = vpop.f32.mrf.mxu0
  %v2543 = vadd.f32 %v2464, %v2542
  %v2544 = vpop.f32.mrf.mxu0
  %v2545 = vadd.f32 %v2466, %v2544
  %2546 = vmatmul.bf16.gmra.mxu0 %v914
  %v2547 = vpop.f32.mrf.mxu0
  %v2548 = vadd.f32 %v2469, %v2547
  %v2549 = vpop.f32.mrf.mxu0
  %v2550 = vadd.f32 %v2471, %v2549
  %2551 = vmatmul.bf16.gmra.mxu0 %v925
  %v2552 = vpop.f32.mrf.mxu0
  %v2553 = vadd.f32 %v2474, %v2552
  %v2554 = vpop.f32.mrf.mxu0
  %v2555 = vadd.f32 %v2476, %v2554
  %2556 = vmatmul.bf16.gmra.mxu0 %v936
  %v2557 = vpop.f32.mrf.mxu0
  %v2558 = vadd.f32 %v2479, %v2557
  %v2559 = vpop.f32.mrf.mxu0
  %v2560 = vadd.f32 %v2481, %v2559
  %2561 = vmatmul.bf16.gmra.mxu0 %v947
  %v2562 = vpop.f32.mrf.mxu0
  %v2563 = vadd.f32 %v2484, %v2562
  %v2564 = vpop.f32.mrf.mxu0
  %v2565 = vadd.f32 %v2486, %v2564
  %2566 = vmatmul.bf16.gmra.mxu0 %v958
  %v2567 = vpop.f32.mrf.mxu0
  %v2568 = vadd.f32 %v2489, %v2567
  %v2569 = vpop.f32.mrf.mxu0
  %v2570 = vadd.f32 %v2491, %v2569
  %2571 = vmatmul.bf16.gmra.mxu0 %v969
  %v2572 = vpop.f32.mrf.mxu0
  %v2573 = vadd.f32 %v2494, %v2572
  %v2574 = vpop.f32.mrf.mxu0
  %v2575 = vadd.f32 %v2496, %v2574
  %2576 = vmatmul.bf16.gmra.mxu0 %v980
  %v2577 = vpop.f32.mrf.mxu0
  %v2578 = vadd.f32 %v2499, %v2577
  %v2579 = vpop.f32.mrf.mxu0
  %v2580 = vadd.f32 %v2501, %v2579
  %2581 = vmatmul.bf16.gmra.mxu0 %v991
  %v2582 = vpop.f32.mrf.mxu0
  %v2583 = vadd.f32 %v2504, %v2582
  %v2584 = vpop.f32.mrf.mxu0
  %v2585 = vadd.f32 %v2506, %v2584
  %2586 = vmatmul.bf16.gmra.mxu0 %v1002
  %v2587 = vpop.f32.mrf.mxu0
  %v2588 = vadd.f32 %v2509, %v2587
  %v2589 = vpop.f32.mrf.mxu0
  %v2590 = vadd.f32 %v2511, %v2589
  %2591 = vmatmul.bf16.gmra.mxu0 %v1013
  %v2592 = vpop.f32.mrf.mxu0
  %v2593 = vadd.f32 %v2514, %v2592
  %v2594 = vpop.f32.mrf.mxu0
  %v2595 = vadd.f32 %v2516, %v2594
  %2596 = vdwg.mxu0
  %2597 = vmatpush.bf16.msra.mxu0 %v1406
  %2598 = vmatpush.bf16.msra.mxu0 %v1404
  %2599 = vmatpush.bf16.msra.mxu0 %v1402
  %2600 = vmatpush.bf16.msra.mxu0 %v1400
  %2601 = vmatpush.bf16.msra.mxu0 %v1398
  %2602 = vmatpush.bf16.msra.mxu0 %v1396
  %2603 = vmatpush.bf16.msra.mxu0 %v1394
  %2604 = vmatpush.bf16.msra.mxu0 %v1392
  %2605 = vmatmul.bf16.gmra.mxu0 %v871
  %v2606 = vpop.f32.mrf.mxu0
  %v2607 = vadd.f32 %v2528, %v2606
  %v2608 = vpop.f32.mrf.mxu0
  %v2609 = vadd.f32 %v2530, %v2608
  %2610 = vmatmul.bf16.gmra.mxu0 %v882
  %v2611 = vpop.f32.mrf.mxu0
  %v2612 = vadd.f32 %v2533, %v2611
  %v2613 = vpop.f32.mrf.mxu0
  %v2614 = vadd.f32 %v2535, %v2613
  %2615 = vmatmul.bf16.gmra.mxu0 %v893
  %v2616 = vpop.f32.mrf.mxu0
  %v2617 = vadd.f32 %v2538, %v2616
  %v2618 = vpop.f32.mrf.mxu0
  %v2619 = vadd.f32 %v2540, %v2618
  %2620 = vmatmul.bf16.gmra.mxu0 %v904
  %v2621 = vpop.f32.mrf.mxu0
  %v2622 = vadd.f32 %v2543, %v2621
  %v2623 = vpop.f32.mrf.mxu0
  %v2624 = vadd.f32 %v2545, %v2623
  %2625 = vmatmul.bf16.gmra.mxu0 %v915
  %v2626 = vpop.f32.mrf.mxu0
  %v2627 = vadd.f32 %v2548, %v2626
  %v2628 = vpop.f32.mrf.mxu0
  %v2629 = vadd.f32 %v2550, %v2628
  %2630 = vmatmul.bf16.gmra.mxu0 %v926
  %v2631 = vpop.f32.mrf.mxu0
  %v2632 = vadd.f32 %v2553, %v2631
  %v2633 = vpop.f32.mrf.mxu0
  %v2634 = vadd.f32 %v2555, %v2633
  %2635 = vmatmul.bf16.gmra.mxu0 %v937
  %v2636 = vpop.f32.mrf.mxu0
  %v2637 = vadd.f32 %v2558, %v2636
  %v2638 = vpop.f32.mrf.mxu0
  %v2639 = vadd.f32 %v2560, %v2638
  %2640 = vmatmul.bf16.gmra.mxu0 %v948
  %v2641 = vpop.f32.mrf.mxu0
  %v2642 = vadd.f32 %v2563, %v2641
  %v2643 = vpop.f32.mrf.mxu0
  %v2644 = vadd.f32 %v2565, %v2643
  %2645 = vmatmul.bf16.gmra.mxu0 %v959
  %v2646 = vpop.f32.mrf.mxu0
  %v2647 = vadd.f32 %v2568, %v2646
  %v2648 = vpop.f32.mrf.mxu0
  %v2649 = vadd.f32 %v2570, %v2648
  %2650 = vmatmul.bf16.gmra.mxu0 %v970
  %v2651 = vpop.f32.mrf.mxu0
  %v2652 = vadd.f32 %v2573, %v2651
  %v2653 = vpop.f32.mrf.mxu0
  %v2654 = vadd.f32 %v2575, %v2653
  %2655 = vmatmul.bf16.gmra.mxu0 %v981
  %v2656 = vpop.f32.mrf.mxu0
  %v2657 = vadd.f32 %v2578, %v2656
  %v2658 = vpop.f32.mrf.mxu0
  %v2659 = vadd.f32 %v2580, %v2658
  %2660 = vmatmul.bf16.gmra.mxu0 %v992
  %v2661 = vpop.f32.mrf.mxu0
  %v2662 = vadd.f32 %v2583, %v2661
  %v2663 = vpop.f32.mrf.mxu0
  %v2664 = vadd.f32 %v2585, %v2663
  %2665 = vmatmul.bf16.gmra.mxu0 %v1003
  %v2666 = vpop.f32.mrf.mxu0
  %v2667 = vadd.f32 %v2588, %v2666
  %v2668 = vpop.f32.mrf.mxu0
  %v2669 = vadd.f32 %v2590, %v2668
  %2670 = vmatmul.bf16.gmra.mxu0 %v1014
  %v2671 = vpop.f32.mrf.mxu0
  %v2672 = vadd.f32 %v2593, %v2671
  %v2673 = vpop.f32.mrf.mxu0
  %v2674 = vadd.f32 %v2595, %v2673
  %2675 = vdwg.mxu0
  %2676 = vmatpush.bf16.msra.mxu0 %v1422
  %2677 = vmatpush.bf16.msra.mxu0 %v1420
  %2678 = vmatpush.bf16.msra.mxu0 %v1418
  %2679 = vmatpush.bf16.msra.mxu0 %v1416
  %2680 = vmatpush.bf16.msra.mxu0 %v1414
  %2681 = vmatpush.bf16.msra.mxu0 %v1412
  %2682 = vmatpush.bf16.msra.mxu0 %v1410
  %2683 = vmatpush.bf16.msra.mxu0 %v1408
  %2684 = vmatmul.bf16.gmra.mxu0 %v872
  %v2685 = vpop.f32.mrf.mxu0
  %v2686 = vadd.f32 %v2607, %v2685
  %v2687 = vpop.f32.mrf.mxu0
  %v2688 = vadd.f32 %v2609, %v2687
  %2689 = vmatmul.bf16.gmra.mxu0 %v883
  %v2690 = vpop.f32.mrf.mxu0
  %v2691 = vadd.f32 %v2612, %v2690
  %v2692 = vpop.f32.mrf.mxu0
  %v2693 = vadd.f32 %v2614, %v2692
  %2694 = vmatmul.bf16.gmra.mxu0 %v894
  %v2695 = vpop.f32.mrf.mxu0
  %v2696 = vadd.f32 %v2617, %v2695
  %v2697 = vpop.f32.mrf.mxu0
  %v2698 = vadd.f32 %v2619, %v2697
  %2699 = vmatmul.bf16.gmra.mxu0 %v905
  %v2700 = vpop.f32.mrf.mxu0
  %v2701 = vadd.f32 %v2622, %v2700
  %v2702 = vpop.f32.mrf.mxu0
  %v2703 = vadd.f32 %v2624, %v2702
  %2704 = vmatmul.bf16.gmra.mxu0 %v916
  %v2705 = vpop.f32.mrf.mxu0
  %v2706 = vadd.f32 %v2627, %v2705
  %v2707 = vpop.f32.mrf.mxu0
  %v2708 = vadd.f32 %v2629, %v2707
  %2709 = vmatmul.bf16.gmra.mxu0 %v927
  %v2710 = vpop.f32.mrf.mxu0
  %v2711 = vadd.f32 %v2632, %v2710
  %v2712 = vpop.f32.mrf.mxu0
  %v2713 = vadd.f32 %v2634, %v2712
  %2714 = vmatmul.bf16.gmra.mxu0 %v938
  %v2715 = vpop.f32.mrf.mxu0
  %v2716 = vadd.f32 %v2637, %v2715
  %v2717 = vpop.f32.mrf.mxu0
  %v2718 = vadd.f32 %v2639, %v2717
  %2719 = vmatmul.bf16.gmra.mxu0 %v949
  %v2720 = vpop.f32.mrf.mxu0
  %v2721 = vadd.f32 %v2642, %v2720
  %v2722 = vpop.f32.mrf.mxu0
  %v2723 = vadd.f32 %v2644, %v2722
  %2724 = vmatmul.bf16.gmra.mxu0 %v960
  %v2725 = vpop.f32.mrf.mxu0
  %v2726 = vadd.f32 %v2647, %v2725
  %v2727 = vpop.f32.mrf.mxu0
  %v2728 = vadd.f32 %v2649, %v2727
  %2729 = vmatmul.bf16.gmra.mxu0 %v971
  %v2730 = vpop.f32.mrf.mxu0
  %v2731 = vadd.f32 %v2652, %v2730
  %v2732 = vpop.f32.mrf.mxu0
  %v2733 = vadd.f32 %v2654, %v2732
  %2734 = vmatmul.bf16.gmra.mxu0 %v982
  %v2735 = vpop.f32.mrf.mxu0
  %v2736 = vadd.f32 %v2657, %v2735
  %v2737 = vpop.f32.mrf.mxu0
  %v2738 = vadd.f32 %v2659, %v2737
  %2739 = vmatmul.bf16.gmra.mxu0 %v993
  %v2740 = vpop.f32.mrf.mxu0
  %v2741 = vadd.f32 %v2662, %v2740
  %v2742 = vpop.f32.mrf.mxu0
  %v2743 = vadd.f32 %v2664, %v2742
  %2744 = vmatmul.bf16.gmra.mxu0 %v1004
  %v2745 = vpop.f32.mrf.mxu0
  %v2746 = vadd.f32 %v2667, %v2745
  %v2747 = vpop.f32.mrf.mxu0
  %v2748 = vadd.f32 %v2669, %v2747
  %2749 = vmatmul.bf16.gmra.mxu0 %v1015
  %v2750 = vpop.f32.mrf.mxu0
  %v2751 = vadd.f32 %v2672, %v2750
  %v2752 = vpop.f32.mrf.mxu0
  %v2753 = vadd.f32 %v2674, %v2752
  %2754 = vdwg.mxu0
  %2755 = vmatpush.bf16.msra.mxu0 %v1438
  %2756 = vmatpush.bf16.msra.mxu0 %v1436
  %2757 = vmatpush.bf16.msra.mxu0 %v1434
  %2758 = vmatpush.bf16.msra.mxu0 %v1432
  %2759 = vmatpush.bf16.msra.mxu0 %v1430
  %2760 = vmatpush.bf16.msra.mxu0 %v1428
  %2761 = vmatpush.bf16.msra.mxu0 %v1426
  %2762 = vmatpush.bf16.msra.mxu0 %v1424
  %2763 = vmatmul.bf16.gmra.mxu0 %v873
  %v2764 = vpop.f32.mrf.mxu0
  %v2765 = vadd.f32 %v2686, %v2764
  %v2766 = vpop.f32.mrf.mxu0
  %v2767 = vadd.f32 %v2688, %v2766
  %2768 = vmatmul.bf16.gmra.mxu0 %v884
  %v2769 = vpop.f32.mrf.mxu0
  %v2770 = vadd.f32 %v2691, %v2769
  %v2771 = vpop.f32.mrf.mxu0
  %v2772 = vadd.f32 %v2693, %v2771
  %2773 = vmatmul.bf16.gmra.mxu0 %v895
  %v2774 = vpop.f32.mrf.mxu0
  %v2775 = vadd.f32 %v2696, %v2774
  %v2776 = vpop.f32.mrf.mxu0
  %v2777 = vadd.f32 %v2698, %v2776
  %2778 = vmatmul.bf16.gmra.mxu0 %v906
  %v2779 = vpop.f32.mrf.mxu0
  %v2780 = vadd.f32 %v2701, %v2779
  %v2781 = vpop.f32.mrf.mxu0
  %v2782 = vadd.f32 %v2703, %v2781
  %2783 = vmatmul.bf16.gmra.mxu0 %v917
  %v2784 = vpop.f32.mrf.mxu0
  %v2785 = vadd.f32 %v2706, %v2784
  %v2786 = vpop.f32.mrf.mxu0
  %v2787 = vadd.f32 %v2708, %v2786
  %2788 = vmatmul.bf16.gmra.mxu0 %v928
  %v2789 = vpop.f32.mrf.mxu0
  %v2790 = vadd.f32 %v2711, %v2789
  %v2791 = vpop.f32.mrf.mxu0
  %v2792 = vadd.f32 %v2713, %v2791
  %2793 = vmatmul.bf16.gmra.mxu0 %v939
  %v2794 = vpop.f32.mrf.mxu0
  %v2795 = vadd.f32 %v2716, %v2794
  %v2796 = vpop.f32.mrf.mxu0
  %v2797 = vadd.f32 %v2718, %v2796
  %2798 = vmatmul.bf16.gmra.mxu0 %v950
  %v2799 = vpop.f32.mrf.mxu0
  %v2800 = vadd.f32 %v2721, %v2799
  %v2801 = vpop.f32.mrf.mxu0
  %v2802 = vadd.f32 %v2723, %v2801
  %2803 = vmatmul.bf16.gmra.mxu0 %v961
  %v2804 = vpop.f32.mrf.mxu0
  %v2805 = vadd.f32 %v2726, %v2804
  %v2806 = vpop.f32.mrf.mxu0
  %v2807 = vadd.f32 %v2728, %v2806
  %2808 = vmatmul.bf16.gmra.mxu0 %v972
  %v2809 = vpop.f32.mrf.mxu0
  %v2810 = vadd.f32 %v2731, %v2809
  %v2811 = vpop.f32.mrf.mxu0
  %v2812 = vadd.f32 %v2733, %v2811
  %2813 = vmatmul.bf16.gmra.mxu0 %v983
  %v2814 = vpop.f32.mrf.mxu0
  %v2815 = vadd.f32 %v2736, %v2814
  %v2816 = vpop.f32.mrf.mxu0
  %v2817 = vadd.f32 %v2738, %v2816
  %2818 = vmatmul.bf16.gmra.mxu0 %v994
  %v2819 = vpop.f32.mrf.mxu0
  %v2820 = vadd.f32 %v2741, %v2819
  %v2821 = vpop.f32.mrf.mxu0
  %v2822 = vadd.f32 %v2743, %v2821
  %2823 = vmatmul.bf16.gmra.mxu0 %v1005
  %v2824 = vpop.f32.mrf.mxu0
  %v2825 = vadd.f32 %v2746, %v2824
  %v2826 = vpop.f32.mrf.mxu0
  %v2827 = vadd.f32 %v2748, %v2826
  %2828 = vmatmul.bf16.gmra.mxu0 %v1016
  %v2829 = vpop.f32.mrf.mxu0
  %v2830 = vadd.f32 %v2751, %v2829
  %v2831 = vpop.f32.mrf.mxu0
  %v2832 = vadd.f32 %v2753, %v2831
  %2833 = vdwg.mxu0
  %2834 = vmatpush.bf16.msra.mxu0 %v1454
  %2835 = vmatpush.bf16.msra.mxu0 %v1452
  %2836 = vmatpush.bf16.msra.mxu0 %v1450
  %2837 = vmatpush.bf16.msra.mxu0 %v1448
  %2838 = vmatpush.bf16.msra.mxu0 %v1446
  %2839 = vmatpush.bf16.msra.mxu0 %v1444
  %2840 = vmatpush.bf16.msra.mxu0 %v1442
  %2841 = vmatpush.bf16.msra.mxu0 %v1440
  %2842 = vmatmul.bf16.gmra.mxu0 %v874
  %v2843 = vpop.f32.mrf.mxu0
  %v2844 = vadd.f32 %v2765, %v2843
  %v2845 = vpop.f32.mrf.mxu0
  %v2846 = vadd.f32 %v2767, %v2845
  %2847 = vmatmul.bf16.gmra.mxu0 %v885
  %v2848 = vpop.f32.mrf.mxu0
  %v2849 = vadd.f32 %v2770, %v2848
  %v2850 = vpop.f32.mrf.mxu0
  %v2851 = vadd.f32 %v2772, %v2850
  %2852 = vmatmul.bf16.gmra.mxu0 %v896
  %v2853 = vpop.f32.mrf.mxu0
  %v2854 = vadd.f32 %v2775, %v2853
  %v2855 = vpop.f32.mrf.mxu0
  %v2856 = vadd.f32 %v2777, %v2855
  %2857 = vmatmul.bf16.gmra.mxu0 %v907
  %v2858 = vpop.f32.mrf.mxu0
  %v2859 = vadd.f32 %v2780, %v2858
  %v2860 = vpop.f32.mrf.mxu0
  %v2861 = vadd.f32 %v2782, %v2860
  %2862 = vmatmul.bf16.gmra.mxu0 %v918
  %v2863 = vpop.f32.mrf.mxu0
  %v2864 = vadd.f32 %v2785, %v2863
  %v2865 = vpop.f32.mrf.mxu0
  %v2866 = vadd.f32 %v2787, %v2865
  %2867 = vmatmul.bf16.gmra.mxu0 %v929
  %v2868 = vpop.f32.mrf.mxu0
  %v2869 = vadd.f32 %v2790, %v2868
  %v2870 = vpop.f32.mrf.mxu0
  %v2871 = vadd.f32 %v2792, %v2870
  %2872 = vmatmul.bf16.gmra.mxu0 %v940
  %v2873 = vpop.f32.mrf.mxu0
  %v2874 = vadd.f32 %v2795, %v2873
  %v2875 = vpop.f32.mrf.mxu0
  %v2876 = vadd.f32 %v2797, %v2875
  %2877 = vmatmul.bf16.gmra.mxu0 %v951
  %v2878 = vpop.f32.mrf.mxu0
  %v2879 = vadd.f32 %v2800, %v2878
  %v2880 = vpop.f32.mrf.mxu0
  %v2881 = vadd.f32 %v2802, %v2880
  %2882 = vmatmul.bf16.gmra.mxu0 %v962
  %v2883 = vpop.f32.mrf.mxu0
  %v2884 = vadd.f32 %v2805, %v2883
  %v2885 = vpop.f32.mrf.mxu0
  %v2886 = vadd.f32 %v2807, %v2885
  %2887 = vmatmul.bf16.gmra.mxu0 %v973
  %v2888 = vpop.f32.mrf.mxu0
  %v2889 = vadd.f32 %v2810, %v2888
  %v2890 = vpop.f32.mrf.mxu0
  %v2891 = vadd.f32 %v2812, %v2890
  %2892 = vmatmul.bf16.gmra.mxu0 %v984
  %v2893 = vpop.f32.mrf.mxu0
  %v2894 = vadd.f32 %v2815, %v2893
  %v2895 = vpop.f32.mrf.mxu0
  %v2896 = vadd.f32 %v2817, %v2895
  %2897 = vmatmul.bf16.gmra.mxu0 %v995
  %v2898 = vpop.f32.mrf.mxu0
  %v2899 = vadd.f32 %v2820, %v2898
  %v2900 = vpop.f32.mrf.mxu0
  %v2901 = vadd.f32 %v2822, %v2900
  %2902 = vmatmul.bf16.gmra.mxu0 %v1006
  %v2903 = vpop.f32.mrf.mxu0
  %v2904 = vadd.f32 %v2825, %v2903
  %v2905 = vpop.f32.mrf.mxu0
  %v2906 = vadd.f32 %v2827, %v2905
  %2907 = vmatmul.bf16.gmra.mxu0 %v1017
  %v2908 = vpop.f32.mrf.mxu0
  %v2909 = vadd.f32 %v2830, %v2908
  %v2910 = vpop.f32.mrf.mxu0
  %v2911 = vadd.f32 %v2832, %v2910
  %2912 = vdwg.mxu0
  %2913 = vmatpush.bf16.msra.mxu0 %v1470
  %2914 = vmatpush.bf16.msra.mxu0 %v1468
  %2915 = vmatpush.bf16.msra.mxu0 %v1466
  %2916 = vmatpush.bf16.msra.mxu0 %v1464
  %2917 = vmatpush.bf16.msra.mxu0 %v1462
  %2918 = vmatpush.bf16.msra.mxu0 %v1460
  %2919 = vmatpush.bf16.msra.mxu0 %v1458
  %2920 = vmatpush.bf16.msra.mxu0 %v1456
  %2921 = vmatmul.bf16.gmra.mxu0 %v875
  %v2922 = vpop.f32.mrf.mxu0
  %v2923 = vadd.f32 %v2844, %v2922
  %v2924 = vpop.f32.mrf.mxu0
  %v2925 = vadd.f32 %v2846, %v2924
  %2926 = vmatmul.bf16.gmra.mxu0 %v886
  %v2927 = vpop.f32.mrf.mxu0
  %v2928 = vadd.f32 %v2849, %v2927
  %v2929 = vpop.f32.mrf.mxu0
  %v2930 = vadd.f32 %v2851, %v2929
  %2931 = vmatmul.bf16.gmra.mxu0 %v897
  %v2932 = vpop.f32.mrf.mxu0
  %v2933 = vadd.f32 %v2854, %v2932
  %v2934 = vpop.f32.mrf.mxu0
  %v2935 = vadd.f32 %v2856, %v2934
  %2936 = vmatmul.bf16.gmra.mxu0 %v908
  %v2937 = vpop.f32.mrf.mxu0
  %v2938 = vadd.f32 %v2859, %v2937
  %v2939 = vpop.f32.mrf.mxu0
  %v2940 = vadd.f32 %v2861, %v2939
  %2941 = vmatmul.bf16.gmra.mxu0 %v919
  %v2942 = vpop.f32.mrf.mxu0
  %v2943 = vadd.f32 %v2864, %v2942
  %v2944 = vpop.f32.mrf.mxu0
  %v2945 = vadd.f32 %v2866, %v2944
  %2946 = vmatmul.bf16.gmra.mxu0 %v930
  %v2947 = vpop.f32.mrf.mxu0
  %v2948 = vadd.f32 %v2869, %v2947
  %v2949 = vpop.f32.mrf.mxu0
  %v2950 = vadd.f32 %v2871, %v2949
  %2951 = vmatmul.bf16.gmra.mxu0 %v941
  %v2952 = vpop.f32.mrf.mxu0
  %v2953 = vadd.f32 %v2874, %v2952
  %v2954 = vpop.f32.mrf.mxu0
  %v2955 = vadd.f32 %v2876, %v2954
  %2956 = vmatmul.bf16.gmra.mxu0 %v952
  %v2957 = vpop.f32.mrf.mxu0
  %v2958 = vadd.f32 %v2879, %v2957
  %v2959 = vpop.f32.mrf.mxu0
  %v2960 = vadd.f32 %v2881, %v2959
  %2961 = vmatmul.bf16.gmra.mxu0 %v963
  %v2962 = vpop.f32.mrf.mxu0
  %v2963 = vadd.f32 %v2884, %v2962
  %v2964 = vpop.f32.mrf.mxu0
  %v2965 = vadd.f32 %v2886, %v2964
  %2966 = vmatmul.bf16.gmra.mxu0 %v974
  %v2967 = vpop.f32.mrf.mxu0
  %v2968 = vadd.f32 %v2889, %v2967
  %v2969 = vpop.f32.mrf.mxu0
  %v2970 = vadd.f32 %v2891, %v2969
  %2971 = vmatmul.bf16.gmra.mxu0 %v985
  %v2972 = vpop.f32.mrf.mxu0
  %v2973 = vadd.f32 %v2894, %v2972
  %v2974 = vpop.f32.mrf.mxu0
  %v2975 = vadd.f32 %v2896, %v2974
  %2976 = vmatmul.bf16.gmra.mxu0 %v996
  %v2977 = vpop.f32.mrf.mxu0
  %v2978 = vadd.f32 %v2899, %v2977
  %v2979 = vpop.f32.mrf.mxu0
  %v2980 = vadd.f32 %v2901, %v2979
  %2981 = vmatmul.bf16.gmra.mxu0 %v1007
  %v2982 = vpop.f32.mrf.mxu0
  %v2983 = vadd.f32 %v2904, %v2982
  %v2984 = vpop.f32.mrf.mxu0
  %v2985 = vadd.f32 %v2906, %v2984
  %2986 = vmatmul.bf16.gmra.mxu0 %v1018
  %v2987 = vpop.f32.mrf.mxu0
  %v2988 = vadd.f32 %v2909, %v2987
  %v2989 = vpop.f32.mrf.mxu0
  %v2990 = vadd.f32 %v2911, %v2989
  %2991 = vdwg.mxu0
  %2992 = vmatpush.bf16.msra.mxu0 %v1486
  %2993 = vmatpush.bf16.msra.mxu0 %v1484
  %2994 = vmatpush.bf16.msra.mxu0 %v1482
  %2995 = vmatpush.bf16.msra.mxu0 %v1480
  %2996 = vmatpush.bf16.msra.mxu0 %v1478
  %2997 = vmatpush.bf16.msra.mxu0 %v1476
  %2998 = vmatpush.bf16.msra.mxu0 %v1474
  %2999 = vmatpush.bf16.msra.mxu0 %v1472
  %3000 = vmatmul.bf16.gmra.mxu0 %v876
  %v3001 = vpop.f32.mrf.mxu0
  %v3002 = vadd.f32 %v2923, %v3001
  %v3003 = vpop.f32.mrf.mxu0
  %v3004 = vadd.f32 %v2925, %v3003
  %3005 = vmatmul.bf16.gmra.mxu0 %v887
  %v3006 = vpop.f32.mrf.mxu0
  %v3007 = vadd.f32 %v2928, %v3006
  %v3008 = vpop.f32.mrf.mxu0
  %v3009 = vadd.f32 %v2930, %v3008
  %3010 = vmatmul.bf16.gmra.mxu0 %v898
  %v3011 = vpop.f32.mrf.mxu0
  %v3012 = vadd.f32 %v2933, %v3011
  %v3013 = vpop.f32.mrf.mxu0
  %v3014 = vadd.f32 %v2935, %v3013
  %3015 = vmatmul.bf16.gmra.mxu0 %v909
  %v3016 = vpop.f32.mrf.mxu0
  %v3017 = vadd.f32 %v2938, %v3016
  %v3018 = vpop.f32.mrf.mxu0
  %v3019 = vadd.f32 %v2940, %v3018
  %3020 = vmatmul.bf16.gmra.mxu0 %v920
  %v3021 = vpop.f32.mrf.mxu0
  %v3022 = vadd.f32 %v2943, %v3021
  %v3023 = vpop.f32.mrf.mxu0
  %v3024 = vadd.f32 %v2945, %v3023
  %3025 = vmatmul.bf16.gmra.mxu0 %v931
  %v3026 = vpop.f32.mrf.mxu0
  %v3027 = vadd.f32 %v2948, %v3026
  %v3028 = vpop.f32.mrf.mxu0
  %v3029 = vadd.f32 %v2950, %v3028
  %3030 = vmatmul.bf16.gmra.mxu0 %v942
  %v3031 = vpop.f32.mrf.mxu0
  %v3032 = vadd.f32 %v2953, %v3031
  %v3033 = vpop.f32.mrf.mxu0
  %v3034 = vadd.f32 %v2955, %v3033
  %3035 = vmatmul.bf16.gmra.mxu0 %v953
  %v3036 = vpop.f32.mrf.mxu0
  %v3037 = vadd.f32 %v2958, %v3036
  %v3038 = vpop.f32.mrf.mxu0
  %v3039 = vadd.f32 %v2960, %v3038
  %3040 = vmatmul.bf16.gmra.mxu0 %v964
  %v3041 = vpop.f32.mrf.mxu0
  %v3042 = vadd.f32 %v2963, %v3041
  %v3043 = vpop.f32.mrf.mxu0
  %v3044 = vadd.f32 %v2965, %v3043
  %3045 = vmatmul.bf16.gmra.mxu0 %v975
  %v3046 = vpop.f32.mrf.mxu0
  %v3047 = vadd.f32 %v2968, %v3046
  %v3048 = vpop.f32.mrf.mxu0
  %v3049 = vadd.f32 %v2970, %v3048
  %3050 = vmatmul.bf16.gmra.mxu0 %v986
  %v3051 = vpop.f32.mrf.mxu0
  %v3052 = vadd.f32 %v2973, %v3051
  %v3053 = vpop.f32.mrf.mxu0
  %v3054 = vadd.f32 %v2975, %v3053
  %3055 = vmatmul.bf16.gmra.mxu0 %v997
  %v3056 = vpop.f32.mrf.mxu0
  %v3057 = vadd.f32 %v2978, %v3056
  %v3058 = vpop.f32.mrf.mxu0
  %v3059 = vadd.f32 %v2980, %v3058
  %3060 = vmatmul.bf16.gmra.mxu0 %v1008
  %v3061 = vpop.f32.mrf.mxu0
  %v3062 = vadd.f32 %v2983, %v3061
  %v3063 = vpop.f32.mrf.mxu0
  %v3064 = vadd.f32 %v2985, %v3063
  %3065 = vmatmul.bf16.gmra.mxu0 %v1019
  %v3066 = vpop.f32.mrf.mxu0
  %v3067 = vadd.f32 %v2988, %v3066
  %v3068 = vpop.f32.mrf.mxu0
  %v3069 = vadd.f32 %v2990, %v3068
  %3070 = vdwg.mxu0
  %3071 = vmatpush.bf16.msra.mxu0 %v1502
  %3072 = vmatpush.bf16.msra.mxu0 %v1500
  %3073 = vmatpush.bf16.msra.mxu0 %v1498
  %3074 = vmatpush.bf16.msra.mxu0 %v1496
  %3075 = vmatpush.bf16.msra.mxu0 %v1494
  %3076 = vmatpush.bf16.msra.mxu0 %v1492
  %3077 = vmatpush.bf16.msra.mxu0 %v1490
  %3078 = vmatpush.bf16.msra.mxu0 %v1488
  %3079 = vmatmul.bf16.gmra.mxu0 %v877
  %v3080 = vpop.f32.mrf.mxu0
  %v3081 = vadd.f32 %v3002, %v3080
  %v3082 = vpop.f32.mrf.mxu0
  %v3083 = vadd.f32 %v3004, %v3082
  %3084 = vmatmul.bf16.gmra.mxu0 %v888
  %v3085 = vpop.f32.mrf.mxu0
  %v3086 = vadd.f32 %v3007, %v3085
  %v3087 = vpop.f32.mrf.mxu0
  %v3088 = vadd.f32 %v3009, %v3087
  %3089 = vmatmul.bf16.gmra.mxu0 %v899
  %v3090 = vpop.f32.mrf.mxu0
  %v3091 = vadd.f32 %v3012, %v3090
  %v3092 = vpop.f32.mrf.mxu0
  %v3093 = vadd.f32 %v3014, %v3092
  %3094 = vmatmul.bf16.gmra.mxu0 %v910
  %v3095 = vpop.f32.mrf.mxu0
  %v3096 = vadd.f32 %v3017, %v3095
  %v3097 = vpop.f32.mrf.mxu0
  %v3098 = vadd.f32 %v3019, %v3097
  %3099 = vmatmul.bf16.gmra.mxu0 %v921
  %v3100 = vpop.f32.mrf.mxu0
  %v3101 = vadd.f32 %v3022, %v3100
  %v3102 = vpop.f32.mrf.mxu0
  %v3103 = vadd.f32 %v3024, %v3102
  %3104 = vmatmul.bf16.gmra.mxu0 %v932
  %v3105 = vpop.f32.mrf.mxu0
  %v3106 = vadd.f32 %v3027, %v3105
  %v3107 = vpop.f32.mrf.mxu0
  %v3108 = vadd.f32 %v3029, %v3107
  %3109 = vmatmul.bf16.gmra.mxu0 %v943
  %v3110 = vpop.f32.mrf.mxu0
  %v3111 = vadd.f32 %v3032, %v3110
  %v3112 = vpop.f32.mrf.mxu0
  %v3113 = vadd.f32 %v3034, %v3112
  %3114 = vmatmul.bf16.gmra.mxu0 %v954
  %v3115 = vpop.f32.mrf.mxu0
  %v3116 = vadd.f32 %v3037, %v3115
  %v3117 = vpop.f32.mrf.mxu0
  %v3118 = vadd.f32 %v3039, %v3117
  %3119 = vmatmul.bf16.gmra.mxu0 %v965
  %v3120 = vpop.f32.mrf.mxu0
  %v3121 = vadd.f32 %v3042, %v3120
  %v3122 = vpop.f32.mrf.mxu0
  %v3123 = vadd.f32 %v3044, %v3122
  %3124 = vmatmul.bf16.gmra.mxu0 %v976
  %v3125 = vpop.f32.mrf.mxu0
  %v3126 = vadd.f32 %v3047, %v3125
  %v3127 = vpop.f32.mrf.mxu0
  %v3128 = vadd.f32 %v3049, %v3127
  %3129 = vmatmul.bf16.gmra.mxu0 %v987
  %v3130 = vpop.f32.mrf.mxu0
  %v3131 = vadd.f32 %v3052, %v3130
  %v3132 = vpop.f32.mrf.mxu0
  %v3133 = vadd.f32 %v3054, %v3132
  %3134 = vmatmul.bf16.gmra.mxu0 %v998
  %v3135 = vpop.f32.mrf.mxu0
  %v3136 = vadd.f32 %v3057, %v3135
  %v3137 = vpop.f32.mrf.mxu0
  %v3138 = vadd.f32 %v3059, %v3137
  %3139 = vmatmul.bf16.gmra.mxu0 %v1009
  %v3140 = vpop.f32.mrf.mxu0
  %v3141 = vadd.f32 %v3062, %v3140
  %v3142 = vpop.f32.mrf.mxu0
  %v3143 = vadd.f32 %v3064, %v3142
  %3144 = vmatmul.bf16.gmra.mxu0 %v1020
  %v3145 = vpop.f32.mrf.mxu0
  %v3146 = vadd.f32 %v3067, %v3145
  %v3147 = vpop.f32.mrf.mxu0
  %v3148 = vadd.f32 %v3069, %v3147
  %3149 = vdwg.mxu0
  %3150 = vmatpush.bf16.msra.mxu0 %v1518
  %3151 = vmatpush.bf16.msra.mxu0 %v1516
  %3152 = vmatpush.bf16.msra.mxu0 %v1514
  %3153 = vmatpush.bf16.msra.mxu0 %v1512
  %3154 = vmatpush.bf16.msra.mxu0 %v1510
  %3155 = vmatpush.bf16.msra.mxu0 %v1508
  %3156 = vmatpush.bf16.msra.mxu0 %v1506
  %3157 = vmatpush.bf16.msra.mxu0 %v1504
  %3158 = vmatmul.bf16.gmra.mxu0 %v878
  %v3159 = vpop.f32.mrf.mxu0
  %v3160 = vadd.f32 %v3081, %v3159
  %v3161 = vpop.f32.mrf.mxu0
  %v3162 = vadd.f32 %v3083, %v3161
  %3163 = vmatmul.bf16.gmra.mxu0 %v889
  %v3164 = vpop.f32.mrf.mxu0
  %v3165 = vadd.f32 %v3086, %v3164
  %v3166 = vpop.f32.mrf.mxu0
  %v3167 = vadd.f32 %v3088, %v3166
  %3168 = vmatmul.bf16.gmra.mxu0 %v900
  %v3169 = vpop.f32.mrf.mxu0
  %v3170 = vadd.f32 %v3091, %v3169
  %v3171 = vpop.f32.mrf.mxu0
  %v3172 = vadd.f32 %v3093, %v3171
  %3173 = vmatmul.bf16.gmra.mxu0 %v911
  %v3174 = vpop.f32.mrf.mxu0
  %v3175 = vadd.f32 %v3096, %v3174
  %v3176 = vpop.f32.mrf.mxu0
  %v3177 = vadd.f32 %v3098, %v3176
  %3178 = vmatmul.bf16.gmra.mxu0 %v922
  %v3179 = vpop.f32.mrf.mxu0
  %v3180 = vadd.f32 %v3101, %v3179
  %v3181 = vpop.f32.mrf.mxu0
  %v3182 = vadd.f32 %v3103, %v3181
  %3183 = vmatmul.bf16.gmra.mxu0 %v933
  %v3184 = vpop.f32.mrf.mxu0
  %v3185 = vadd.f32 %v3106, %v3184
  %v3186 = vpop.f32.mrf.mxu0
  %v3187 = vadd.f32 %v3108, %v3186
  %3188 = vmatmul.bf16.gmra.mxu0 %v944
  %v3189 = vpop.f32.mrf.mxu0
  %v3190 = vadd.f32 %v3111, %v3189
  %v3191 = vpop.f32.mrf.mxu0
  %v3192 = vadd.f32 %v3113, %v3191
  %3193 = vmatmul.bf16.gmra.mxu0 %v955
  %v3194 = vpop.f32.mrf.mxu0
  %v3195 = vadd.f32 %v3116, %v3194
  %v3196 = vpop.f32.mrf.mxu0
  %v3197 = vadd.f32 %v3118, %v3196
  %3198 = vmatmul.bf16.gmra.mxu0 %v966
  %v3199 = vpop.f32.mrf.mxu0
  %v3200 = vadd.f32 %v3121, %v3199
  %v3201 = vpop.f32.mrf.mxu0
  %v3202 = vadd.f32 %v3123, %v3201
  %3203 = vmatmul.bf16.gmra.mxu0 %v977
  %v3204 = vpop.f32.mrf.mxu0
  %v3205 = vadd.f32 %v3126, %v3204
  %v3206 = vpop.f32.mrf.mxu0
  %v3207 = vadd.f32 %v3128, %v3206
  %3208 = vmatmul.bf16.gmra.mxu0 %v988
  %v3209 = vpop.f32.mrf.mxu0
  %v3210 = vadd.f32 %v3131, %v3209
  %v3211 = vpop.f32.mrf.mxu0
  %v3212 = vadd.f32 %v3133, %v3211
  %3213 = vmatmul.bf16.gmra.mxu0 %v999
  %v3214 = vpop.f32.mrf.mxu0
  %v3215 = vadd.f32 %v3136, %v3214
  %v3216 = vpop.f32.mrf.mxu0
  %v3217 = vadd.f32 %v3138, %v3216
  %3218 = vmatmul.bf16.gmra.mxu0 %v1010
  %v3219 = vpop.f32.mrf.mxu0
  %v3220 = vadd.f32 %v3141, %v3219
  %v3221 = vpop.f32.mrf.mxu0
  %v3222 = vadd.f32 %v3143, %v3221
  %3223 = vmatmul.bf16.gmra.mxu0 %v1021
  %v3224 = vpop.f32.mrf.mxu0
  %v3225 = vadd.f32 %v3146, %v3224
  %v3226 = vpop.f32.mrf.mxu0
  %v3227 = vadd.f32 %v3148, %v3226
  %3228 = vdwg.mxu0
  %3229 = vmatpush.bf16.msra.mxu0 0
  %3230 = vmatpush.bf16.msra.mxu0 0
  %3231 = vmatpush.bf16.msra.mxu0 0
  %3232 = vmatpush.bf16.msra.mxu0 0
  %3233 = vmatpush.bf16.msra.mxu0 %v1526
  %3234 = vmatpush.bf16.msra.mxu0 %v1524
  %3235 = vmatpush.bf16.msra.mxu0 %v1522
  %3236 = vmatpush.bf16.msra.mxu0 %v1520
  %3237 = vmatmul.bf16.gmra.mxu0 %v1529
  %v3238 = vpop.f32.mrf.mxu0
  %v3239 = vadd.f32 %v3160, %v3238
  %v3240 = vpop.f32.mrf.mxu0
  %v3241 = vadd.f32 %v3162, %v3240
  %3242 = vmatmul.bf16.gmra.mxu0 %v1532
  %v3243 = vpop.f32.mrf.mxu0
  %v3244 = vadd.f32 %v3165, %v3243
  %v3245 = vpop.f32.mrf.mxu0
  %v3246 = vadd.f32 %v3167, %v3245
  %3247 = vmatmul.bf16.gmra.mxu0 %v1535
  %v3248 = vpop.f32.mrf.mxu0
  %v3249 = vadd.f32 %v3170, %v3248
  %v3250 = vpop.f32.mrf.mxu0
  %v3251 = vadd.f32 %v3172, %v3250
  %3252 = vmatmul.bf16.gmra.mxu0 %v1538
  %v3253 = vpop.f32.mrf.mxu0
  %v3254 = vadd.f32 %v3175, %v3253
  %v3255 = vpop.f32.mrf.mxu0
  %v3256 = vadd.f32 %v3177, %v3255
  %3257 = vmatmul.bf16.gmra.mxu0 %v1541
  %v3258 = vpop.f32.mrf.mxu0
  %v3259 = vadd.f32 %v3180, %v3258
  %v3260 = vpop.f32.mrf.mxu0
  %v3261 = vadd.f32 %v3182, %v3260
  %3262 = vmatmul.bf16.gmra.mxu0 %v1544
  %v3263 = vpop.f32.mrf.mxu0
  %v3264 = vadd.f32 %v3185, %v3263
  %v3265 = vpop.f32.mrf.mxu0
  %v3266 = vadd.f32 %v3187, %v3265
  %3267 = vmatmul.bf16.gmra.mxu0 %v1547
  %v3268 = vpop.f32.mrf.mxu0
  %v3269 = vadd.f32 %v3190, %v3268
  %v3270 = vpop.f32.mrf.mxu0
  %v3271 = vadd.f32 %v3192, %v3270
  %3272 = vmatmul.bf16.gmra.mxu0 %v1550
  %v3273 = vpop.f32.mrf.mxu0
  %v3274 = vadd.f32 %v3195, %v3273
  %v3275 = vpop.f32.mrf.mxu0
  %v3276 = vadd.f32 %v3197, %v3275
  %3277 = vmatmul.bf16.gmra.mxu0 %v1553
  %v3278 = vpop.f32.mrf.mxu0
  %v3279 = vadd.f32 %v3200, %v3278
  %v3280 = vpop.f32.mrf.mxu0
  %v3281 = vadd.f32 %v3202, %v3280
  %3282 = vmatmul.bf16.gmra.mxu0 %v1556
  %v3283 = vpop.f32.mrf.mxu0
  %v3284 = vadd.f32 %v3205, %v3283
  %v3285 = vpop.f32.mrf.mxu0
  %v3286 = vadd.f32 %v3207, %v3285
  %3287 = vmatmul.bf16.gmra.mxu0 %v1559
  %v3288 = vpop.f32.mrf.mxu0
  %v3289 = vadd.f32 %v3210, %v3288
  %v3290 = vpop.f32.mrf.mxu0
  %v3291 = vadd.f32 %v3212, %v3290
  %3292 = vmatmul.bf16.gmra.mxu0 %v1562
  %v3293 = vpop.f32.mrf.mxu0
  %v3294 = vadd.f32 %v3215, %v3293
  %v3295 = vpop.f32.mrf.mxu0
  %v3296 = vadd.f32 %v3217, %v3295
  %3297 = vmatmul.bf16.gmra.mxu0 %v1565
  %v3298 = vpop.f32.mrf.mxu0
  %v3299 = vadd.f32 %v3220, %v3298
  %v3300 = vpop.f32.mrf.mxu0
  %v3301 = vadd.f32 %v3222, %v3300
  %3302 = vmatmul.bf16.gmra.mxu0 %v1568
  %v3303 = vpop.f32.mrf.mxu0
  %v3304 = vadd.f32 %v3225, %v3303
  %v3305 = vpop.f32.mrf.mxu0
  %v3306 = vadd.f32 %v3227, %v3305
  %3307 = vdwg.mxu0
  %vm3308 = vcmask 556032
  %v3309 = vsel %vm3308, %v3239, 0.0
  %v3310 = vadd.f32 %v2370, %v3309
  %3311 = vadd.xlane.f32.xlu0 %v3310
  %v3312 = vpop.xlane.xlu0 %3311
  %v3313 = vsel %vm3308, %v3241, 0.0
  %v3314 = vadd.f32 %v2372, %v3313
  %3315 = vadd.xlane.f32.xlu0 %v3314
  %v3316 = vpop.xlane.xlu0 %3315
  %v3317 = vsel %vm3308, %v3244, 0.0
  %v3318 = vadd.f32 %v2375, %v3317
  %3319 = vadd.xlane.f32.xlu0 %v3318
  %v3320 = vpop.xlane.xlu0 %3319
  %v3321 = vsel %vm3308, %v3246, 0.0
  %v3322 = vadd.f32 %v2377, %v3321
  %3323 = vadd.xlane.f32.xlu0 %v3322
  %v3324 = vpop.xlane.xlu0 %3323
  %v3325 = vsel %vm3308, %v3249, 0.0
  %v3326 = vadd.f32 %v2380, %v3325
  %3327 = vadd.xlane.f32.xlu0 %v3326
  %v3328 = vpop.xlane.xlu0 %3327
  %v3329 = vsel %vm3308, %v3251, 0.0
  %v3330 = vadd.f32 %v2382, %v3329
  %3331 = vadd.xlane.f32.xlu0 %v3330
  %v3332 = vpop.xlane.xlu0 %3331
  %v3333 = vsel %vm3308, %v3254, 0.0
  %v3334 = vadd.f32 %v2385, %v3333
  %3335 = vadd.xlane.f32.xlu0 %v3334
  %v3336 = vpop.xlane.xlu0 %3335
  %v3337 = vsel %vm3308, %v3256, 0.0
  %v3338 = vadd.f32 %v2387, %v3337
  %3339 = vadd.xlane.f32.xlu0 %v3338
  %v3340 = vpop.xlane.xlu0 %3339
  %v3341 = vsel %vm3308, %v3259, 0.0
  %v3342 = vadd.f32 %v2390, %v3341
  %3343 = vadd.xlane.f32.xlu0 %v3342
  %v3344 = vpop.xlane.xlu0 %3343
  %v3345 = vsel %vm3308, %v3261, 0.0
  %v3346 = vadd.f32 %v2392, %v3345
  %3347 = vadd.xlane.f32.xlu0 %v3346
  %v3348 = vpop.xlane.xlu0 %3347
  %v3349 = vsel %vm3308, %v3264, 0.0
  %v3350 = vadd.f32 %v2395, %v3349
  %3351 = vadd.xlane.f32.xlu0 %v3350
  %v3352 = vpop.xlane.xlu0 %3351
  %v3353 = vsel %vm3308, %v3266, 0.0
  %v3354 = vadd.f32 %v2397, %v3353
  %3355 = vadd.xlane.f32.xlu0 %v3354
  %v3356 = vpop.xlane.xlu0 %3355
  %v3357 = vsel %vm3308, %v3269, 0.0
  %v3358 = vadd.f32 %v2400, %v3357
  %3359 = vadd.xlane.f32.xlu0 %v3358
  %v3360 = vpop.xlane.xlu0 %3359
  %v3361 = vsel %vm3308, %v3271, 0.0
  %v3362 = vadd.f32 %v2402, %v3361
  %3363 = vadd.xlane.f32.xlu0 %v3362
  %v3364 = vpop.xlane.xlu0 %3363
  %v3365 = vsel %vm3308, %v3274, 0.0
  %v3366 = vadd.f32 %v2405, %v3365
  %3367 = vadd.xlane.f32.xlu0 %v3366
  %v3368 = vpop.xlane.xlu0 %3367
  %v3369 = vsel %vm3308, %v3276, 0.0
  %v3370 = vadd.f32 %v2407, %v3369
  %3371 = vadd.xlane.f32.xlu0 %v3370
  %v3372 = vpop.xlane.xlu0 %3371
  %v3373 = vsel %vm3308, %v3279, 0.0
  %v3374 = vadd.f32 %v2410, %v3373
  %3375 = vadd.xlane.f32.xlu0 %v3374
  %v3376 = vpop.xlane.xlu0 %3375
  %v3377 = vsel %vm3308, %v3281, 0.0
  %v3378 = vadd.f32 %v2412, %v3377
  %3379 = vadd.xlane.f32.xlu0 %v3378
  %v3380 = vpop.xlane.xlu0 %3379
  %v3381 = vsel %vm3308, %v3284, 0.0
  %v3382 = vadd.f32 %v2415, %v3381
  %3383 = vadd.xlane.f32.xlu0 %v3382
  %v3384 = vpop.xlane.xlu0 %3383
  %v3385 = vsel %vm3308, %v3286, 0.0
  %v3386 = vadd.f32 %v2417, %v3385
  %3387 = vadd.xlane.f32.xlu0 %v3386
  %v3388 = vpop.xlane.xlu0 %3387
  %v3389 = vsel %vm3308, %v3289, 0.0
  %v3390 = vadd.f32 %v2420, %v3389
  %3391 = vadd.xlane.f32.xlu0 %v3390
  %v3392 = vpop.xlane.xlu0 %3391
  %v3393 = vsel %vm3308, %v3291, 0.0
  %v3394 = vadd.f32 %v2422, %v3393
  %3395 = vadd.xlane.f32.xlu0 %v3394
  %v3396 = vpop.xlane.xlu0 %3395
  %v3397 = vsel %vm3308, %v3294, 0.0
  %v3398 = vadd.f32 %v2425, %v3397
  %3399 = vadd.xlane.f32.xlu0 %v3398
  %v3400 = vpop.xlane.xlu0 %3399
  %v3401 = vsel %vm3308, %v3296, 0.0
  %v3402 = vadd.f32 %v2427, %v3401
  %3403 = vadd.xlane.f32.xlu0 %v3402
  %v3404 = vpop.xlane.xlu0 %3403
  %v3405 = vsel %vm3308, %v3299, 0.0
  %v3406 = vadd.f32 %v2430, %v3405
  %3407 = vadd.xlane.f32.xlu0 %v3406
  %v3408 = vpop.xlane.xlu0 %3407
  %v3409 = vsel %vm3308, %v3301, 0.0
  %v3410 = vadd.f32 %v2432, %v3409
  %3411 = vadd.xlane.f32.xlu0 %v3410
  %v3412 = vpop.xlane.xlu0 %3411
  %v3413 = vsel %vm3308, %v3304, 0.0
  %v3414 = vadd.f32 %v2435, %v3413
  %3415 = vadd.xlane.f32.xlu0 %v3414
  %v3416 = vpop.xlane.xlu0 %3415
  %v3417 = vsel %vm3308, %v3306, 0.0
  %v3418 = vadd.f32 %v2437, %v3417
  %3419 = vadd.xlane.f32.xlu0 %v3418
  %v3420 = vpop.xlane.xlu0 %3419
  %v3421 = vmul.f32 %v2370, %v2370
  %v3422 = vmul.f32 %v3239, %v3239
  %v3423 = vmul.f32 %v2372, %v2372
  %v3424 = vmul.f32 %v3241, %v3241
  %v3425 = vmul.f32 %v2375, %v2375
  %v3426 = vmul.f32 %v3244, %v3244
  %v3427 = vmul.f32 %v2377, %v2377
  %v3428 = vmul.f32 %v3246, %v3246
  %v3429 = vmul.f32 %v2380, %v2380
  %v3430 = vmul.f32 %v3249, %v3249
  %v3431 = vmul.f32 %v2382, %v2382
  %v3432 = vmul.f32 %v3251, %v3251
  %v3433 = vmul.f32 %v2385, %v2385
  %v3434 = vmul.f32 %v3254, %v3254
  %v3435 = vmul.f32 %v2387, %v2387
  %v3436 = vmul.f32 %v3256, %v3256
  %v3437 = vmul.f32 %v2390, %v2390
  %v3438 = vmul.f32 %v3259, %v3259
  %v3439 = vmul.f32 %v2392, %v2392
  %v3440 = vmul.f32 %v3261, %v3261
  %v3441 = vmul.f32 %v2395, %v2395
  %v3442 = vmul.f32 %v3264, %v3264
  %v3443 = vmul.f32 %v2397, %v2397
  %v3444 = vmul.f32 %v3266, %v3266
  %v3445 = vmul.f32 %v2400, %v2400
  %v3446 = vmul.f32 %v3269, %v3269
  %v3447 = vmul.f32 %v2402, %v2402
  %v3448 = vmul.f32 %v3271, %v3271
  %v3449 = vmul.f32 %v2405, %v2405
  %v3450 = vmul.f32 %v3274, %v3274
  %v3451 = vmul.f32 %v2407, %v2407
  %v3452 = vmul.f32 %v3276, %v3276
  %v3453 = vmul.f32 %v2410, %v2410
  %v3454 = vmul.f32 %v3279, %v3279
  %v3455 = vmul.f32 %v2412, %v2412
  %v3456 = vmul.f32 %v3281, %v3281
  %v3457 = vmul.f32 %v2415, %v2415
  %v3458 = vmul.f32 %v3284, %v3284
  %v3459 = vmul.f32 %v2417, %v2417
  %v3460 = vmul.f32 %v3286, %v3286
  %v3461 = vmul.f32 %v2420, %v2420
  %v3462 = vmul.f32 %v3289, %v3289
  %v3463 = vmul.f32 %v2422, %v2422
  %v3464 = vmul.f32 %v3291, %v3291
  %v3465 = vmul.f32 %v2425, %v2425
  %v3466 = vmul.f32 %v3294, %v3294
  %v3467 = vmul.f32 %v2427, %v2427
  %v3468 = vmul.f32 %v3296, %v3296
  %v3469 = vmul.f32 %v2430, %v2430
  %v3470 = vmul.f32 %v3299, %v3299
  %v3471 = vmul.f32 %v2432, %v2432
  %v3472 = vmul.f32 %v3301, %v3301
  %v3473 = vmul.f32 %v2435, %v2435
  %v3474 = vmul.f32 %v3304, %v3304
  %v3475 = vmul.f32 %v2437, %v2437
  %v3476 = vmul.f32 %v3306, %v3306
  %v3477 = vsel %vm3308, %v3422, 0.0
  %v3478 = vadd.f32 %v3421, %v3477
  %3479 = vadd.xlane.f32.xlu0 %v3478
  %v3480 = vpop.xlane.xlu0 %3479
  %v3481 = vsel %vm3308, %v3424, 0.0
  %v3482 = vadd.f32 %v3423, %v3481
  %3483 = vadd.xlane.f32.xlu0 %v3482
  %v3484 = vpop.xlane.xlu0 %3483
  %v3485 = vsel %vm3308, %v3426, 0.0
  %v3486 = vadd.f32 %v3425, %v3485
  %3487 = vadd.xlane.f32.xlu0 %v3486
  %v3488 = vpop.xlane.xlu0 %3487
  %v3489 = vsel %vm3308, %v3428, 0.0
  %v3490 = vadd.f32 %v3427, %v3489
  %3491 = vadd.xlane.f32.xlu0 %v3490
  %v3492 = vpop.xlane.xlu0 %3491
  %v3493 = vsel %vm3308, %v3430, 0.0
  %v3494 = vadd.f32 %v3429, %v3493
  %3495 = vadd.xlane.f32.xlu0 %v3494
  %v3496 = vpop.xlane.xlu0 %3495
  %v3497 = vsel %vm3308, %v3432, 0.0
  %v3498 = vadd.f32 %v3431, %v3497
  %3499 = vadd.xlane.f32.xlu0 %v3498
  %v3500 = vpop.xlane.xlu0 %3499
  %v3501 = vsel %vm3308, %v3434, 0.0
  %v3502 = vadd.f32 %v3433, %v3501
  %3503 = vadd.xlane.f32.xlu0 %v3502
  %v3504 = vpop.xlane.xlu0 %3503
  %v3505 = vsel %vm3308, %v3436, 0.0
  %v3506 = vadd.f32 %v3435, %v3505
  %3507 = vadd.xlane.f32.xlu0 %v3506
  %v3508 = vpop.xlane.xlu0 %3507
  %v3509 = vsel %vm3308, %v3438, 0.0
  %v3510 = vadd.f32 %v3437, %v3509
  %3511 = vadd.xlane.f32.xlu0 %v3510
  %v3512 = vpop.xlane.xlu0 %3511
  %v3513 = vsel %vm3308, %v3440, 0.0
  %v3514 = vadd.f32 %v3439, %v3513
  %3515 = vadd.xlane.f32.xlu0 %v3514
  %v3516 = vpop.xlane.xlu0 %3515
  %v3517 = vsel %vm3308, %v3442, 0.0
  %v3518 = vadd.f32 %v3441, %v3517
  %3519 = vadd.xlane.f32.xlu0 %v3518
  %v3520 = vpop.xlane.xlu0 %3519
  %v3521 = vsel %vm3308, %v3444, 0.0
  %v3522 = vadd.f32 %v3443, %v3521
  %3523 = vadd.xlane.f32.xlu0 %v3522
  %v3524 = vpop.xlane.xlu0 %3523
  %v3525 = vsel %vm3308, %v3446, 0.0
  %v3526 = vadd.f32 %v3445, %v3525
  %3527 = vadd.xlane.f32.xlu0 %v3526
  %v3528 = vpop.xlane.xlu0 %3527
  %v3529 = vsel %vm3308, %v3448, 0.0
  %v3530 = vadd.f32 %v3447, %v3529
  %3531 = vadd.xlane.f32.xlu0 %v3530
  %v3532 = vpop.xlane.xlu0 %3531
  %v3533 = vsel %vm3308, %v3450, 0.0
  %v3534 = vadd.f32 %v3449, %v3533
  %3535 = vadd.xlane.f32.xlu0 %v3534
  %v3536 = vpop.xlane.xlu0 %3535
  %v3537 = vsel %vm3308, %v3452, 0.0
  %v3538 = vadd.f32 %v3451, %v3537
  %3539 = vadd.xlane.f32.xlu0 %v3538
  %v3540 = vpop.xlane.xlu0 %3539
  %v3541 = vsel %vm3308, %v3454, 0.0
  %v3542 = vadd.f32 %v3453, %v3541
  %3543 = vadd.xlane.f32.xlu0 %v3542
  %v3544 = vpop.xlane.xlu0 %3543
  %v3545 = vsel %vm3308, %v3456, 0.0
  %v3546 = vadd.f32 %v3455, %v3545
  %3547 = vadd.xlane.f32.xlu0 %v3546
  %v3548 = vpop.xlane.xlu0 %3547
  %v3549 = vsel %vm3308, %v3458, 0.0
  %v3550 = vadd.f32 %v3457, %v3549
  %3551 = vadd.xlane.f32.xlu0 %v3550
  %v3552 = vpop.xlane.xlu0 %3551
  %v3553 = vsel %vm3308, %v3460, 0.0
  %v3554 = vadd.f32 %v3459, %v3553
  %3555 = vadd.xlane.f32.xlu0 %v3554
  %v3556 = vpop.xlane.xlu0 %3555
  %v3557 = vsel %vm3308, %v3462, 0.0
  %v3558 = vadd.f32 %v3461, %v3557
  %3559 = vadd.xlane.f32.xlu0 %v3558
  %v3560 = vpop.xlane.xlu0 %3559
  %v3561 = vsel %vm3308, %v3464, 0.0
  %v3562 = vadd.f32 %v3463, %v3561
  %3563 = vadd.xlane.f32.xlu0 %v3562
  %v3564 = vpop.xlane.xlu0 %3563
  %v3565 = vsel %vm3308, %v3466, 0.0
  %v3566 = vadd.f32 %v3465, %v3565
  %3567 = vadd.xlane.f32.xlu0 %v3566
  %v3568 = vpop.xlane.xlu0 %3567
  %v3569 = vsel %vm3308, %v3468, 0.0
  %v3570 = vadd.f32 %v3467, %v3569
  %3571 = vadd.xlane.f32.xlu0 %v3570
  %v3572 = vpop.xlane.xlu0 %3571
  %v3573 = vsel %vm3308, %v3470, 0.0
  %v3574 = vadd.f32 %v3469, %v3573
  %3575 = vadd.xlane.f32.xlu0 %v3574
  %v3576 = vpop.xlane.xlu0 %3575
  %v3577 = vsel %vm3308, %v3472, 0.0
  %v3578 = vadd.f32 %v3471, %v3577
  %3579 = vadd.xlane.f32.xlu0 %v3578
  %v3580 = vpop.xlane.xlu0 %3579
  %v3581 = vsel %vm3308, %v3474, 0.0
  %v3582 = vadd.f32 %v3473, %v3581
  %3583 = vadd.xlane.f32.xlu0 %v3582
  %v3584 = vpop.xlane.xlu0 %3583
  %v3585 = vsel %vm3308, %v3476, 0.0
  %v3586 = vadd.f32 %v3475, %v3585
  %3587 = vadd.xlane.f32.xlu0 %v3586
  %v3588 = vpop.xlane.xlu0 %3587
  %v3589 = vmul.f32 %v3312, 0.0051020407
  %v3590 = vmul.f32 %v3316, 0.0051020407
  %v3591 = vmul.f32 %v3320, 0.0051020407
  %v3592 = vmul.f32 %v3324, 0.0051020407
  %v3593 = vmul.f32 %v3328, 0.0051020407
  %v3594 = vmul.f32 %v3332, 0.0051020407
  %v3595 = vmul.f32 %v3336, 0.0051020407
  %v3596 = vmul.f32 %v3340, 0.0051020407
  %v3597 = vmul.f32 %v3344, 0.0051020407
  %v3598 = vmul.f32 %v3348, 0.0051020407
  %v3599 = vmul.f32 %v3352, 0.0051020407
  %v3600 = vmul.f32 %v3356, 0.0051020407
  %v3601 = vmul.f32 %v3360, 0.0051020407
  %v3602 = vmul.f32 %v3364, 0.0051020407
  %v3603 = vmul.f32 %v3368, 0.0051020407
  %v3604 = vmul.f32 %v3372, 0.0051020407
  %v3605 = vmul.f32 %v3376, 0.0051020407
  %v3606 = vmul.f32 %v3380, 0.0051020407
  %v3607 = vmul.f32 %v3384, 0.0051020407
  %v3608 = vmul.f32 %v3388, 0.0051020407
  %v3609 = vmul.f32 %v3392, 0.0051020407
  %v3610 = vmul.f32 %v3396, 0.0051020407
  %v3611 = vmul.f32 %v3400, 0.0051020407
  %v3612 = vmul.f32 %v3404, 0.0051020407
  %v3613 = vmul.f32 %v3408, 0.0051020407
  %v3614 = vmul.f32 %v3412, 0.0051020407
  %v3615 = vmul.f32 %v3416, 0.0051020407
  %v3616 = vmul.f32 %v3420, 0.0051020407
  %v3617 = vmul.f32 %v3480, 0.0051020407
  %v3618 = vmul.f32 %v3484, 0.0051020407
  %v3619 = vmul.f32 %v3488, 0.0051020407
  %v3620 = vmul.f32 %v3492, 0.0051020407
  %v3621 = vmul.f32 %v3496, 0.0051020407
  %v3622 = vmul.f32 %v3500, 0.0051020407
  %v3623 = vmul.f32 %v3504, 0.0051020407
  %v3624 = vmul.f32 %v3508, 0.0051020407
  %v3625 = vmul.f32 %v3512, 0.0051020407
  %v3626 = vmul.f32 %v3516, 0.0051020407
  %v3627 = vmul.f32 %v3520, 0.0051020407
  %v3628 = vmul.f32 %v3524, 0.0051020407
  %v3629 = vmul.f32 %v3528, 0.0051020407
  %v3630 = vmul.f32 %v3532, 0.0051020407
  %v3631 = vmul.f32 %v3536, 0.0051020407
  %v3632 = vmul.f32 %v3540, 0.0051020407
  %v3633 = vmul.f32 %v3544, 0.0051020407
  %v3634 = vmul.f32 %v3548, 0.0051020407
  %v3635 = vmul.f32 %v3552, 0.0051020407
  %v3636 = vmul.f32 %v3556, 0.0051020407
  %v3637 = vmul.f32 %v3560, 0.0051020407
  %v3638 = vmul.f32 %v3564, 0.0051020407
  %v3639 = vmul.f32 %v3568, 0.0051020407
  %v3640 = vmul.f32 %v3572, 0.0051020407
  %v3641 = vmul.f32 %v3576, 0.0051020407
  %v3642 = vmul.f32 %v3580, 0.0051020407
  %v3643 = vmul.f32 %v3584, 0.0051020407
  %v3644 = vmul.f32 %v3588, 0.0051020407
  %v3645 = vmul.f32 %v3589, %v3589
  %v3646 = vmul.f32 %v3590, %v3590
  %v3647 = vmul.f32 %v3591, %v3591
  %v3648 = vmul.f32 %v3592, %v3592
  %v3649 = vmul.f32 %v3593, %v3593
  %v3650 = vmul.f32 %v3594, %v3594
  %v3651 = vmul.f32 %v3595, %v3595
  %v3652 = vmul.f32 %v3596, %v3596
  %v3653 = vmul.f32 %v3597, %v3597
  %v3654 = vmul.f32 %v3598, %v3598
  %v3655 = vmul.f32 %v3599, %v3599
  %v3656 = vmul.f32 %v3600, %v3600
  %v3657 = vmul.f32 %v3601, %v3601
  %v3658 = vmul.f32 %v3602, %v3602
  %v3659 = vmul.f32 %v3603, %v3603
  %v3660 = vmul.f32 %v3604, %v3604
  %v3661 = vmul.f32 %v3605, %v3605
  %v3662 = vmul.f32 %v3606, %v3606
  %v3663 = vmul.f32 %v3607, %v3607
  %v3664 = vmul.f32 %v3608, %v3608
  %v3665 = vmul.f32 %v3609, %v3609
  %v3666 = vmul.f32 %v3610, %v3610
  %v3667 = vmul.f32 %v3611, %v3611
  %v3668 = vmul.f32 %v3612, %v3612
  %v3669 = vmul.f32 %v3613, %v3613
  %v3670 = vmul.f32 %v3614, %v3614
  %v3671 = vmul.f32 %v3615, %v3615
  %v3672 = vmul.f32 %v3616, %v3616
  %v3673 = vsub.f32 %v3617, %v3645
  %v3674 = vsub.f32 %v3618, %v3646
  %v3675 = vsub.f32 %v3619, %v3647
  %v3676 = vsub.f32 %v3620, %v3648
  %v3677 = vsub.f32 %v3621, %v3649
  %v3678 = vsub.f32 %v3622, %v3650
  %v3679 = vsub.f32 %v3623, %v3651
  %v3680 = vsub.f32 %v3624, %v3652
  %v3681 = vsub.f32 %v3625, %v3653
  %v3682 = vsub.f32 %v3626, %v3654
  %v3683 = vsub.f32 %v3627, %v3655
  %v3684 = vsub.f32 %v3628, %v3656
  %v3685 = vsub.f32 %v3629, %v3657
  %v3686 = vsub.f32 %v3630, %v3658
  %v3687 = vsub.f32 %v3631, %v3659
  %v3688 = vsub.f32 %v3632, %v3660
  %v3689 = vsub.f32 %v3633, %v3661
  %v3690 = vsub.f32 %v3634, %v3662
  %v3691 = vsub.f32 %v3635, %v3663
  %v3692 = vsub.f32 %v3636, %v3664
  %v3693 = vsub.f32 %v3637, %v3665
  %v3694 = vsub.f32 %v3638, %v3666
  %v3695 = vsub.f32 %v3639, %v3667
  %v3696 = vsub.f32 %v3640, %v3668
  %v3697 = vsub.f32 %v3641, %v3669
  %v3698 = vsub.f32 %v3642, %v3670
  %v3699 = vsub.f32 %v3643, %v3671
  %v3700 = vsub.f32 %v3644, %v3672
  %v3701 = vadd.f32 %v3673, 1e-05
  %v3702 = vadd.f32 %v3674, 1e-05
  %v3703 = vadd.f32 %v3675, 1e-05
  %v3704 = vadd.f32 %v3676, 1e-05
  %v3705 = vadd.f32 %v3677, 1e-05
  %v3706 = vadd.f32 %v3678, 1e-05
  %v3707 = vadd.f32 %v3679, 1e-05
  %v3708 = vadd.f32 %v3680, 1e-05
  %v3709 = vadd.f32 %v3681, 1e-05
  %v3710 = vadd.f32 %v3682, 1e-05
  %v3711 = vadd.f32 %v3683, 1e-05
  %v3712 = vadd.f32 %v3684, 1e-05
  %v3713 = vadd.f32 %v3685, 1e-05
  %v3714 = vadd.f32 %v3686, 1e-05
  %v3715 = vadd.f32 %v3687, 1e-05
  %v3716 = vadd.f32 %v3688, 1e-05
  %v3717 = vadd.f32 %v3689, 1e-05
  %v3718 = vadd.f32 %v3690, 1e-05
  %v3719 = vadd.f32 %v3691, 1e-05
  %v3720 = vadd.f32 %v3692, 1e-05
  %v3721 = vadd.f32 %v3693, 1e-05
  %v3722 = vadd.f32 %v3694, 1e-05
  %v3723 = vadd.f32 %v3695, 1e-05
  %v3724 = vadd.f32 %v3696, 1e-05
  %v3725 = vadd.f32 %v3697, 1e-05
  %v3726 = vadd.f32 %v3698, 1e-05
  %v3727 = vadd.f32 %v3699, 1e-05
  %v3728 = vadd.f32 %v3700, 1e-05
  %v3729 = vrsqrt.pop %v3701
  %v3730 = vmul.f32 %v3729, %v3701
  %v3731 = vmul.f32 %v3730, %v3729
  %v3732 = vmul.f32 0.5, %v3731
  %v3733 = vsub.f32 1.5, %v3732
  %v3734 = vmul.f32 %v3729, %v3733
  %vm3735 = vweird.f32 %v3701
  %vm3736 = vweird.f32 %v3729
  %vm3737 = vmor %vm3735, %vm3736
  %v3738 = vsel %vm3737, %v3729, %v3734
  %v3739 = vrsqrt.pop %v3702
  %v3740 = vmul.f32 %v3739, %v3702
  %v3741 = vmul.f32 %v3740, %v3739
  %v3742 = vmul.f32 0.5, %v3741
  %v3743 = vsub.f32 1.5, %v3742
  %v3744 = vmul.f32 %v3739, %v3743
  %vm3745 = vweird.f32 %v3702
  %vm3746 = vweird.f32 %v3739
  %vm3747 = vmor %vm3745, %vm3746
  %v3748 = vsel %vm3747, %v3739, %v3744
  %v3749 = vrsqrt.pop %v3703
  %v3750 = vmul.f32 %v3749, %v3703
  %v3751 = vmul.f32 %v3750, %v3749
  %v3752 = vmul.f32 0.5, %v3751
  %v3753 = vsub.f32 1.5, %v3752
  %v3754 = vmul.f32 %v3749, %v3753
  %vm3755 = vweird.f32 %v3703
  %vm3756 = vweird.f32 %v3749
  %vm3757 = vmor %vm3755, %vm3756
  %v3758 = vsel %vm3757, %v3749, %v3754
  %v3759 = vrsqrt.pop %v3704
  %v3760 = vmul.f32 %v3759, %v3704
  %v3761 = vmul.f32 %v3760, %v3759
  %v3762 = vmul.f32 0.5, %v3761
  %v3763 = vsub.f32 1.5, %v3762
  %v3764 = vmul.f32 %v3759, %v3763
  %vm3765 = vweird.f32 %v3704
  %vm3766 = vweird.f32 %v3759
  %vm3767 = vmor %vm3765, %vm3766
  %v3768 = vsel %vm3767, %v3759, %v3764
  %v3769 = vrsqrt.pop %v3705
  %v3770 = vmul.f32 %v3769, %v3705
  %v3771 = vmul.f32 %v3770, %v3769
  %v3772 = vmul.f32 0.5, %v3771
  %v3773 = vsub.f32 1.5, %v3772
  %v3774 = vmul.f32 %v3769, %v3773
  %vm3775 = vweird.f32 %v3705
  %vm3776 = vweird.f32 %v3769
  %vm3777 = vmor %vm3775, %vm3776
  %v3778 = vsel %vm3777, %v3769, %v3774
  %v3779 = vrsqrt.pop %v3706
  %v3780 = vmul.f32 %v3779, %v3706
  %v3781 = vmul.f32 %v3780, %v3779
  %v3782 = vmul.f32 0.5, %v3781
  %v3783 = vsub.f32 1.5, %v3782
  %v3784 = vmul.f32 %v3779, %v3783
  %vm3785 = vweird.f32 %v3706
  %vm3786 = vweird.f32 %v3779
  %vm3787 = vmor %vm3785, %vm3786
  %v3788 = vsel %vm3787, %v3779, %v3784
  %v3789 = vrsqrt.pop %v3707
  %v3790 = vmul.f32 %v3789, %v3707
  %v3791 = vmul.f32 %v3790, %v3789
  %v3792 = vmul.f32 0.5, %v3791
  %v3793 = vsub.f32 1.5, %v3792
  %v3794 = vmul.f32 %v3789, %v3793
  %vm3795 = vweird.f32 %v3707
  %vm3796 = vweird.f32 %v3789
  %vm3797 = vmor %vm3795, %vm3796
  %v3798 = vsel %vm3797, %v3789, %v3794
  %v3799 = vrsqrt.pop %v3708
  %v3800 = vmul.f32 %v3799, %v3708
  %v3801 = vmul.f32 %v3800, %v3799
  %v3802 = vmul.f32 0.5, %v3801
  %v3803 = vsub.f32 1.5, %v3802
  %v3804 = vmul.f32 %v3799, %v3803
  %vm3805 = vweird.f32 %v3708
  %vm3806 = vweird.f32 %v3799
  %vm3807 = vmor %vm3805, %vm3806
  %v3808 = vsel %vm3807, %v3799, %v3804
  %v3809 = vrsqrt.pop %v3709
  %v3810 = vmul.f32 %v3809, %v3709
  %v3811 = vmul.f32 %v3810, %v3809
  %v3812 = vmul.f32 0.5, %v3811
  %v3813 = vsub.f32 1.5, %v3812
  %v3814 = vmul.f32 %v3809, %v3813
  %vm3815 = vweird.f32 %v3709
  %vm3816 = vweird.f32 %v3809
  %vm3817 = vmor %vm3815, %vm3816
  %v3818 = vsel %vm3817, %v3809, %v3814
  %v3819 = vrsqrt.pop %v3710
  %v3820 = vmul.f32 %v3819, %v3710
  %v3821 = vmul.f32 %v3820, %v3819
  %v3822 = vmul.f32 0.5, %v3821
  %v3823 = vsub.f32 1.5, %v3822
  %v3824 = vmul.f32 %v3819, %v3823
  %vm3825 = vweird.f32 %v3710
  %vm3826 = vweird.f32 %v3819
  %vm3827 = vmor %vm3825, %vm3826
  %v3828 = vsel %vm3827, %v3819, %v3824
  %v3829 = vrsqrt.pop %v3711
  %v3830 = vmul.f32 %v3829, %v3711
  %v3831 = vmul.f32 %v3830, %v3829
  %v3832 = vmul.f32 0.5, %v3831
  %v3833 = vsub.f32 1.5, %v3832
  %v3834 = vmul.f32 %v3829, %v3833
  %vm3835 = vweird.f32 %v3711
  %vm3836 = vweird.f32 %v3829
  %vm3837 = vmor %vm3835, %vm3836
  %v3838 = vsel %vm3837, %v3829, %v3834
  %v3839 = vrsqrt.pop %v3712
  %v3840 = vmul.f32 %v3839, %v3712
  %v3841 = vmul.f32 %v3840, %v3839
  %v3842 = vmul.f32 0.5, %v3841
  %v3843 = vsub.f32 1.5, %v3842
  %v3844 = vmul.f32 %v3839, %v3843
  %vm3845 = vweird.f32 %v3712
  %vm3846 = vweird.f32 %v3839
  %vm3847 = vmor %vm3845, %vm3846
  %v3848 = vsel %vm3847, %v3839, %v3844
  %v3849 = vrsqrt.pop %v3713
  %v3850 = vmul.f32 %v3849, %v3713
  %v3851 = vmul.f32 %v3850, %v3849
  %v3852 = vmul.f32 0.5, %v3851
  %v3853 = vsub.f32 1.5, %v3852
  %v3854 = vmul.f32 %v3849, %v3853
  %vm3855 = vweird.f32 %v3713
  %vm3856 = vweird.f32 %v3849
  %vm3857 = vmor %vm3855, %vm3856
  %v3858 = vsel %vm3857, %v3849, %v3854
  %v3859 = vrsqrt.pop %v3714
  %v3860 = vmul.f32 %v3859, %v3714
  %v3861 = vmul.f32 %v3860, %v3859
  %v3862 = vmul.f32 0.5, %v3861
  %v3863 = vsub.f32 1.5, %v3862
  %v3864 = vmul.f32 %v3859, %v3863
  %vm3865 = vweird.f32 %v3714
  %vm3866 = vweird.f32 %v3859
  %vm3867 = vmor %vm3865, %vm3866
  %v3868 = vsel %vm3867, %v3859, %v3864
  %v3869 = vrsqrt.pop %v3715
  %v3870 = vmul.f32 %v3869, %v3715
  %v3871 = vmul.f32 %v3870, %v3869
  %v3872 = vmul.f32 0.5, %v3871
  %v3873 = vsub.f32 1.5, %v3872
  %v3874 = vmul.f32 %v3869, %v3873
  %vm3875 = vweird.f32 %v3715
  %vm3876 = vweird.f32 %v3869
  %vm3877 = vmor %vm3875, %vm3876
  %v3878 = vsel %vm3877, %v3869, %v3874
  %v3879 = vrsqrt.pop %v3716
  %v3880 = vmul.f32 %v3879, %v3716
  %v3881 = vmul.f32 %v3880, %v3879
  %v3882 = vmul.f32 0.5, %v3881
  %v3883 = vsub.f32 1.5, %v3882
  %v3884 = vmul.f32 %v3879, %v3883
  %vm3885 = vweird.f32 %v3716
  %vm3886 = vweird.f32 %v3879
  %vm3887 = vmor %vm3885, %vm3886
  %v3888 = vsel %vm3887, %v3879, %v3884
  %v3889 = vrsqrt.pop %v3717
  %v3890 = vmul.f32 %v3889, %v3717
  %v3891 = vmul.f32 %v3890, %v3889
  %v3892 = vmul.f32 0.5, %v3891
  %v3893 = vsub.f32 1.5, %v3892
  %v3894 = vmul.f32 %v3889, %v3893
  %vm3895 = vweird.f32 %v3717
  %vm3896 = vweird.f32 %v3889
  %vm3897 = vmor %vm3895, %vm3896
  %v3898 = vsel %vm3897, %v3889, %v3894
  %v3899 = vrsqrt.pop %v3718
  %v3900 = vmul.f32 %v3899, %v3718
  %v3901 = vmul.f32 %v3900, %v3899
  %v3902 = vmul.f32 0.5, %v3901
  %v3903 = vsub.f32 1.5, %v3902
  %v3904 = vmul.f32 %v3899, %v3903
  %vm3905 = vweird.f32 %v3718
  %vm3906 = vweird.f32 %v3899
  %vm3907 = vmor %vm3905, %vm3906
  %v3908 = vsel %vm3907, %v3899, %v3904
  %v3909 = vrsqrt.pop %v3719
  %v3910 = vmul.f32 %v3909, %v3719
  %v3911 = vmul.f32 %v3910, %v3909
  %v3912 = vmul.f32 0.5, %v3911
  %v3913 = vsub.f32 1.5, %v3912
  %v3914 = vmul.f32 %v3909, %v3913
  %vm3915 = vweird.f32 %v3719
  %vm3916 = vweird.f32 %v3909
  %vm3917 = vmor %vm3915, %vm3916
  %v3918 = vsel %vm3917, %v3909, %v3914
  %v3919 = vrsqrt.pop %v3720
  %v3920 = vmul.f32 %v3919, %v3720
  %v3921 = vmul.f32 %v3920, %v3919
  %v3922 = vmul.f32 0.5, %v3921
  %v3923 = vsub.f32 1.5, %v3922
  %v3924 = vmul.f32 %v3919, %v3923
  %vm3925 = vweird.f32 %v3720
  %vm3926 = vweird.f32 %v3919
  %vm3927 = vmor %vm3925, %vm3926
  %v3928 = vsel %vm3927, %v3919, %v3924
  %v3929 = vrsqrt.pop %v3721
  %v3930 = vmul.f32 %v3929, %v3721
  %v3931 = vmul.f32 %v3930, %v3929
  %v3932 = vmul.f32 0.5, %v3931
  %v3933 = vsub.f32 1.5, %v3932
  %v3934 = vmul.f32 %v3929, %v3933
  %vm3935 = vweird.f32 %v3721
  %vm3936 = vweird.f32 %v3929
  %vm3937 = vmor %vm3935, %vm3936
  %v3938 = vsel %vm3937, %v3929, %v3934
  %v3939 = vrsqrt.pop %v3722
  %v3940 = vmul.f32 %v3939, %v3722
  %v3941 = vmul.f32 %v3940, %v3939
  %v3942 = vmul.f32 0.5, %v3941
  %v3943 = vsub.f32 1.5, %v3942
  %v3944 = vmul.f32 %v3939, %v3943
  %vm3945 = vweird.f32 %v3722
  %vm3946 = vweird.f32 %v3939
  %vm3947 = vmor %vm3945, %vm3946
  %v3948 = vsel %vm3947, %v3939, %v3944
  %v3949 = vrsqrt.pop %v3723
  %v3950 = vmul.f32 %v3949, %v3723
  %v3951 = vmul.f32 %v3950, %v3949
  %v3952 = vmul.f32 0.5, %v3951
  %v3953 = vsub.f32 1.5, %v3952
  %v3954 = vmul.f32 %v3949, %v3953
  %vm3955 = vweird.f32 %v3723
  %vm3956 = vweird.f32 %v3949
  %vm3957 = vmor %vm3955, %vm3956
  %v3958 = vsel %vm3957, %v3949, %v3954
  %v3959 = vrsqrt.pop %v3724
  %v3960 = vmul.f32 %v3959, %v3724
  %v3961 = vmul.f32 %v3960, %v3959
  %v3962 = vmul.f32 0.5, %v3961
  %v3963 = vsub.f32 1.5, %v3962
  %v3964 = vmul.f32 %v3959, %v3963
  %vm3965 = vweird.f32 %v3724
  %vm3966 = vweird.f32 %v3959
  %vm3967 = vmor %vm3965, %vm3966
  %v3968 = vsel %vm3967, %v3959, %v3964
  %v3969 = vrsqrt.pop %v3725
  %v3970 = vmul.f32 %v3969, %v3725
  %v3971 = vmul.f32 %v3970, %v3969
  %v3972 = vmul.f32 0.5, %v3971
  %v3973 = vsub.f32 1.5, %v3972
  %v3974 = vmul.f32 %v3969, %v3973
  %vm3975 = vweird.f32 %v3725
  %vm3976 = vweird.f32 %v3969
  %vm3977 = vmor %vm3975, %vm3976
  %v3978 = vsel %vm3977, %v3969, %v3974
  %v3979 = vrsqrt.pop %v3726
  %v3980 = vmul.f32 %v3979, %v3726
  %v3981 = vmul.f32 %v3980, %v3979
  %v3982 = vmul.f32 0.5, %v3981
  %v3983 = vsub.f32 1.5, %v3982
  %v3984 = vmul.f32 %v3979, %v3983
  %vm3985 = vweird.f32 %v3726
  %vm3986 = vweird.f32 %v3979
  %vm3987 = vmor %vm3985, %vm3986
  %v3988 = vsel %vm3987, %v3979, %v3984
  %v3989 = vrsqrt.pop %v3727
  %v3990 = vmul.f32 %v3989, %v3727
  %v3991 = vmul.f32 %v3990, %v3989
  %v3992 = vmul.f32 0.5, %v3991
  %v3993 = vsub.f32 1.5, %v3992
  %v3994 = vmul.f32 %v3989, %v3993
  %vm3995 = vweird.f32 %v3727
  %vm3996 = vweird.f32 %v3989
  %vm3997 = vmor %vm3995, %vm3996
  %v3998 = vsel %vm3997, %v3989, %v3994
  %v3999 = vrsqrt.pop %v3728
  %v4000 = vmul.f32 %v3999, %v3728
  %v4001 = vmul.f32 %v4000, %v3999
  %v4002 = vmul.f32 0.5, %v4001
  %v4003 = vsub.f32 1.5, %v4002
  %v4004 = vmul.f32 %v3999, %v4003
  %vm4005 = vweird.f32 %v3728
  %vm4006 = vweird.f32 %v3999
  %vm4007 = vmor %vm4005, %vm4006
  %v4008 = vsel %vm4007, %v3999, %v4004
  %v4009 = vld [vmem:[%s3] sm:$0xff]
  %v4010 = vld [vmem:[%s3 + $0x8] sm:$0xff]
  %v4011 = vld [vmem:[%s3 + $0x10] sm:$0xff]
  %v4012 = vld [vmem:[%s3 + $0x18] sm:$0xff]
  %v4013 = vld [vmem:[%s3 + $0x20] sm:$0xff]
  %v4014 = vld [vmem:[%s3 + $0x28] sm:$0xff]
  %v4015 = vld [vmem:[%s3 + $0x30] sm:$0xff]
  %v4016 = vld [vmem:[%s3 + $0x38] sm:$0xff]
  %v4017 = vld [vmem:[%s3 + $0x40] sm:$0xff]
  %v4018 = vld [vmem:[%s3 + $0x48] sm:$0xff]
  %v4019 = vld [vmem:[%s3 + $0x50] sm:$0xff]
  %v4020 = vld [vmem:[%s3 + $0x58] sm:$0xff]
  %v4021 = vld [vmem:[%s3 + $0x60] sm:$0xff]
  %v4022 = vld [vmem:[%s3 + $0x68] sm:$0xff]
  %v4023 = vld [vmem:[%s3 + $0x70] sm:$0xff]
  %v4024 = vld [vmem:[%s3 + $0x78] sm:$0xff]
  %v4025 = vld [vmem:[%s3 + $0x80] sm:$0xff]
  %v4026 = vld [vmem:[%s3 + $0x88] sm:$0xff]
  %v4027 = vld [vmem:[%s3 + $0x90] sm:$0xff]
  %v4028 = vld [vmem:[%s3 + $0x98] sm:$0xff]
  %v4029 = vld [vmem:[%s3 + $0xa0] sm:$0xff]
  %v4030 = vld [vmem:[%s3 + $0xa8] sm:$0xff]
  %v4031 = vld [vmem:[%s3 + $0xb0] sm:$0xff]
  %v4032 = vld [vmem:[%s3 + $0xb8] sm:$0xff]
  %v4033 = vld [vmem:[%s3 + $0xc0] sm:$0xff]
  %v4034 = vld [vmem:[%s3 + $0xc8] sm:$0xff]
  %v4035 = vld [vmem:[%s3 + $0xd0] sm:$0xff]
  %v4036 = vld [vmem:[%s3 + $0xd8] sm:$0xff]
  %v4037 = vmul.f32 %v3738, %v4009
  %v4038 = vmul.f32 %v3748, %v4010
  %v4039 = vmul.f32 %v3758, %v4011
  %v4040 = vmul.f32 %v3768, %v4012
  %v4041 = vmul.f32 %v3778, %v4013
  %v4042 = vmul.f32 %v3788, %v4014
  %v4043 = vmul.f32 %v3798, %v4015
  %v4044 = vmul.f32 %v3808, %v4016
  %v4045 = vmul.f32 %v3818, %v4017
  %v4046 = vmul.f32 %v3828, %v4018
  %v4047 = vmul.f32 %v3838, %v4019
  %v4048 = vmul.f32 %v3848, %v4020
  %v4049 = vmul.f32 %v3858, %v4021
  %v4050 = vmul.f32 %v3868, %v4022
  %v4051 = vmul.f32 %v3878, %v4023
  %v4052 = vmul.f32 %v3888, %v4024
  %v4053 = vmul.f32 %v3898, %v4025
  %v4054 = vmul.f32 %v3908, %v4026
  %v4055 = vmul.f32 %v3918, %v4027
  %v4056 = vmul.f32 %v3928, %v4028
  %v4057 = vmul.f32 %v3938, %v4029
  %v4058 = vmul.f32 %v3948, %v4030
  %v4059 = vmul.f32 %v3958, %v4031
  %v4060 = vmul.f32 %v3968, %v4032
  %v4061 = vmul.f32 %v3978, %v4033
  %v4062 = vmul.f32 %v3988, %v4034
  %v4063 = vmul.f32 %v3998, %v4035
  %v4064 = vmul.f32 %v4008, %v4036
  %v4065 = vld [vmem:[%s4] sm:$0xff]
  %v4066 = vld [vmem:[%s4 + $0x8] sm:$0xff]
  %v4067 = vld [vmem:[%s4 + $0x10] sm:$0xff]
  %v4068 = vld [vmem:[%s4 + $0x18] sm:$0xff]
  %v4069 = vld [vmem:[%s4 + $0x20] sm:$0xff]
  %v4070 = vld [vmem:[%s4 + $0x28] sm:$0xff]
  %v4071 = vld [vmem:[%s4 + $0x30] sm:$0xff]
  %v4072 = vld [vmem:[%s4 + $0x38] sm:$0xff]
  %v4073 = vld [vmem:[%s4 + $0x40] sm:$0xff]
  %v4074 = vld [vmem:[%s4 + $0x48] sm:$0xff]
  %v4075 = vld [vmem:[%s4 + $0x50] sm:$0xff]
  %v4076 = vld [vmem:[%s4 + $0x58] sm:$0xff]
  %v4077 = vld [vmem:[%s4 + $0x60] sm:$0xff]
  %v4078 = vld [vmem:[%s4 + $0x68] sm:$0xff]
  %v4079 = vld [vmem:[%s4 + $0x70] sm:$0xff]
  %v4080 = vld [vmem:[%s4 + $0x78] sm:$0xff]
  %v4081 = vld [vmem:[%s4 + $0x80] sm:$0xff]
  %v4082 = vld [vmem:[%s4 + $0x88] sm:$0xff]
  %v4083 = vld [vmem:[%s4 + $0x90] sm:$0xff]
  %v4084 = vld [vmem:[%s4 + $0x98] sm:$0xff]
  %v4085 = vld [vmem:[%s4 + $0xa0] sm:$0xff]
  %v4086 = vld [vmem:[%s4 + $0xa8] sm:$0xff]
  %v4087 = vld [vmem:[%s4 + $0xb0] sm:$0xff]
  %v4088 = vld [vmem:[%s4 + $0xb8] sm:$0xff]
  %v4089 = vld [vmem:[%s4 + $0xc0] sm:$0xff]
  %v4090 = vld [vmem:[%s4 + $0xc8] sm:$0xff]
  %v4091 = vld [vmem:[%s4 + $0xd0] sm:$0xff]
  %v4092 = vld [vmem:[%s4 + $0xd8] sm:$0xff]
  %v4093 = vmul.f32 %v3589, %v4037
  %v4094 = vmul.f32 %v3590, %v4038
  %v4095 = vmul.f32 %v3591, %v4039
  %v4096 = vmul.f32 %v3592, %v4040
  %v4097 = vmul.f32 %v3593, %v4041
  %v4098 = vmul.f32 %v3594, %v4042
  %v4099 = vmul.f32 %v3595, %v4043
  %v4100 = vmul.f32 %v3596, %v4044
  %v4101 = vmul.f32 %v3597, %v4045
  %v4102 = vmul.f32 %v3598, %v4046
  %v4103 = vmul.f32 %v3599, %v4047
  %v4104 = vmul.f32 %v3600, %v4048
  %v4105 = vmul.f32 %v3601, %v4049
  %v4106 = vmul.f32 %v3602, %v4050
  %v4107 = vmul.f32 %v3603, %v4051
  %v4108 = vmul.f32 %v3604, %v4052
  %v4109 = vmul.f32 %v3605, %v4053
  %v4110 = vmul.f32 %v3606, %v4054
  %v4111 = vmul.f32 %v3607, %v4055
  %v4112 = vmul.f32 %v3608, %v4056
  %v4113 = vmul.f32 %v3609, %v4057
  %v4114 = vmul.f32 %v3610, %v4058
  %v4115 = vmul.f32 %v3611, %v4059
  %v4116 = vmul.f32 %v3612, %v4060
  %v4117 = vmul.f32 %v3613, %v4061
  %v4118 = vmul.f32 %v3614, %v4062
  %v4119 = vmul.f32 %v3615, %v4063
  %v4120 = vmul.f32 %v3616, %v4064
  %v4121 = vsub.f32 %v4065, %v4093
  %v4122 = vsub.f32 %v4066, %v4094
  %v4123 = vsub.f32 %v4067, %v4095
  %v4124 = vsub.f32 %v4068, %v4096
  %v4125 = vsub.f32 %v4069, %v4097
  %v4126 = vsub.f32 %v4070, %v4098
  %v4127 = vsub.f32 %v4071, %v4099
  %v4128 = vsub.f32 %v4072, %v4100
  %v4129 = vsub.f32 %v4073, %v4101
  %v4130 = vsub.f32 %v4074, %v4102
  %v4131 = vsub.f32 %v4075, %v4103
  %v4132 = vsub.f32 %v4076, %v4104
  %v4133 = vsub.f32 %v4077, %v4105
  %v4134 = vsub.f32 %v4078, %v4106
  %v4135 = vsub.f32 %v4079, %v4107
  %v4136 = vsub.f32 %v4080, %v4108
  %v4137 = vsub.f32 %v4081, %v4109
  %v4138 = vsub.f32 %v4082, %v4110
  %v4139 = vsub.f32 %v4083, %v4111
  %v4140 = vsub.f32 %v4084, %v4112
  %v4141 = vsub.f32 %v4085, %v4113
  %v4142 = vsub.f32 %v4086, %v4114
  %v4143 = vsub.f32 %v4087, %v4115
  %v4144 = vsub.f32 %v4088, %v4116
  %v4145 = vsub.f32 %v4089, %v4117
  %v4146 = vsub.f32 %v4090, %v4118
  %v4147 = vsub.f32 %v4091, %v4119
  %v4148 = vsub.f32 %v4092, %v4120
  %4150 = vset.pattern.permute.xlu0 0
  %4151 = vperm.xlu0 %4150, %v4037
  %v4152 = vpop.permute.xlu0 %4151
  %4155 = vset.pattern.permute.xlu0 0
  %4156 = vperm.xlu0 %4155, %v4038
  %v4157 = vpop.permute.xlu0 %4156
  %4160 = vset.pattern.permute.xlu0 0
  %4161 = vperm.xlu0 %4160, %v4039
  %v4162 = vpop.permute.xlu0 %4161
  %4165 = vset.pattern.permute.xlu0 0
  %4166 = vperm.xlu0 %4165, %v4040
  %v4167 = vpop.permute.xlu0 %4166
  %4170 = vset.pattern.permute.xlu0 0
  %4171 = vperm.xlu0 %4170, %v4041
  %v4172 = vpop.permute.xlu0 %4171
  %4175 = vset.pattern.permute.xlu0 0
  %4176 = vperm.xlu0 %4175, %v4042
  %v4177 = vpop.permute.xlu0 %4176
  %4180 = vset.pattern.permute.xlu0 0
  %4181 = vperm.xlu0 %4180, %v4043
  %v4182 = vpop.permute.xlu0 %4181
  %4185 = vset.pattern.permute.xlu0 0
  %4186 = vperm.xlu0 %4185, %v4044
  %v4187 = vpop.permute.xlu0 %4186
  %4190 = vset.pattern.permute.xlu0 0
  %4191 = vperm.xlu0 %4190, %v4045
  %v4192 = vpop.permute.xlu0 %4191
  %4195 = vset.pattern.permute.xlu0 0
  %4196 = vperm.xlu0 %4195, %v4046
  %v4197 = vpop.permute.xlu0 %4196
  %4200 = vset.pattern.permute.xlu0 0
  %4201 = vperm.xlu0 %4200, %v4047
  %v4202 = vpop.permute.xlu0 %4201
  %4205 = vset.pattern.permute.xlu0 0
  %4206 = vperm.xlu0 %4205, %v4048
  %v4207 = vpop.permute.xlu0 %4206
  %4210 = vset.pattern.permute.xlu0 0
  %4211 = vperm.xlu0 %4210, %v4049
  %v4212 = vpop.permute.xlu0 %4211
  %4215 = vset.pattern.permute.xlu0 0
  %4216 = vperm.xlu0 %4215, %v4050
  %v4217 = vpop.permute.xlu0 %4216
  %4220 = vset.pattern.permute.xlu0 0
  %4221 = vperm.xlu0 %4220, %v4051
  %v4222 = vpop.permute.xlu0 %4221
  %4225 = vset.pattern.permute.xlu0 0
  %4226 = vperm.xlu0 %4225, %v4052
  %v4227 = vpop.permute.xlu0 %4226
  %4230 = vset.pattern.permute.xlu0 0
  %4231 = vperm.xlu0 %4230, %v4053
  %v4232 = vpop.permute.xlu0 %4231
  %4235 = vset.pattern.permute.xlu0 0
  %4236 = vperm.xlu0 %4235, %v4054
  %v4237 = vpop.permute.xlu0 %4236
  %4240 = vset.pattern.permute.xlu0 0
  %4241 = vperm.xlu0 %4240, %v4055
  %v4242 = vpop.permute.xlu0 %4241
  %4245 = vset.pattern.permute.xlu0 0
  %4246 = vperm.xlu0 %4245, %v4056
  %v4247 = vpop.permute.xlu0 %4246
  %4250 = vset.pattern.permute.xlu0 0
  %4251 = vperm.xlu0 %4250, %v4057
  %v4252 = vpop.permute.xlu0 %4251
  %4255 = vset.pattern.permute.xlu0 0
  %4256 = vperm.xlu0 %4255, %v4058
  %v4257 = vpop.permute.xlu0 %4256
  %4260 = vset.pattern.permute.xlu0 0
  %4261 = vperm.xlu0 %4260, %v4059
  %v4262 = vpop.permute.xlu0 %4261
  %4265 = vset.pattern.permute.xlu0 0
  %4266 = vperm.xlu0 %4265, %v4060
  %v4267 = vpop.permute.xlu0 %4266
  %4270 = vset.pattern.permute.xlu0 0
  %4271 = vperm.xlu0 %4270, %v4061
  %v4272 = vpop.permute.xlu0 %4271
  %4275 = vset.pattern.permute.xlu0 0
  %4276 = vperm.xlu0 %4275, %v4062
  %v4277 = vpop.permute.xlu0 %4276
  %4280 = vset.pattern.permute.xlu0 0
  %4281 = vperm.xlu0 %4280, %v4063
  %v4282 = vpop.permute.xlu0 %4281
  %4285 = vset.pattern.permute.xlu0 0
  %4286 = vperm.xlu0 %4285, %v4064
  %v4287 = vpop.permute.xlu0 %4286
  %v4289 = vmul.f32 %v2370, %v4152
  %v4290 = vmul.f32 %v3239, %v4152
  %v4291 = vmul.f32 %v2372, %v4157
  %v4292 = vmul.f32 %v3241, %v4157
  %v4293 = vmul.f32 %v2375, %v4162
  %v4294 = vmul.f32 %v3244, %v4162
  %v4295 = vmul.f32 %v2377, %v4167
  %v4296 = vmul.f32 %v3246, %v4167
  %v4297 = vmul.f32 %v2380, %v4172
  %v4298 = vmul.f32 %v3249, %v4172
  %v4299 = vmul.f32 %v2382, %v4177
  %v4300 = vmul.f32 %v3251, %v4177
  %v4301 = vmul.f32 %v2385, %v4182
  %v4302 = vmul.f32 %v3254, %v4182
  %v4303 = vmul.f32 %v2387, %v4187
  %v4304 = vmul.f32 %v3256, %v4187
  %v4305 = vmul.f32 %v2390, %v4192
  %v4306 = vmul.f32 %v3259, %v4192
  %v4307 = vmul.f32 %v2392, %v4197
  %v4308 = vmul.f32 %v3261, %v4197
  %v4309 = vmul.f32 %v2395, %v4202
  %v4310 = vmul.f32 %v3264, %v4202
  %v4311 = vmul.f32 %v2397, %v4207
  %v4312 = vmul.f32 %v3266, %v4207
  %v4313 = vmul.f32 %v2400, %v4212
  %v4314 = vmul.f32 %v3269, %v4212
  %v4315 = vmul.f32 %v2402, %v4217
  %v4316 = vmul.f32 %v3271, %v4217
  %v4317 = vmul.f32 %v2405, %v4222
  %v4318 = vmul.f32 %v3274, %v4222
  %v4319 = vmul.f32 %v2407, %v4227
  %v4320 = vmul.f32 %v3276, %v4227
  %v4321 = vmul.f32 %v2410, %v4232
  %v4322 = vmul.f32 %v3279, %v4232
  %v4323 = vmul.f32 %v2412, %v4237
  %v4324 = vmul.f32 %v3281, %v4237
  %v4325 = vmul.f32 %v2415, %v4242
  %v4326 = vmul.f32 %v3284, %v4242
  %v4327 = vmul.f32 %v2417, %v4247
  %v4328 = vmul.f32 %v3286, %v4247
  %v4329 = vmul.f32 %v2420, %v4252
  %v4330 = vmul.f32 %v3289, %v4252
  %v4331 = vmul.f32 %v2422, %v4257
  %v4332 = vmul.f32 %v3291, %v4257
  %v4333 = vmul.f32 %v2425, %v4262
  %v4334 = vmul.f32 %v3294, %v4262
  %v4335 = vmul.f32 %v2427, %v4267
  %v4336 = vmul.f32 %v3296, %v4267
  %v4337 = vmul.f32 %v2430, %v4272
  %v4338 = vmul.f32 %v3299, %v4272
  %v4339 = vmul.f32 %v2432, %v4277
  %v4340 = vmul.f32 %v3301, %v4277
  %v4341 = vmul.f32 %v2435, %v4282
  %v4342 = vmul.f32 %v3304, %v4282
  %v4343 = vmul.f32 %v2437, %v4287
  %v4344 = vmul.f32 %v3306, %v4287
  %4346 = vset.pattern.permute.xlu0 0
  %4347 = vperm.xlu0 %4346, %v4121
  %v4348 = vpop.permute.xlu0 %4347
  %4351 = vset.pattern.permute.xlu0 0
  %4352 = vperm.xlu0 %4351, %v4122
  %v4353 = vpop.permute.xlu0 %4352
  %4356 = vset.pattern.permute.xlu0 0
  %4357 = vperm.xlu0 %4356, %v4123
  %v4358 = vpop.permute.xlu0 %4357
  %4361 = vset.pattern.permute.xlu0 0
  %4362 = vperm.xlu0 %4361, %v4124
  %v4363 = vpop.permute.xlu0 %4362
  %4366 = vset.pattern.permute.xlu0 0
  %4367 = vperm.xlu0 %4366, %v4125
  %v4368 = vpop.permute.xlu0 %4367
  %4371 = vset.pattern.permute.xlu0 0
  %4372 = vperm.xlu0 %4371, %v4126
  %v4373 = vpop.permute.xlu0 %4372
  %4376 = vset.pattern.permute.xlu0 0
  %4377 = vperm.xlu0 %4376, %v4127
  %v4378 = vpop.permute.xlu0 %4377
  %4381 = vset.pattern.permute.xlu0 0
  %4382 = vperm.xlu0 %4381, %v4128
  %v4383 = vpop.permute.xlu0 %4382
  %4386 = vset.pattern.permute.xlu0 0
  %4387 = vperm.xlu0 %4386, %v4129
  %v4388 = vpop.permute.xlu0 %4387
  %4391 = vset.pattern.permute.xlu0 0
  %4392 = vperm.xlu0 %4391, %v4130
  %v4393 = vpop.permute.xlu0 %4392
  %4396 = vset.pattern.permute.xlu0 0
  %4397 = vperm.xlu0 %4396, %v4131
  %v4398 = vpop.permute.xlu0 %4397
  %4401 = vset.pattern.permute.xlu0 0
  %4402 = vperm.xlu0 %4401, %v4132
  %v4403 = vpop.permute.xlu0 %4402
  %4406 = vset.pattern.permute.xlu0 0
  %4407 = vperm.xlu0 %4406, %v4133
  %v4408 = vpop.permute.xlu0 %4407
  %4411 = vset.pattern.permute.xlu0 0
  %4412 = vperm.xlu0 %4411, %v4134
  %v4413 = vpop.permute.xlu0 %4412
  %4416 = vset.pattern.permute.xlu0 0
  %4417 = vperm.xlu0 %4416, %v4135
  %v4418 = vpop.permute.xlu0 %4417
  %4421 = vset.pattern.permute.xlu0 0
  %4422 = vperm.xlu0 %4421, %v4136
  %v4423 = vpop.permute.xlu0 %4422
  %4426 = vset.pattern.permute.xlu0 0
  %4427 = vperm.xlu0 %4426, %v4137
  %v4428 = vpop.permute.xlu0 %4427
  %4431 = vset.pattern.permute.xlu0 0
  %4432 = vperm.xlu0 %4431, %v4138
  %v4433 = vpop.permute.xlu0 %4432
  %4436 = vset.pattern.permute.xlu0 0
  %4437 = vperm.xlu0 %4436, %v4139
  %v4438 = vpop.permute.xlu0 %4437
  %4441 = vset.pattern.permute.xlu0 0
  %4442 = vperm.xlu0 %4441, %v4140
  %v4443 = vpop.permute.xlu0 %4442
  %4446 = vset.pattern.permute.xlu0 0
  %4447 = vperm.xlu0 %4446, %v4141
  %v4448 = vpop.permute.xlu0 %4447
  %4451 = vset.pattern.permute.xlu0 0
  %4452 = vperm.xlu0 %4451, %v4142
  %v4453 = vpop.permute.xlu0 %4452
  %4456 = vset.pattern.permute.xlu0 0
  %4457 = vperm.xlu0 %4456, %v4143
  %v4458 = vpop.permute.xlu0 %4457
  %4461 = vset.pattern.permute.xlu0 0
  %4462 = vperm.xlu0 %4461, %v4144
  %v4463 = vpop.permute.xlu0 %4462
  %4466 = vset.pattern.permute.xlu0 0
  %4467 = vperm.xlu0 %4466, %v4145
  %v4468 = vpop.permute.xlu0 %4467
  %4471 = vset.pattern.permute.xlu0 0
  %4472 = vperm.xlu0 %4471, %v4146
  %v4473 = vpop.permute.xlu0 %4472
  %4476 = vset.pattern.permute.xlu0 0
  %4477 = vperm.xlu0 %4476, %v4147
  %v4478 = vpop.permute.xlu0 %4477
  %4481 = vset.pattern.permute.xlu0 0
  %4482 = vperm.xlu0 %4481, %v4148
  %v4483 = vpop.permute.xlu0 %4482
  %v4485 = vadd.f32 %v4289, %v4348
  %v4486 = vadd.f32 %v4290, %v4348
  %v4487 = vadd.f32 %v4291, %v4353
  %v4488 = vadd.f32 %v4292, %v4353
  %v4489 = vadd.f32 %v4293, %v4358
  %v4490 = vadd.f32 %v4294, %v4358
  %v4491 = vadd.f32 %v4295, %v4363
  %v4492 = vadd.f32 %v4296, %v4363
  %v4493 = vadd.f32 %v4297, %v4368
  %v4494 = vadd.f32 %v4298, %v4368
  %v4495 = vadd.f32 %v4299, %v4373
  %v4496 = vadd.f32 %v4300, %v4373
  %v4497 = vadd.f32 %v4301, %v4378
  %v4498 = vadd.f32 %v4302, %v4378
  %v4499 = vadd.f32 %v4303, %v4383
  %v4500 = vadd.f32 %v4304, %v4383
  %v4501 = vadd.f32 %v4305, %v4388
  %v4502 = vadd.f32 %v4306, %v4388
  %v4503 = vadd.f32 %v4307, %v4393
  %v4504 = vadd.f32 %v4308, %v4393
  %v4505 = vadd.f32 %v4309, %v4398
  %v4506 = vadd.f32 %v4310, %v4398
  %v4507 = vadd.f32 %v4311, %v4403
  %v4508 = vadd.f32 %v4312, %v4403
  %v4509 = vadd.f32 %v4313, %v4408
  %v4510 = vadd.f32 %v4314, %v4408
  %v4511 = vadd.f32 %v4315, %v4413
  %v4512 = vadd.f32 %v4316, %v4413
  %v4513 = vadd.f32 %v4317, %v4418
  %v4514 = vadd.f32 %v4318, %v4418
  %v4515 = vadd.f32 %v4319, %v4423
  %v4516 = vadd.f32 %v4320, %v4423
  %v4517 = vadd.f32 %v4321, %v4428
  %v4518 = vadd.f32 %v4322, %v4428
  %v4519 = vadd.f32 %v4323, %v4433
  %v4520 = vadd.f32 %v4324, %v4433
  %v4521 = vadd.f32 %v4325, %v4438
  %v4522 = vadd.f32 %v4326, %v4438
  %v4523 = vadd.f32 %v4327, %v4443
  %v4524 = vadd.f32 %v4328, %v4443
  %v4525 = vadd.f32 %v4329, %v4448
  %v4526 = vadd.f32 %v4330, %v4448
  %v4527 = vadd.f32 %v4331, %v4453
  %v4528 = vadd.f32 %v4332, %v4453
  %v4529 = vadd.f32 %v4333, %v4458
  %v4530 = vadd.f32 %v4334, %v4458
  %v4531 = vadd.f32 %v4335, %v4463
  %v4532 = vadd.f32 %v4336, %v4463
  %v4533 = vadd.f32 %v4337, %v4468
  %v4534 = vadd.f32 %v4338, %v4468
  %v4535 = vadd.f32 %v4339, %v4473
  %v4536 = vadd.f32 %v4340, %v4473
  %v4537 = vadd.f32 %v4341, %v4478
  %v4538 = vadd.f32 %v4342, %v4478
  %v4539 = vadd.f32 %v4343, %v4483
  %v4540 = vadd.f32 %v4344, %v4483
  %4541 = vst [vmem:[%s5] sm:$0xff] %v4485
  %4542 = vst.msk [vmem:[%s5 + $0x8] sm:$0xff] %vm3308, %v4486
  %4543 = vst [vmem:[%s5 + $0x10] sm:$0xff] %v4487
  %4544 = vst.msk [vmem:[%s5 + $0x18] sm:$0xff] %vm3308, %v4488
  %4545 = vst [vmem:[%s5 + $0x20] sm:$0xff] %v4489
  %4546 = vst.msk [vmem:[%s5 + $0x28] sm:$0xff] %vm3308, %v4490
  %4547 = vst [vmem:[%s5 + $0x30] sm:$0xff] %v4491
  %4548 = vst.msk [vmem:[%s5 + $0x38] sm:$0xff] %vm3308, %v4492
  %4549 = vst [vmem:[%s5 + $0x40] sm:$0xff] %v4493
  %4550 = vst.msk [vmem:[%s5 + $0x48] sm:$0xff] %vm3308, %v4494
  %4551 = vst [vmem:[%s5 + $0x50] sm:$0xff] %v4495
  %4552 = vst.msk [vmem:[%s5 + $0x58] sm:$0xff] %vm3308, %v4496
  %4553 = vst [vmem:[%s5 + $0x60] sm:$0xff] %v4497
  %4554 = vst.msk [vmem:[%s5 + $0x68] sm:$0xff] %vm3308, %v4498
  %4555 = vst [vmem:[%s5 + $0x70] sm:$0xff] %v4499
  %4556 = vst.msk [vmem:[%s5 + $0x78] sm:$0xff] %vm3308, %v4500
  %4557 = vst [vmem:[%s5 + $0x80] sm:$0xff] %v4501
  %4558 = vst.msk [vmem:[%s5 + $0x88] sm:$0xff] %vm3308, %v4502
  %4559 = vst [vmem:[%s5 + $0x90] sm:$0xff] %v4503
  %4560 = vst.msk [vmem:[%s5 + $0x98] sm:$0xff] %vm3308, %v4504
  %4561 = vst [vmem:[%s5 + $0xa0] sm:$0xff] %v4505
  %4562 = vst.msk [vmem:[%s5 + $0xa8] sm:$0xff] %vm3308, %v4506
  %4563 = vst [vmem:[%s5 + $0xb0] sm:$0xff] %v4507
  %4564 = vst.msk [vmem:[%s5 + $0xb8] sm:$0xff] %vm3308, %v4508
  %4565 = vst [vmem:[%s5 + $0xc0] sm:$0xff] %v4509
  %4566 = vst.msk [vmem:[%s5 + $0xc8] sm:$0xff] %vm3308, %v4510
  %4567 = vst [vmem:[%s5 + $0xd0] sm:$0xff] %v4511
  %4568 = vst.msk [vmem:[%s5 + $0xd8] sm:$0xff] %vm3308, %v4512
  %4569 = vst [vmem:[%s5 + $0xe0] sm:$0xff] %v4513
  %4570 = vst.msk [vmem:[%s5 + $0xe8] sm:$0xff] %vm3308, %v4514
  %4571 = vst [vmem:[%s5 + $0xf0] sm:$0xff] %v4515
  %4572 = vst.msk [vmem:[%s5 + $0xf8] sm:$0xff] %vm3308, %v4516
  %4573 = vst [vmem:[%s5 + $0x100] sm:$0xff] %v4517
  %4574 = vst.msk [vmem:[%s5 + $0x108] sm:$0xff] %vm3308, %v4518
  %4575 = vst [vmem:[%s5 + $0x110] sm:$0xff] %v4519
  %4576 = vst.msk [vmem:[%s5 + $0x118] sm:$0xff] %vm3308, %v4520
  %4577 = vst [vmem:[%s5 + $0x120] sm:$0xff] %v4521
  %4578 = vst.msk [vmem:[%s5 + $0x128] sm:$0xff] %vm3308, %v4522
  %4579 = vst [vmem:[%s5 + $0x130] sm:$0xff] %v4523
  %4580 = vst.msk [vmem:[%s5 + $0x138] sm:$0xff] %vm3308, %v4524
  %4581 = vst [vmem:[%s5 + $0x140] sm:$0xff] %v4525
  %4582 = vst.msk [vmem:[%s5 + $0x148] sm:$0xff] %vm3308, %v4526
  %4583 = vst [vmem:[%s5 + $0x150] sm:$0xff] %v4527
  %4584 = vst.msk [vmem:[%s5 + $0x158] sm:$0xff] %vm3308, %v4528
  %4585 = vst [vmem:[%s5 + $0x160] sm:$0xff] %v4529
  %4586 = vst.msk [vmem:[%s5 + $0x168] sm:$0xff] %vm3308, %v4530
  %4587 = vst [vmem:[%s5 + $0x170] sm:$0xff] %v4531
  %4588 = vst.msk [vmem:[%s5 + $0x178] sm:$0xff] %vm3308, %v4532
  %4589 = vst [vmem:[%s5 + $0x180] sm:$0xff] %v4533
  %4590 = vst.msk [vmem:[%s5 + $0x188] sm:$0xff] %vm3308, %v4534
  %4591 = vst [vmem:[%s5 + $0x190] sm:$0xff] %v4535
  %4592 = vst.msk [vmem:[%s5 + $0x198] sm:$0xff] %vm3308, %v4536
  %4593 = vst [vmem:[%s5 + $0x1a0] sm:$0xff] %v4537
  %4594 = vst.msk [vmem:[%s5 + $0x1a8] sm:$0xff] %vm3308, %v4538
  %4595 = vst [vmem:[%s5 + $0x1b0] sm:$0xff] %v4539
  %4596 = vst.msk [vmem:[%s5 + $0x1b8] sm:$0xff] %vm3308, %v4540
  // Predicated region
  $region22: #{tpu_custom_call.1} parent=0 // pred_check
    _
  $region23: #{tpu_custom_call.1} parent=0 // pred_check_branch
    %4598 = sbr.rel (0) target = $region25
  $region24: #{tpu_custom_call.1} parent=0 // pred_region
    _
  $region25: #{tpu_custom_call.1} parent=0 // pred_fallthru
    _
  // Predicated region
  $region26: #{tpu_custom_call.1} parent=0 // pred_check
    _
  $region27: #{tpu_custom_call.1} parent=0 // pred_check_branch
    %4600 = sbr.rel (0) target = $region29
  $region28: #{tpu_custom_call.1} parent=0 // pred_region
    _
  $region29: #{tpu_custom_call.1} parent=0 // pred_fallthru
    _

</llo_original>
